<compile_context>
chip_gen: v6e
topology: v6e:2x2x1
jax: 0.10.0
libtpu: 0.0.40
codegen_flags: <defaults>
</compile_context>

<pallas_src>
import functools

import jax
import jax.numpy as jnp
from jax.experimental import pallas as pl
from jax.experimental.pallas import tpu as pltpu

LANE = 128  # TPU lane width


def _round_up(x, m):
    return ((x + m - 1) // m) * m


# ----------------------------------------------------------------------------
# Shared epilogue: bias + ReLU (+ masked log_softmax on the final layer)
# ----------------------------------------------------------------------------
def _epilogue(h, b_ref, o_ref, *, fuse_log_softmax, valid_cols):
    h = h + b_ref[...]                      # (1, F_out) broadcasts over rows
    h = jnp.maximum(h, 0.0)                 # ReLU applied to every layer
    if fuse_log_softmax:
        # Mask padded logit columns, then row-wise log_softmax (dim=1).
        col = jax.lax.broadcasted_iota(jnp.int32, h.shape, dimension=1)
        h = jnp.where(col < valid_cols, h, -1e30)
        m = jnp.max(h, axis=1, keepdims=True)
        s = h - m
        lse = jnp.log(jnp.sum(jnp.exp(s), axis=1, keepdims=True))
        h = s - lse
    o_ref[...] = h.astype(o_ref.dtype)      # bf16 for hidden layers, f32 for last


# ----------------------------------------------------------------------------
# Kernel variant A: project-first.  XW = X @ W_l is hoisted to the wrapper and
# is VMEM-resident; the kernel only aggregates  acc += A_ik @ XW_k.
# ----------------------------------------------------------------------------
def _sage_projfirst_kernel(a_ref, xw_ref, xi_ref, wr_ref, b_ref, o_ref, acc_ref,
                           *, fuse_log_softmax, valid_cols, tile_k):
    k = pl.program_id(1)

    @pl.when(k == 0)
    def _():
        acc_ref[...] = jnp.zeros_like(acc_ref)

    start_k = pl.multiple_of(k * tile_k, tile_k)
    acc_ref[...] += jnp.dot(a_ref[...], xw_ref[pl.ds(start_k, tile_k), :],
                            preferred_element_type=jnp.float32)

    @pl.when(k == pl.num_programs(1) - 1)
    def _():
        h = acc_ref[...] + jnp.dot(xi_ref[...], wr_ref[...],
                                   preferred_element_type=jnp.float32)
        _epilogue(h, b_ref, o_ref,
                  fuse_log_softmax=fuse_log_softmax, valid_cols=valid_cols)


# ----------------------------------------------------------------------------
# Kernel variant B: aggregate-first (used when F_out > F_in).  X is
# VMEM-resident and sliced for both the reduction rows and the residual rows.
# ----------------------------------------------------------------------------
def _sage_aggfirst_kernel(a_ref, x_ref, wl_ref, wr_ref, b_ref, o_ref, acc_ref,
                          *, fuse_log_softmax, valid_cols, tile_m, tile_k):
    i = pl.program_id(0)
    k = pl.program_id(1)

    @pl.when(k == 0)
    def _():
        acc_ref[...] = jnp.zeros_like(acc_ref)

    start_k = pl.multiple_of(k * tile_k, tile_k)
    acc_ref[...] += jnp.dot(a_ref[...], x_ref[pl.ds(start_k, tile_k), :],
                            preferred_element_type=jnp.float32)

    @pl.when(k == pl.num_programs(1) - 1)
    def _():
        h = jnp.dot(acc_ref[...].astype(jnp.bfloat16), wl_ref[...],
                    preferred_element_type=jnp.float32)
        start_i = pl.multiple_of(i * tile_m, tile_m)
        xi = x_ref[pl.ds(start_i, tile_m), :]
        h = h + jnp.dot(xi, wr_ref[...], preferred_element_type=jnp.float32)
        _epilogue(h, b_ref, o_ref,
                  fuse_log_softmax=fuse_log_softmax, valid_cols=valid_cols)


# ----------------------------------------------------------------------------
# One SAGEConv layer as a pallas_call
# ----------------------------------------------------------------------------
def sage_layer(adj_bf16, x_bf16, w_l, w_r, b, xw_bf16, *, project_first,
               valid_cols, fuse_log_softmax, tile_m, tile_k):
    """adj_bf16: (Np, Np) bf16 row-normalized adjacency (Np % tile == 0).
       x_bf16  : (Np, F_in_p) bf16 node features, F_in_p % 128 == 0.
       w_l/w_r : (F_in_p, F_out_p) bf16; b: (1, F_out_p) f32.
       xw_bf16 : (Np, F_out_p) bf16 hoisted projection (only if project_first).
    """
    n = adj_bf16.shape[0]
    f_in = x_bf16.shape[1]
    f_out = w_r.shape[1]
    out_dtype = jnp.float32 if fuse_log_softmax else jnp.bfloat16

    if project_first:
        kernel = functools.partial(
            _sage_projfirst_kernel, fuse_log_softmax=fuse_log_softmax,
            valid_cols=valid_cols, tile_k=tile_k)
        in_specs = [
            pl.BlockSpec((tile_m, tile_k), lambda i, k: (i, k)),   # A tile
            pl.BlockSpec((n, f_out), lambda i, k: (0, 0)),         # XW (resident)
            pl.BlockSpec((tile_m, f_in), lambda i, k: (i, 0)),     # X_i residual rows
            pl.BlockSpec((f_in, f_out), lambda i, k: (0, 0)),      # W_r
            pl.BlockSpec((1, f_out), lambda i, k: (0, 0)),         # bias
        ]
        operands = (adj_bf16, xw_bf16, x_bf16, w_r, b)
        acc_cols = f_out
    else:
        kernel = functools.partial(
            _sage_aggfirst_kernel, fuse_log_softmax=fuse_log_softmax,
            valid_cols=valid_cols, tile_m=tile_m, tile_k=tile_k)
        in_specs = [
            pl.BlockSpec((tile_m, tile_k), lambda i, k: (i, k)),   # A tile
            pl.BlockSpec((n, f_in), lambda i, k: (0, 0)),          # X (resident)
            pl.BlockSpec((f_in, f_out), lambda i, k: (0, 0)),      # W_l
            pl.BlockSpec((f_in, f_out), lambda i, k: (0, 0)),      # W_r
            pl.BlockSpec((1, f_out), lambda i, k: (0, 0)),         # bias
        ]
        operands = (adj_bf16, x_bf16, w_l, w_r, b)
        acc_cols = f_in

    return pl.pallas_call(
        kernel,
        out_shape=jax.ShapeDtypeStruct((n, f_out), out_dtype),
        grid_spec=pltpu.PrefetchScalarGridSpec(
            num_scalar_prefetch=0,
            grid=(n // tile_m, n // tile_k),
            in_specs=in_specs,
            out_specs=pl.BlockSpec((tile_m, f_out), lambda i, k: (i, 0)),
            scratch_shapes=[pltpu.VMEM((tile_m, acc_cols), jnp.float32)],
        ),
        compiler_params=pltpu.CompilerParams(
            dimension_semantics=("parallel", "arbitrary"),
            # 32 MiB is safe on v7x's 64 MiB physical VMEM and leaves headroom;
            # raise toward 64-100 MiB on v5e/v6e for very large tiles/graphs.
            vmem_limit_bytes=32 * 1024 * 1024,
        ),
    )(*operands)


# ----------------------------------------------------------------------------
# Model glue: padding, parameter setup, forward
# ----------------------------------------------------------------------------
def build_norm_adjacency(edge_index, num_nodes):
    """Dense row-normalized adjacency for mean aggregation.

    edge_index: (2, E) int32, row 0 = source j, row 1 = target i.
    A[i, j] = (#edges j->i) / in_degree(i); isolated rows stay 0 (scatter-mean).
    """
    src, dst = edge_index[0], edge_index[1]
    adj = jnp.zeros((num_nodes, num_nodes), jnp.float32).at[dst, src].add(1.0)
    deg = adj.sum(axis=1, keepdims=True)
    return adj / jnp.maximum(deg, 1.0)


def init_params(key, dims):
    """dims: list of (f_in, f_out) per SAGEConv layer."""
    params = []
    for f_in, f_out in dims:
        key, k1, k2 = jax.random.split(key, 3)
        scale = 1.0 / jnp.sqrt(jnp.float32(f_in))
        w_l = jax.random.uniform(k1, (f_in, f_out), jnp.float32, -scale, scale)
        w_r = jax.random.uniform(k2, (f_in, f_out), jnp.float32, -scale, scale)
        b = jnp.zeros((f_out,), jnp.float32)
        params.append((w_l, w_r, b))
    return params


@functools.partial(jax.jit, static_argnames=("tile_m", "tile_k"))
def graphsage_forward(x, adj, params, *, tile_m=512, tile_k=512):
    n, f0 = x.shape
    n_pad = _round_up(max(n, tile_m), tile_m)
    n_pad = _round_up(n_pad, tile_k)

    # Pad nodes + features once; padded rows/cols are zero => contribute nothing.
    adj_p = jnp.zeros((n_pad, n_pad), jnp.bfloat16).at[:n, :n].set(
        adj.astype(jnp.bfloat16))
    h = jnp.zeros((n_pad, _round_up(f0, LANE)), jnp.bfloat16).at[:n, :f0].set(
        x.astype(jnp.bfloat16))

    num_layers = len(params)
    out = None
    for li, (w_l, w_r, b) in enumerate(params):
        f_in, f_out = w_l.shape
        f_in_p, f_out_p = _round_up(f_in, LANE), _round_up(f_out, LANE)
        wl_p = jnp.zeros((f_in_p, f_out_p), jnp.bfloat16).at[:f_in, :f_out].set(
            w_l.astype(jnp.bfloat16))
        wr_p = jnp.zeros((f_in_p, f_out_p), jnp.bfloat16).at[:f_in, :f_out].set(
            w_r.astype(jnp.bfloat16))
        b_p = jnp.zeros((1, f_out_p), jnp.float32).at[0, :f_out].set(b)

        last = li == num_layers - 1
        project_first = f_out_p <= f_in_p    # reassociate for narrow outputs

        xw_p = None
        if project_first:
            # Hoisted projection: X @ W_l computed ONCE per layer (f32 accumulate),
            # fed to the aggregation kernel as its VMEM-resident reduction operand.
            xw_p = jnp.dot(h, wl_p,
                           preferred_element_type=jnp.float32).astype(jnp.bfloat16)

        out = sage_layer(
            adj_p, h, wl_p, wr_p, b_p, xw_p,
            project_first=project_first,
            valid_cols=f_out,
            fuse_log_softmax=last,           # log_softmax fused into last layer
            tile_m=tile_m, tile_k=tile_k,
        )
        if not last:
            h = out                          # kernel already emitted bf16

    # dropout: F.dropout(..., training=False) -> identity at inference time.
    # TODO(synk): training-mode dropout would use pltpu.prng_seed/prng_random_bits.
    f_out_last = params[-1][0].shape[1]
    return out[:n, :f_out_last]


# ----------------------------------------------------------------------------
# Pure-JAX reference (f32) for sanity checking the kernels
# ----------------------------------------------------------------------------
def reference_forward(x, adj, params):
    h = x
    for (w_l, w_r, b) in params:
        h = jax.nn.relu((adj @ h) @ w_l + h @ w_r + b)
    return jax.nn.log_softmax(h, axis=1)


if __name__ == "__main__":
    key = jax.random.PRNGKey(0)

    # Small synthetic graph consistent with the module's forward.
    num_nodes = 300
    num_features = 8
    num_edges = 1200
    layer_size = [200, 16]         # as in GraphSAGE_Net(layer_size, ...)
    num_classes = 4                # = int(data.y.max() + 1)

    key, kx, ke1, ke2, kp = jax.random.split(key, 5)
    x = jax.random.normal(kx, (num_nodes, num_features), jnp.float32)
    src = jax.random.randint(ke1, (num_edges,), 0, num_nodes, jnp.int32)
    dst = jax.random.randint(ke2, (num_edges,), 0, num_nodes, jnp.int32)
    edge_index = jnp.stack([src, dst], axis=0)

    # Layer dims per __init__: conv0: num_features -> layer_size[0],
    # last conv: layer_size[-2] -> num_classes.
    dims = [(num_features, layer_size[0]), (layer_size[0], num_classes)]
    params = init_params(kp, dims)

    adj = build_norm_adjacency(edge_index, num_nodes)

    # 256x256 tiles here (small demo graph -> 2x2 grid, exercising both the
    # parallel row axis and the reduction axis); default is 512 for real sizes.
    out = graphsage_forward(x, adj, params, tile_m=256, tile_k=256)
    out = jax.block_until_ready(out)

    ref = reference_forward(x, adj, params)
    assert out.shape == (num_nodes, num_classes)
    # bf16 MXU inputs (f32 accumulation) => looser tolerance vs the f32 reference.
    assert jnp.allclose(out, ref, atol=1e-1, rtol=1e-1), "mismatch vs reference"

    print("KERNEL_OK")
</pallas_src>

<mosaic_0001>
module attributes {stable_mosaic.version = 11 : i64} {
  func.func @_sage_aggfirst_kernel(%arg0: i32, %arg1: i32, %arg2: memref<256x256xbf16, #tpu.memory_space<vmem>>, %arg3: memref<512x128xbf16, #tpu.memory_space<vmem>>, %arg4: memref<128x256xbf16, #tpu.memory_space<vmem>>, %arg5: memref<128x256xbf16, #tpu.memory_space<vmem>>, %arg6: memref<1x256xf32, #tpu.memory_space<vmem>>, %arg7: memref<256x256xbf16, #tpu.memory_space<vmem>>, %arg8: memref<256x128xf32, #tpu.memory_space<vmem>>) attributes {dimension_semantics = [#tpu.dimension_semantics<parallel>, #tpu.dimension_semantics<arbitrary>], iteration_bounds = array<i64: 2, 2>, scalar_prefetch = 0 : i64, scratch_operands = 1 : i64, tpu.core_type = #tpu.core_type<tc>, window_params = [{transform_indices = @transform_0, window_bounds = array<i64: 256, 256>}, {pipeline_mode = #tpu.pipeline_mode<synchronous>, transform_indices = @transform_1, window_bounds = array<i64: 512, 128>}, {pipeline_mode = #tpu.pipeline_mode<synchronous>, transform_indices = @transform_2, window_bounds = array<i64: 128, 256>}, {pipeline_mode = #tpu.pipeline_mode<synchronous>, transform_indices = @transform_3, window_bounds = array<i64: 128, 256>}, {pipeline_mode = #tpu.pipeline_mode<synchronous>, transform_indices = @transform_4, window_bounds = array<i64: 1, 256>}, {transform_indices = @transform_5, window_bounds = array<i64: 256, 256>}]} {
    %c0_i32 = arith.constant 0 : i32
    %0 = arith.cmpi eq, %arg1, %c0_i32 : i32
    %1 = arith.extui %0 : i1 to i32
    %c0_i32_0 = arith.constant 0 : i32
    %2 = arith.cmpi ne, %1, %c0_i32_0 : i32
    scf.if %2 {
      %cst_8 = arith.constant 0.000000e+00 : f32
      %15 = vector.broadcast %cst_8 : f32 to vector<256x128xf32>
      %c0_9 = arith.constant 0 : index
      %c0_10 = arith.constant 0 : index
      %16 = vector.load %arg8[%c0_9, %c0_10] : memref<256x128xf32, #tpu.memory_space<vmem>>, vector<256x128xf32>
      tpu.vector_store %arg8[%c0_9, %c0_10], %15 {strides = array<i32>} : memref<256x128xf32, #tpu.memory_space<vmem>>, vector<256x128xf32>,
    } else {
    }
    %c256_i32 = arith.constant 256 : i32
    %3 = arith.muli %arg1, %c256_i32 : i32
    %4 = tpu.assume_multiple %3, 256 : i32
    %c0 = arith.constant 0 : index
    %c0_1 = arith.constant 0 : index
    %5 = vector.load %arg8[%c0, %c0_1] : memref<256x128xf32, #tpu.memory_space<vmem>>, vector<256x128xf32>
    %c0_2 = arith.constant 0 : index
    %c0_3 = arith.constant 0 : index
    %6 = vector.load %arg2[%c0_2, %c0_3] : memref<256x256xbf16, #tpu.memory_space<vmem>>, vector<256x256xbf16>
    %7 = arith.index_cast %4 : i32 to index
    %c0_4 = arith.constant 0 : index
    %8 = vector.load %arg3[%7, %c0_4] : memref<512x128xbf16, #tpu.memory_space<vmem>>, vector<256x128xbf16>
    %cst = arith.constant dense<0.000000e+00> : vector<256x128xf32>
    %9 = tpu.matmul %6, %8, %cst {dimension_numbers = #tpu.dot_dimension_numbers<[1], [0], [0], [1], [0, 0, 1, 1], [], []>} : vector<256x256xbf16>, vector<256x128xbf16>, vector<256x128xf32> -> vector<256x128xf32>
    %10 = arith.addf %5, %9 : vector<256x128xf32>
    %c0_5 = arith.constant 0 : index
    %c0_6 = arith.constant 0 : index
    %11 = vector.load %arg8[%c0_5, %c0_6] : memref<256x128xf32, #tpu.memory_space<vmem>>, vector<256x128xf32>
    tpu.vector_store %arg8[%c0_5, %c0_6], %10 {strides = array<i32>} : memref<256x128xf32, #tpu.memory_space<vmem>>, vector<256x128xf32>,
    %c1_i32 = arith.constant 1 : i32
    %12 = arith.cmpi eq, %arg1, %c1_i32 : i32
    %13 = arith.extui %12 : i1 to i32
    %c0_i32_7 = arith.constant 0 : i32
    %14 = arith.cmpi ne, %13, %c0_i32_7 : i32
    scf.if %14 {
      %c0_8 = arith.constant 0 : index
      %c0_9 = arith.constant 0 : index
      %15 = vector.load %arg8[%c0_8, %c0_9] : memref<256x128xf32, #tpu.memory_space<vmem>>, vector<256x128xf32>
      %16 = arith.truncf %15 : vector<256x128xf32> to vector<256x128xbf16>
      %c0_10 = arith.constant 0 : index
      %c0_11 = arith.constant 0 : index
      %17 = vector.load %arg4[%c0_10, %c0_11] : memref<128x256xbf16, #tpu.memory_space<vmem>>, vector<128x256xbf16>
      %cst_12 = arith.constant dense<0.000000e+00> : vector<256x256xf32>
      %18 = tpu.matmul %16, %17, %cst_12 {dimension_numbers = #tpu.dot_dimension_numbers<[1], [0], [0], [1], [0, 0, 1, 1], [], []>} : vector<256x128xbf16>, vector<128x256xbf16>, vector<256x256xf32> -> vector<256x256xf32>
      %c256_i32_13 = arith.constant 256 : i32
      %19 = arith.muli %arg0, %c256_i32_13 : i32
      %20 = tpu.assume_multiple %19, 256 : i32
      %21 = arith.index_cast %20 : i32 to index
      %c0_14 = arith.constant 0 : index
      %22 = vector.load %arg3[%21, %c0_14] : memref<512x128xbf16, #tpu.memory_space<vmem>>, vector<256x128xbf16>
      %c0_15 = arith.constant 0 : index
      %c0_16 = arith.constant 0 : index
      %23 = vector.load %arg5[%c0_15, %c0_16] : memref<128x256xbf16, #tpu.memory_space<vmem>>, vector<128x256xbf16>
      %cst_17 = arith.constant dense<0.000000e+00> : vector<256x256xf32>
      %24 = tpu.matmul %22, %23, %cst_17 {dimension_numbers = #tpu.dot_dimension_numbers<[1], [0], [0], [1], [0, 0, 1, 1], [], []>} : vector<256x128xbf16>, vector<128x256xbf16>, vector<256x256xf32> -> vector<256x256xf32>
      %25 = arith.addf %18, %24 : vector<256x256xf32>
      %c0_18 = arith.constant 0 : index
      %c0_19 = arith.constant 0 : index
      %26 = vector.load %arg6[%c0_18, %c0_19] : memref<1x256xf32, #tpu.memory_space<vmem>>, vector<1x256xf32>
      %27 = vector.broadcast %26 : vector<1x256xf32> to vector<256x256xf32>
      %28 = arith.addf %25, %27 : vector<256x256xf32>
      %cst_20 = arith.constant 0.000000e+00 : f32
      %29 = vector.broadcast %cst_20 : f32 to vector<256x256xf32>
      %30 = arith.maximumf %28, %29 : vector<256x256xf32>
      %31 = arith.truncf %30 : vector<256x256xf32> to vector<256x256xbf16>
      %c0_21 = arith.constant 0 : index
      %c0_22 = arith.constant 0 : index
      %32 = vector.load %arg7[%c0_21, %c0_22] : memref<256x256xbf16, #tpu.memory_space<vmem>>, vector<256x256xbf16>
      tpu.vector_store %arg7[%c0_21, %c0_22], %31 {strides = array<i32>} : memref<256x256xbf16, #tpu.memory_space<vmem>>, vector<256x256xbf16>,
    } else {
    }
    return
  }
  func.func @transform_0(%arg0: i32, %arg1: i32) -> (i32, i32) {
    %c0_i32 = arith.constant 0 : i32
    return %arg0, %arg1 : i32, i32
  }
  func.func @transform_1(%arg0: i32, %arg1: i32) -> (i32, i32) {
    %c0_i32 = arith.constant 0 : i32
    %c0_i32_0 = arith.constant 0 : i32
    %c0_i32_1 = arith.constant 0 : i32
    return %c0_i32, %c0_i32_0 : i32, i32
  }
  func.func @transform_2(%arg0: i32, %arg1: i32) -> (i32, i32) {
    %c0_i32 = arith.constant 0 : i32
    %c0_i32_0 = arith.constant 0 : i32
    %c0_i32_1 = arith.constant 0 : i32
    return %c0_i32, %c0_i32_0 : i32, i32
  }
  func.func @transform_3(%arg0: i32, %arg1: i32) -> (i32, i32) {
    %c0_i32 = arith.constant 0 : i32
    %c0_i32_0 = arith.constant 0 : i32
    %c0_i32_1 = arith.constant 0 : i32
    return %c0_i32, %c0_i32_0 : i32, i32
  }
  func.func @transform_4(%arg0: i32, %arg1: i32) -> (i32, i32) {
    %c0_i32 = arith.constant 0 : i32
    %c0_i32_0 = arith.constant 0 : i32
    %c0_i32_1 = arith.constant 0 : i32
    return %c0_i32, %c0_i32_0 : i32, i32
  }
  func.func @transform_5(%arg0: i32, %arg1: i32) -> (i32, i32) {
    %c0_i32 = arith.constant 0 : i32
    %c0_i32_0 = arith.constant 0 : i32
    return %arg0, %c0_i32 : i32, i32
  }
}

module attributes {stable_mosaic.version = 11 : i64} {
  func.func @_sage_projfirst_kernel(%arg0: i32, %arg1: i32, %arg2: memref<256x256xbf16, #tpu.memory_space<vmem>>, %arg3: memref<512x128xbf16, #tpu.memory_space<vmem>>, %arg4: memref<256x256xbf16, #tpu.memory_space<vmem>>, %arg5: memref<256x128xbf16, #tpu.memory_space<vmem>>, %arg6: memref<1x128xf32, #tpu.memory_space<vmem>>, %arg7: memref<256x128xf32, #tpu.memory_space<vmem>>, %arg8: memref<256x128xf32, #tpu.memory_space<vmem>>) attributes {dimension_semantics = [#tpu.dimension_semantics<parallel>, #tpu.dimension_semantics<arbitrary>], iteration_bounds = array<i64: 2, 2>, scalar_prefetch = 0 : i64, scratch_operands = 1 : i64, tpu.core_type = #tpu.core_type<tc>, window_params = [{transform_indices = @transform_0, window_bounds = array<i64: 256, 256>}, {pipeline_mode = #tpu.pipeline_mode<synchronous>, transform_indices = @transform_1, window_bounds = array<i64: 512, 128>}, {transform_indices = @transform_2, window_bounds = array<i64: 256, 256>}, {pipeline_mode = #tpu.pipeline_mode<synchronous>, transform_indices = @transform_3, window_bounds = array<i64: 256, 128>}, {pipeline_mode = #tpu.pipeline_mode<synchronous>, transform_indices = @transform_4, window_bounds = array<i64: 1, 128>}, {transform_indices = @transform_5, window_bounds = array<i64: 256, 128>}]} {
    %c0_i32 = arith.constant 0 : i32
    %0 = arith.cmpi eq, %arg1, %c0_i32 : i32
    %1 = arith.extui %0 : i1 to i32
    %c0_i32_0 = arith.constant 0 : i32
    %2 = arith.cmpi ne, %1, %c0_i32_0 : i32
    scf.if %2 {
      %cst_8 = arith.constant 0.000000e+00 : f32
      %15 = vector.broadcast %cst_8 : f32 to vector<256x128xf32>
      %c0_9 = arith.constant 0 : index
      %c0_10 = arith.constant 0 : index
      %16 = vector.load %arg8[%c0_9, %c0_10] : memref<256x128xf32, #tpu.memory_space<vmem>>, vector<256x128xf32>
      tpu.vector_store %arg8[%c0_9, %c0_10], %15 {strides = array<i32>} : memref<256x128xf32, #tpu.memory_space<vmem>>, vector<256x128xf32>,
    } else {
    }
    %c256_i32 = arith.constant 256 : i32
    %3 = arith.muli %arg1, %c256_i32 : i32
    %4 = tpu.assume_multiple %3, 256 : i32
    %c0 = arith.constant 0 : index
    %c0_1 = arith.constant 0 : index
    %5 = vector.load %arg8[%c0, %c0_1] : memref<256x128xf32, #tpu.memory_space<vmem>>, vector<256x128xf32>
    %c0_2 = arith.constant 0 : index
    %c0_3 = arith.constant 0 : index
    %6 = vector.load %arg2[%c0_2, %c0_3] : memref<256x256xbf16, #tpu.memory_space<vmem>>, vector<256x256xbf16>
    %7 = arith.index_cast %4 : i32 to index
    %c0_4 = arith.constant 0 : index
    %8 = vector.load %arg3[%7, %c0_4] : memref<512x128xbf16, #tpu.memory_space<vmem>>, vector<256x128xbf16>
    %cst = arith.constant dense<0.000000e+00> : vector<256x128xf32>
    %9 = tpu.matmul %6, %8, %cst {dimension_numbers = #tpu.dot_dimension_numbers<[1], [0], [0], [1], [0, 0, 1, 1], [], []>} : vector<256x256xbf16>, vector<256x128xbf16>, vector<256x128xf32> -> vector<256x128xf32>
    %10 = arith.addf %5, %9 : vector<256x128xf32>
    %c0_5 = arith.constant 0 : index
    %c0_6 = arith.constant 0 : index
    %11 = vector.load %arg8[%c0_5, %c0_6] : memref<256x128xf32, #tpu.memory_space<vmem>>, vector<256x128xf32>
    tpu.vector_store %arg8[%c0_5, %c0_6], %10 {strides = array<i32>} : memref<256x128xf32, #tpu.memory_space<vmem>>, vector<256x128xf32>,
    %c1_i32 = arith.constant 1 : i32
    %12 = arith.cmpi eq, %arg1, %c1_i32 : i32
    %13 = arith.extui %12 : i1 to i32
    %c0_i32_7 = arith.constant 0 : i32
    %14 = arith.cmpi ne, %13, %c0_i32_7 : i32
    scf.if %14 {
      %c0_8 = arith.constant 0 : index
      %c0_9 = arith.constant 0 : index
      %15 = vector.load %arg8[%c0_8, %c0_9] : memref<256x128xf32, #tpu.memory_space<vmem>>, vector<256x128xf32>
      %c0_10 = arith.constant 0 : index
      %c0_11 = arith.constant 0 : index
      %16 = vector.load %arg4[%c0_10, %c0_11] : memref<256x256xbf16, #tpu.memory_space<vmem>>, vector<256x256xbf16>
      %c0_12 = arith.constant 0 : index
      %c0_13 = arith.constant 0 : index
      %17 = vector.load %arg5[%c0_12, %c0_13] : memref<256x128xbf16, #tpu.memory_space<vmem>>, vector<256x128xbf16>
      %cst_14 = arith.constant dense<0.000000e+00> : vector<256x128xf32>
      %18 = tpu.matmul %16, %17, %cst_14 {dimension_numbers = #tpu.dot_dimension_numbers<[1], [0], [0], [1], [0, 0, 1, 1], [], []>} : vector<256x256xbf16>, vector<256x128xbf16>, vector<256x128xf32> -> vector<256x128xf32>
      %19 = arith.addf %15, %18 : vector<256x128xf32>
      %c0_15 = arith.constant 0 : index
      %c0_16 = arith.constant 0 : index
      %20 = vector.load %arg6[%c0_15, %c0_16] : memref<1x128xf32, #tpu.memory_space<vmem>>, vector<1x128xf32>
      %21 = vector.broadcast %20 : vector<1x128xf32> to vector<256x128xf32>
      %22 = arith.addf %19, %21 : vector<256x128xf32>
      %cst_17 = arith.constant 0.000000e+00 : f32
      %23 = vector.broadcast %cst_17 : f32 to vector<256x128xf32>
      %24 = arith.maximumf %22, %23 : vector<256x128xf32>
      %25 = tpu.iota {dimensions = array<i32: 1>} : vector<256x128xi32>
      %c4_i32 = arith.constant 4 : i32
      %26 = vector.broadcast %c4_i32 : i32 to vector<256x128xi32>
      %27 = arith.cmpi slt, %25, %26 : vector<256x128xi32>
      %cst_18 = arith.constant -1.000000e+30 : f32
      %28 = vector.broadcast %cst_18 : f32 to vector<256x128xf32>
      %29 = arith.select %27, %24, %28 : vector<256x128xi1>, vector<256x128xf32>
      %cst_19 = arith.constant dense<0xFF800000> : vector<256xf32>
      %30 = vector.multi_reduction <maximumf>, %29, %cst_19 [1] : vector<256x128xf32> to vector<256xf32>
      %31 = vector.shape_cast %30 : vector<256xf32> to vector<256x1xf32>
      %32 = vector.broadcast %31 : vector<256x1xf32> to vector<256x128xf32>
      %33 = arith.subf %29, %32 : vector<256x128xf32>
      %34 = math.exp %33 : vector<256x128xf32>
      %cst_20 = arith.constant dense<0.000000e+00> : vector<256xf32>
      %35 = vector.multi_reduction <add>, %34, %cst_20 [1] : vector<256x128xf32> to vector<256xf32>
      %36 = vector.shape_cast %35 : vector<256xf32> to vector<256x1xf32>
      %37 = math.log %36 : vector<256x1xf32>
      %38 = vector.broadcast %37 : vector<256x1xf32> to vector<256x128xf32>
      %39 = arith.subf %33, %38 : vector<256x128xf32>
      %c0_21 = arith.constant 0 : index
      %c0_22 = arith.constant 0 : index
      %40 = vector.load %arg7[%c0_21, %c0_22] : memref<256x128xf32, #tpu.memory_space<vmem>>, vector<256x128xf32>
      tpu.vector_store %arg7[%c0_21, %c0_22], %39 {strides = array<i32>} : memref<256x128xf32, #tpu.memory_space<vmem>>, vector<256x128xf32>,
    } else {
    }
    return
  }
  func.func @transform_0(%arg0: i32, %arg1: i32) -> (i32, i32) {
    %c0_i32 = arith.constant 0 : i32
    return %arg0, %arg1 : i32, i32
  }
  func.func @transform_1(%arg0: i32, %arg1: i32) -> (i32, i32) {
    %c0_i32 = arith.constant 0 : i32
    %c0_i32_0 = arith.constant 0 : i32
    %c0_i32_1 = arith.constant 0 : i32
    return %c0_i32, %c0_i32_0 : i32, i32
  }
  func.func @transform_2(%arg0: i32, %arg1: i32) -> (i32, i32) {
    %c0_i32 = arith.constant 0 : i32
    %c0_i32_0 = arith.constant 0 : i32
    return %arg0, %c0_i32 : i32, i32
  }
  func.func @transform_3(%arg0: i32, %arg1: i32) -> (i32, i32) {
    %c0_i32 = arith.constant 0 : i32
    %c0_i32_0 = arith.constant 0 : i32
    %c0_i32_1 = arith.constant 0 : i32
    return %c0_i32, %c0_i32_0 : i32, i32
  }
  func.func @transform_4(%arg0: i32, %arg1: i32) -> (i32, i32) {
    %c0_i32 = arith.constant 0 : i32
    %c0_i32_0 = arith.constant 0 : i32
    %c0_i32_1 = arith.constant 0 : i32
    return %c0_i32, %c0_i32_0 : i32, i32
  }
  func.func @transform_5(%arg0: i32, %arg1: i32) -> (i32, i32) {
    %c0_i32 = arith.constant 0 : i32
    %c0_i32_0 = arith.constant 0 : i32
    return %arg0, %c0_i32 : i32, i32
  }
}

</mosaic_0001>

<llo_original>
// kernel: graphsage_forward.2
$region0: #{graphsage_forward.2}
  #allocation0 [shape = 'u32[]', space=smem, size = 0x4, offset = 0x4, fixed_abs, tag = 'smem constant byte address 0x4 - core index']
  #allocation1 [shape = 'u32[144,128]{1,0:T(1,128)}', space=vmem, size = 0x12000, scoped, tag = 'internal scratch']
  #allocation2 [shape = 'f32[256,128]{1,0:T(8,128)}', space=vmem, size = 0x20000, scoped, tag = 'scratch operand']
  %s0 = inlined_call_operand.vmem [shape: bf16[512,512], index: 0, kind: input, shape index: {}]
  %s1 = inlined_call_operand.vmem [shape: bf16[512,128], index: 1, kind: input, shape index: {}]
  %s2 = inlined_call_operand.vmem [shape: bf16[128,256], index: 2, kind: input, shape index: {}]
  %s3 = inlined_call_operand.vmem [shape: bf16[128,256], index: 3, kind: input, shape index: {}]
  %s4 = inlined_call_operand.vmem [shape: f32[1,256], index: 4, kind: input, shape index: {}]
  %s5 = inlined_call_operand.vmem [shape: bf16[512,256], index: 5, kind: output, shape index: {}]
  %s6 = sld [smem:[#allocation0]]
  $region99: #{graphsage_forward.2} parent=0
    _
  %s8 = ssub.s32 1, %s6
  %s9 = scalar_select 0, %s8, %s6
  $region1: #{graphsage_forward.2} parent=0
    #allocation3 [shape = 'u8[262144]{0}', space=vmem, size = 0x40000, scoped, tag = 'input window, operand 0']
    loop: start=0, step=1, limit=6
    $region2: #{graphsage_forward.2} parent=1 // loop_pre_header
      _
    $region3: #{graphsage_forward.2} parent=1 // loop_header
      %s11 = sphi 0, %s15
      %p12 = scmp.ge.s32.totalorder %s11, 6
      %s18 = sphi 0, %s30
      %s19 = sphi 0, %s26
      %s20 = sphi 0, %s18
      %s21 = sphi 0, %s19
      %s22 = sphi 0, %s20
      %s23 = sphi 0, %s21
      %s35 = sphi 0, %s37
      %s38 = sphi 0, %s35
      %s39 = sphi 0, %s38
      %s55 = sphi 0, %s39
      %s59 = sphi 0, %s59
      %s61 = sphi 0, %s59
      %s62 = sphi 0, %s61
      %s76 = sphi 0, %s62
      %s80 = sphi 0, %s80
      %s82 = sphi 0, %s80
      %s83 = sphi 0, %s82
      %s97 = sphi 0, %s83
      %s101 = sphi 0, %s101
      %s103 = sphi 0, %s101
      %s104 = sphi 0, %s103
      %s118 = sphi 0, %s104
      %s122 = sphi 0, %s122
      %s124 = sphi 0, %s122
      %s125 = sphi 0, %s124
      %s139 = sphi 0, %s125
      %s145 = sphi 0, %s147
      %s148 = sphi 0, %s145
      %s149 = sphi 0, %s148
      %s165 = sphi 0, %s149
    $region4: #{graphsage_forward.2} parent=1 // loop_header_branch
      %14 = sbr.rel (%p12) target = $region8
    $region5: #{graphsage_forward.2} parent=1 // loop_body
      %s16 = ssub.s32 %s11, 1
      %s17 = ssub.s32 %s11, 2
      %s24 = sadd.s32 1, %s19
      %p25 = scmp.ge.s32.totalorder %s24, 2
      %s26 = scalar_select %p25, 0, %s24
      %s27 = sadd.s32 1, %s18
      %s28 = scalar_select %p25, %s27, %s18
      %p29 = scmp.ge.s32.totalorder %s28, 2
      %s30 = scalar_select %p29, 0, %s28
      %s31 = ssub.s32 %s18, %s30
      %s32 = ssub.s32 %s19, %s26
      %s33 = sor.u32 %s31, %s32
      %p34 = scmp.eq.s32.totalorder %s33, 0
      %s36 = sadd.s32 %s35, 1
      %s37 = scalar_select %p34, %s35, %s36
      %p40 = pneg %p34
      %p41 = scmp.eq.s32.totalorder %s11, 3
      %p42 = por %p40, %p41
      %p43 = scmp.ne.s32.totalorder %s35, %s38
      %p44 = scmp.eq.s32.totalorder %s11, 0
      %p45 = por %p43, %p44
      %p46 = scmp.ne.s32.totalorder %s35, %s38
      %p47 = scmp.eq.s32.totalorder %s16, 3
      %p48 = por %p46, %p47
      %p49 = scmp.ne.s32.totalorder %s38, %s39
      %p50 = scmp.eq.s32.totalorder %s16, 0
      %p51 = por %p49, %p50
      %p52 = scmp.ne.s32.totalorder %s38, %s39
      %p53 = scmp.eq.s32.totalorder %s17, 3
      %p54 = por %p52, %p53
      %p56 = scmp.ne.s32.totalorder %s39, %s55
      %p57 = scmp.eq.s32.totalorder %s17, 0
      %p58 = por %p56, %p57
      %s60 = sadd.s32 %s59, 1
      %p63 = scmp.eq.s32.totalorder %s11, 3
      %p64 = scmp.ne.s32.totalorder %s59, %s61
      %p65 = scmp.eq.s32.totalorder %s11, 0
      %p66 = por %p64, %p65
      %p67 = scmp.ne.s32.totalorder %s59, %s61
      %p68 = scmp.eq.s32.totalorder %s16, 3
      %p69 = por %p67, %p68
      %p70 = scmp.ne.s32.totalorder %s61, %s62
      %p71 = scmp.eq.s32.totalorder %s16, 0
      %p72 = por %p70, %p71
      %p73 = scmp.ne.s32.totalorder %s61, %s62
      %p74 = scmp.eq.s32.totalorder %s17, 3
      %p75 = por %p73, %p74
      %p77 = scmp.ne.s32.totalorder %s62, %s76
      %p78 = scmp.eq.s32.totalorder %s17, 0
      %p79 = por %p77, %p78
      %s81 = sadd.s32 %s80, 1
      %p84 = scmp.eq.s32.totalorder %s11, 3
      %p85 = scmp.ne.s32.totalorder %s80, %s82
      %p86 = scmp.eq.s32.totalorder %s11, 0
      %p87 = por %p85, %p86
      %p88 = scmp.ne.s32.totalorder %s80, %s82
      %p89 = scmp.eq.s32.totalorder %s16, 3
      %p90 = por %p88, %p89
      %p91 = scmp.ne.s32.totalorder %s82, %s83
      %p92 = scmp.eq.s32.totalorder %s16, 0
      %p93 = por %p91, %p92
      %p94 = scmp.ne.s32.totalorder %s82, %s83
      %p95 = scmp.eq.s32.totalorder %s17, 3
      %p96 = por %p94, %p95
      %p98 = scmp.ne.s32.totalorder %s83, %s97
      %p99 = scmp.eq.s32.totalorder %s17, 0
      %p100 = por %p98, %p99
      %s102 = sadd.s32 %s101, 1
      %p105 = scmp.eq.s32.totalorder %s11, 3
      %p106 = scmp.ne.s32.totalorder %s101, %s103
      %p107 = scmp.eq.s32.totalorder %s11, 0
      %p108 = por %p106, %p107
      %p109 = scmp.ne.s32.totalorder %s101, %s103
      %p110 = scmp.eq.s32.totalorder %s16, 3
      %p111 = por %p109, %p110
      %p112 = scmp.ne.s32.totalorder %s103, %s104
      %p113 = scmp.eq.s32.totalorder %s16, 0
      %p114 = por %p112, %p113
      %p115 = scmp.ne.s32.totalorder %s103, %s104
      %p116 = scmp.eq.s32.totalorder %s17, 3
      %p117 = por %p115, %p116
      %p119 = scmp.ne.s32.totalorder %s104, %s118
      %p120 = scmp.eq.s32.totalorder %s17, 0
      %p121 = por %p119, %p120
      %s123 = sadd.s32 %s122, 1
      %p126 = scmp.eq.s32.totalorder %s11, 3
      %p127 = scmp.ne.s32.totalorder %s122, %s124
      %p128 = scmp.eq.s32.totalorder %s11, 0
      %p129 = por %p127, %p128
      %p130 = scmp.ne.s32.totalorder %s122, %s124
      %p131 = scmp.eq.s32.totalorder %s16, 3
      %p132 = por %p130, %p131
      %p133 = scmp.ne.s32.totalorder %s124, %s125
      %p134 = scmp.eq.s32.totalorder %s16, 0
      %p135 = por %p133, %p134
      %p136 = scmp.ne.s32.totalorder %s124, %s125
      %p137 = scmp.eq.s32.totalorder %s17, 3
      %p138 = por %p136, %p137
      %p140 = scmp.ne.s32.totalorder %s125, %s139
      %p141 = scmp.eq.s32.totalorder %s17, 0
      %p142 = por %p140, %p141
      %s143 = ssub.s32 %s18, %s30
      %p144 = scmp.eq.s32.totalorder %s143, 0
      %s146 = sadd.s32 %s145, 1
      %s147 = scalar_select %p144, %s145, %s146
      %p150 = pneg %p144
      %p151 = scmp.eq.s32.totalorder %s11, 3
      %p152 = por %p150, %p151
      %p153 = scmp.ne.s32.totalorder %s145, %s148
      %p154 = scmp.eq.s32.totalorder %s11, 0
      %p155 = por %p153, %p154
      %p156 = scmp.ne.s32.totalorder %s145, %s148
      %p157 = scmp.eq.s32.totalorder %s16, 3
      %p158 = por %p156, %p157
      %p159 = scmp.ne.s32.totalorder %s148, %s149
      %p160 = scmp.eq.s32.totalorder %s16, 0
      %p161 = por %p159, %p160
      %p162 = scmp.ne.s32.totalorder %s148, %s149
      %p163 = scmp.eq.s32.totalorder %s17, 3
      %p164 = por %p162, %p163
      %p166 = scmp.ne.s32.totalorder %s149, %s165
      %p167 = scmp.eq.s32.totalorder %s17, 0
      %p168 = por %p166, %p167
      %p169 = scmp.le.s32.totalorder 1, %s11
      %p170 = scmp.lt.s32.totalorder %s11, 5
      %p171 = pnand %p169, %p170
      %p172 = pneg %p171
      // Predicated region
      $region9: #{graphsage_forward.2} parent=5 // pred_check
        _
      $region10: #{graphsage_forward.2} parent=5 // pred_check_branch
        %174 = sbr.rel (%p171) target = $region12
      $region11: #{graphsage_forward.2} parent=5 // pred_region
        %s175 = ssub.s32 %s11, 1
        // Predicated region
        $region13: #{graphsage_forward.2} parent=11 // pred_check
          %p176 = pneg %p72
        $region14: #{graphsage_forward.2} parent=11 // pred_check_branch
          %178 = sbr.rel (%p176) target = $region16
        $region15: #{graphsage_forward.2} parent=11 // pred_region
          _
        $region16: #{graphsage_forward.2} parent=11 // pred_fallthru
          _
        // Predicated region
        $region17: #{graphsage_forward.2} parent=11 // pred_check
          %p179 = pneg %p93
        $region18: #{graphsage_forward.2} parent=11 // pred_check_branch
          %181 = sbr.rel (%p179) target = $region20
        $region19: #{graphsage_forward.2} parent=11 // pred_region
          _
        $region20: #{graphsage_forward.2} parent=11 // pred_fallthru
          _
        // Predicated region
        $region21: #{graphsage_forward.2} parent=11 // pred_check
          %p182 = pneg %p114
        $region22: #{graphsage_forward.2} parent=11 // pred_check_branch
          %184 = sbr.rel (%p182) target = $region24
        $region23: #{graphsage_forward.2} parent=11 // pred_region
          _
        $region24: #{graphsage_forward.2} parent=11 // pred_fallthru
          _
        // Predicated region
        $region25: #{graphsage_forward.2} parent=11 // pred_check
          %p185 = pneg %p135
        $region26: #{graphsage_forward.2} parent=11 // pred_check_branch
          %187 = sbr.rel (%p185) target = $region28
        $region27: #{graphsage_forward.2} parent=11 // pred_region
          _
        $region28: #{graphsage_forward.2} parent=11 // pred_fallthru
          _
      $region12: #{graphsage_forward.2} parent=5 // pred_fallthru
        _
      %p188 = scmp.lt.s32.totalorder %s11, 4
      // Predicated region
      $region29: #{graphsage_forward.2} parent=5 // pred_check
        %p189 = pneg %p188
      $region30: #{graphsage_forward.2} parent=5 // pred_check_branch
        %191 = sbr.rel (%p189) target = $region32
      $region31: #{graphsage_forward.2} parent=5 // pred_region
        // Predicated region
        $region33: #{graphsage_forward.2} parent=31 // pred_check
          %p192 = pneg %p45
        $region34: #{graphsage_forward.2} parent=31 // pred_check_branch
          %194 = sbr.rel (%p192) target = $region36
        $region35: #{graphsage_forward.2} parent=31 // pred_region
          %s195 = sand.u32 %s35, 1
          %s196 = sand.u32 %s35, 1
          %s197 = smul.addr %s196, 256
          %s198 = scalar_lea.vmem [#allocation3], %s197
          %s199 = smul.u32 32, %s18
          %s200 = smul.u32 2, %s19
          %s201 = smul.addr %s199, 4
          %s202 = sadd.s32 %s200, %s201
          %s203 = smul.addr %s202, 4
          %s204 = scalar_lea.vmem %s0, %s203
          // Predicated region
          $region37: #{graphsage_forward.2} parent=35 // pred_check
            _
          $region38: #{graphsage_forward.2} parent=35 // pred_check_branch
            %206 = sbr.rel (0) target = $region40
          $region39: #{graphsage_forward.2} parent=35 // pred_region
            // Predicated region
            $region41: #{graphsage_forward.2} parent=39 // pred_check
              _
            $region42: #{graphsage_forward.2} parent=39 // pred_check_branch
              %208 = sbr.rel (0) target = $region44
            $region43: #{graphsage_forward.2} parent=39 // pred_region
              // Predicated region
              $region56: #{graphsage_forward.2} parent=43 // pred_check
                _
              $region57: #{graphsage_forward.2} parent=43 // pred_check_branch
                %286 = sbr.rel (0) target = $region59
              $region58: #{graphsage_forward.2} parent=43 // pred_region
                loop: start=0, step=1, limit=1
                $region60: #{graphsage_forward.2} parent=58 // loop_pre_header
                  _
                $region61: #{graphsage_forward.2} parent=58 // loop_header
                  %s288 = sphi 0, %s292
                  %p289 = scmp.ge.s32.totalorder %s288, 1
                  %s293 = sphi %s204, %s204
                  %s294 = sphi %s198, %s198
                $region62: #{graphsage_forward.2} parent=58 // loop_header_branch
                  %291 = sbr.rel (%p289) target = $region66
                $region63: #{graphsage_forward.2} parent=58 // loop_body
                  %v295 = vld [vmem:[%s293] sm:$0xff]
                  %296 = vst [vmem:[%s294] sm:$0xff] %v295
                  %v297 = vld [vmem:[%s293 + $0x10] sm:$0xff]
                  %298 = vst [vmem:[%s294 + $0x8] sm:$0xff] %v297
                  %v299 = vld [vmem:[%s293 + $0x20] sm:$0xff]
                  %300 = vst [vmem:[%s294 + $0x10] sm:$0xff] %v299
                  %v301 = vld [vmem:[%s293 + $0x30] sm:$0xff]
                  %302 = vst [vmem:[%s294 + $0x18] sm:$0xff] %v301
                  %v303 = vld [vmem:[%s293 + $0x40] sm:$0xff]
                  %304 = vst [vmem:[%s294 + $0x20] sm:$0xff] %v303
                  %v305 = vld [vmem:[%s293 + $0x50] sm:$0xff]
                  %306 = vst [vmem:[%s294 + $0x28] sm:$0xff] %v305
                  %v307 = vld [vmem:[%s293 + $0x60] sm:$0xff]
                  %308 = vst [vmem:[%s294 + $0x30] sm:$0xff] %v307
                  %v309 = vld [vmem:[%s293 + $0x70] sm:$0xff]
                  %310 = vst [vmem:[%s294 + $0x38] sm:$0xff] %v309
                  %v311 = vld [vmem:[%s293 + $0x80] sm:$0xff]
                  %312 = vst [vmem:[%s294 + $0x40] sm:$0xff] %v311
                  %v313 = vld [vmem:[%s293 + $0x90] sm:$0xff]
                  %314 = vst [vmem:[%s294 + $0x48] sm:$0xff] %v313
                  %v315 = vld [vmem:[%s293 + $0xa0] sm:$0xff]
                  %316 = vst [vmem:[%s294 + $0x50] sm:$0xff] %v315
                  %v317 = vld [vmem:[%s293 + $0xb0] sm:$0xff]
                  %318 = vst [vmem:[%s294 + $0x58] sm:$0xff] %v317
                  %v319 = vld [vmem:[%s293 + $0xc0] sm:$0xff]
                  %320 = vst [vmem:[%s294 + $0x60] sm:$0xff] %v319
                  %v321 = vld [vmem:[%s293 + $0xd0] sm:$0xff]
                  %322 = vst [vmem:[%s294 + $0x68] sm:$0xff] %v321
                  %v323 = vld [vmem:[%s293 + $0xe0] sm:$0xff]
                  %324 = vst [vmem:[%s294 + $0x70] sm:$0xff] %v323
                  %v325 = vld [vmem:[%s293 + $0xf0] sm:$0xff]
                  %326 = vst [vmem:[%s294 + $0x78] sm:$0xff] %v325
                  %v327 = vld [vmem:[%s293 + $0x100] sm:$0xff]
                  %328 = vst [vmem:[%s294 + $0x80] sm:$0xff] %v327
                  %v329 = vld [vmem:[%s293 + $0x110] sm:$0xff]
                  %330 = vst [vmem:[%s294 + $0x88] sm:$0xff] %v329
                  %v331 = vld [vmem:[%s293 + $0x120] sm:$0xff]
                  %332 = vst [vmem:[%s294 + $0x90] sm:$0xff] %v331
                  %v333 = vld [vmem:[%s293 + $0x130] sm:$0xff]
                  %334 = vst [vmem:[%s294 + $0x98] sm:$0xff] %v333
                  %v335 = vld [vmem:[%s293 + $0x140] sm:$0xff]
                  %336 = vst [vmem:[%s294 + $0xa0] sm:$0xff] %v335
                  %v337 = vld [vmem:[%s293 + $0x150] sm:$0xff]
                  %338 = vst [vmem:[%s294 + $0xa8] sm:$0xff] %v337
                  %v339 = vld [vmem:[%s293 + $0x160] sm:$0xff]
                  %340 = vst [vmem:[%s294 + $0xb0] sm:$0xff] %v339
                  %v341 = vld [vmem:[%s293 + $0x170] sm:$0xff]
                  %342 = vst [vmem:[%s294 + $0xb8] sm:$0xff] %v341
                  %v343 = vld [vmem:[%s293 + $0x180] sm:$0xff]
                  %344 = vst [vmem:[%s294 + $0xc0] sm:$0xff] %v343
                  %v345 = vld [vmem:[%s293 + $0x190] sm:$0xff]
                  %346 = vst [vmem:[%s294 + $0xc8] sm:$0xff] %v345
                  %v347 = vld [vmem:[%s293 + $0x1a0] sm:$0xff]
                  %348 = vst [vmem:[%s294 + $0xd0] sm:$0xff] %v347
                  %v349 = vld [vmem:[%s293 + $0x1b0] sm:$0xff]
                  %350 = vst [vmem:[%s294 + $0xd8] sm:$0xff] %v349
                  %v351 = vld [vmem:[%s293 + $0x1c0] sm:$0xff]
                  %352 = vst [vmem:[%s294 + $0xe0] sm:$0xff] %v351
                  %v353 = vld [vmem:[%s293 + $0x1d0] sm:$0xff]
                  %354 = vst [vmem:[%s294 + $0xe8] sm:$0xff] %v353
                  %v355 = vld [vmem:[%s293 + $0x1e0] sm:$0xff]
                  %356 = vst [vmem:[%s294 + $0xf0] sm:$0xff] %v355
                  %v357 = vld [vmem:[%s293 + $0x1f0] sm:$0xff]
                  %358 = vst [vmem:[%s294 + $0xf8] sm:$0xff] %v357
                $region64: #{graphsage_forward.2} parent=58 // loop_footer
                  %s292 = sadd.s32 1, %s288
                $region65: #{graphsage_forward.2} parent=58 // loop_footer_branch
                  %287 = sbr.rel target = $region61
                $region66: #{graphsage_forward.2} parent=58 // loop_exit
                  _
              $region59: #{graphsage_forward.2} parent=43 // pred_fallthru
                _
              // Predicated region
              $region67: #{graphsage_forward.2} parent=43 // pred_check
                _
              $region68: #{graphsage_forward.2} parent=43 // pred_check_branch
                %360 = sbr.rel target = $region70
              $region69: #{graphsage_forward.2} parent=43 // pred_region
                _
              $region70: #{graphsage_forward.2} parent=43 // pred_fallthru
                _
            $region44: #{graphsage_forward.2} parent=39 // pred_fallthru
              _
            // Predicated region
            $region45: #{graphsage_forward.2} parent=39 // pred_check
              _
            $region46: #{graphsage_forward.2} parent=39 // pred_check_branch
              %210 = sbr.rel target = $region48
            $region47: #{graphsage_forward.2} parent=39 // pred_region
              %s212 = ssub.s32 256, 1
              loop: start=0, step=1, limit=1
              $region49: #{graphsage_forward.2} parent=47 // loop_pre_header
                _
              $region50: #{graphsage_forward.2} parent=47 // loop_header
                %s214 = sphi 0, %s218
                %p215 = scmp.ge.s32.totalorder %s214, 1
                %s219 = sphi %s204, %s204
                %s220 = sphi %s198, %s198
              $region51: #{graphsage_forward.2} parent=47 // loop_header_branch
                %217 = sbr.rel (%p215) target = $region55
              $region52: #{graphsage_forward.2} parent=47 // loop_body
                %v221 = vld [vmem:[%s219] sm:%s212]
                %222 = vst [vmem:[%s220] sm:%s212] %v221
                %v223 = vld [vmem:[%s219 + $0x10] sm:%s212]
                %224 = vst [vmem:[%s220 + $0x8] sm:%s212] %v223
                %v225 = vld [vmem:[%s219 + $0x20] sm:%s212]
                %226 = vst [vmem:[%s220 + $0x10] sm:%s212] %v225
                %v227 = vld [vmem:[%s219 + $0x30] sm:%s212]
                %228 = vst [vmem:[%s220 + $0x18] sm:%s212] %v227
                %v229 = vld [vmem:[%s219 + $0x40] sm:%s212]
                %230 = vst [vmem:[%s220 + $0x20] sm:%s212] %v229
                %v231 = vld [vmem:[%s219 + $0x50] sm:%s212]
                %232 = vst [vmem:[%s220 + $0x28] sm:%s212] %v231
                %v233 = vld [vmem:[%s219 + $0x60] sm:%s212]
                %234 = vst [vmem:[%s220 + $0x30] sm:%s212] %v233
                %v235 = vld [vmem:[%s219 + $0x70] sm:%s212]
                %236 = vst [vmem:[%s220 + $0x38] sm:%s212] %v235
                %v237 = vld [vmem:[%s219 + $0x80] sm:%s212]
                %238 = vst [vmem:[%s220 + $0x40] sm:%s212] %v237
                %v239 = vld [vmem:[%s219 + $0x90] sm:%s212]
                %240 = vst [vmem:[%s220 + $0x48] sm:%s212] %v239
                %v241 = vld [vmem:[%s219 + $0xa0] sm:%s212]
                %242 = vst [vmem:[%s220 + $0x50] sm:%s212] %v241
                %v243 = vld [vmem:[%s219 + $0xb0] sm:%s212]
                %244 = vst [vmem:[%s220 + $0x58] sm:%s212] %v243
                %v245 = vld [vmem:[%s219 + $0xc0] sm:%s212]
                %246 = vst [vmem:[%s220 + $0x60] sm:%s212] %v245
                %v247 = vld [vmem:[%s219 + $0xd0] sm:%s212]
                %248 = vst [vmem:[%s220 + $0x68] sm:%s212] %v247
                %v249 = vld [vmem:[%s219 + $0xe0] sm:%s212]
                %250 = vst [vmem:[%s220 + $0x70] sm:%s212] %v249
                %v251 = vld [vmem:[%s219 + $0xf0] sm:%s212]
                %252 = vst [vmem:[%s220 + $0x78] sm:%s212] %v251
                %v253 = vld [vmem:[%s219 + $0x100] sm:%s212]
                %254 = vst [vmem:[%s220 + $0x80] sm:%s212] %v253
                %v255 = vld [vmem:[%s219 + $0x110] sm:%s212]
                %256 = vst [vmem:[%s220 + $0x88] sm:%s212] %v255
                %v257 = vld [vmem:[%s219 + $0x120] sm:%s212]
                %258 = vst [vmem:[%s220 + $0x90] sm:%s212] %v257
                %v259 = vld [vmem:[%s219 + $0x130] sm:%s212]
                %260 = vst [vmem:[%s220 + $0x98] sm:%s212] %v259
                %v261 = vld [vmem:[%s219 + $0x140] sm:%s212]
                %262 = vst [vmem:[%s220 + $0xa0] sm:%s212] %v261
                %v263 = vld [vmem:[%s219 + $0x150] sm:%s212]
                %264 = vst [vmem:[%s220 + $0xa8] sm:%s212] %v263
                %v265 = vld [vmem:[%s219 + $0x160] sm:%s212]
                %266 = vst [vmem:[%s220 + $0xb0] sm:%s212] %v265
                %v267 = vld [vmem:[%s219 + $0x170] sm:%s212]
                %268 = vst [vmem:[%s220 + $0xb8] sm:%s212] %v267
                %v269 = vld [vmem:[%s219 + $0x180] sm:%s212]
                %270 = vst [vmem:[%s220 + $0xc0] sm:%s212] %v269
                %v271 = vld [vmem:[%s219 + $0x190] sm:%s212]
                %272 = vst [vmem:[%s220 + $0xc8] sm:%s212] %v271
                %v273 = vld [vmem:[%s219 + $0x1a0] sm:%s212]
                %274 = vst [vmem:[%s220 + $0xd0] sm:%s212] %v273
                %v275 = vld [vmem:[%s219 + $0x1b0] sm:%s212]
                %276 = vst [vmem:[%s220 + $0xd8] sm:%s212] %v275
                %v277 = vld [vmem:[%s219 + $0x1c0] sm:%s212]
                %278 = vst [vmem:[%s220 + $0xe0] sm:%s212] %v277
                %v279 = vld [vmem:[%s219 + $0x1d0] sm:%s212]
                %280 = vst [vmem:[%s220 + $0xe8] sm:%s212] %v279
                %v281 = vld [vmem:[%s219 + $0x1e0] sm:%s212]
                %282 = vst [vmem:[%s220 + $0xf0] sm:%s212] %v281
                %v283 = vld [vmem:[%s219 + $0x1f0] sm:%s212]
                %284 = vst [vmem:[%s220 + $0xf8] sm:%s212] %v283
              $region53: #{graphsage_forward.2} parent=47 // loop_footer
                %s218 = sadd.s32 1, %s214
              $region54: #{graphsage_forward.2} parent=47 // loop_footer_branch
                %213 = sbr.rel target = $region50
              $region55: #{graphsage_forward.2} parent=47 // loop_exit
                _
            $region48: #{graphsage_forward.2} parent=39 // pred_fallthru
              _
          $region40: #{graphsage_forward.2} parent=35 // pred_fallthru
            _
          %361 = vnop
        $region36: #{graphsage_forward.2} parent=31 // pred_fallthru
          _
      $region32: #{graphsage_forward.2} parent=5 // pred_fallthru
        _
      %p362 = scmp.le.s32.totalorder 1, %s11
      %p363 = scmp.lt.s32.totalorder %s11, 5
      %p364 = pnand %p362, %p363
      %p365 = pneg %p364
      // Predicated region
      $region71: #{graphsage_forward.2} parent=5 // pred_check
        _
      $region72: #{graphsage_forward.2} parent=5 // pred_check_branch
        %367 = sbr.rel (%p364) target = $region74
      $region73: #{graphsage_forward.2} parent=5 // pred_region
        %s368 = ssub.s32 %s11, 1
        %s369 = sand.u32 %s38, 1
        %s370 = sand.u32 %s38, 1
        %s371 = smul.addr %s370, 256
        %s372 = scalar_lea.vmem [#allocation3], %s371
        // Predicated region
        $region75: #{graphsage_forward.2} parent=73 // pred_check
          %p373 = pneg %p51
        $region76: #{graphsage_forward.2} parent=73 // pred_check_branch
          %375 = sbr.rel (%p373) target = $region78
        $region77: #{graphsage_forward.2} parent=73 // pred_region
          _
        $region78: #{graphsage_forward.2} parent=73 // pred_fallthru
          _
        %s376 = sand.u32 %s38, 1
        %s377 = sand.u32 %s38, 1
        %s378 = smul.addr %s377, 256
        %s379 = scalar_lea.vmem [#allocation3], %s378
        %p380 = pneg %p51
        %p381 = pneg %p48
        %p382 = pneg %p72
        %p383 = pneg %p69
        %p384 = pneg %p93
        %p385 = pneg %p90
        %p386 = pneg %p114
        %p387 = pneg %p111
        %p388 = pneg %p135
        %p389 = pneg %p132
        %p390 = pneg %p161
        %p391 = pneg %p158
        %s392 = smul.u32 32, %s20
        %p393 = scmp.lt.s32.totalorder %s392, 63
        %s394 = scalar_select %p393, %s392, 63
        %s395 = smul.addr %s394, 2
        %s396 = smul.addr %s395, 4
        %s397 = scalar_lea.vmem %s5, %s396
        %s398 = smul.u32 32, %s20
        %s399 = smul.u32 2, %s21
        %s400 = smul.u32 32, %s20
        %p401 = scmp.lt.s32.totalorder %s400, 63
        %s402 = scalar_select %p401, %s400, 63
        %s403 = smul.addr %s402, 2
        %s404 = smul.addr %s403, 4
        %s405 = scalar_lea.vmem %s5, %s404
        %s406 = smul.u32 32, %s20
        %p408 = scmp.eq.s32.totalorder %s21, 0
        // Predicated region
        $region79: #{graphsage_forward.2} parent=73 // pred_check
          %p409 = pneg %p408
        $region80: #{graphsage_forward.2} parent=73 // pred_check_branch
          %411 = sbr.rel (%p409) target = $region82
        $region81: #{graphsage_forward.2} parent=73 // pred_region
          %412 = vst [vmem:[#allocation2] sm:$0xff] 0.0
          %413 = vst [vmem:[#allocation2 + $0x8] sm:$0xff] 0.0
          %414 = vst [vmem:[#allocation2 + $0x10] sm:$0xff] 0.0
          %415 = vst [vmem:[#allocation2 + $0x18] sm:$0xff] 0.0
          %416 = vst [vmem:[#allocation2 + $0x20] sm:$0xff] 0.0
          %417 = vst [vmem:[#allocation2 + $0x28] sm:$0xff] 0.0
          %418 = vst [vmem:[#allocation2 + $0x30] sm:$0xff] 0.0
          %419 = vst [vmem:[#allocation2 + $0x38] sm:$0xff] 0.0
          %420 = vst [vmem:[#allocation2 + $0x40] sm:$0xff] 0.0
          %421 = vst [vmem:[#allocation2 + $0x48] sm:$0xff] 0.0
          %422 = vst [vmem:[#allocation2 + $0x50] sm:$0xff] 0.0
          %423 = vst [vmem:[#allocation2 + $0x58] sm:$0xff] 0.0
          %424 = vst [vmem:[#allocation2 + $0x60] sm:$0xff] 0.0
          %425 = vst [vmem:[#allocation2 + $0x68] sm:$0xff] 0.0
          %426 = vst [vmem:[#allocation2 + $0x70] sm:$0xff] 0.0
          %427 = vst [vmem:[#allocation2 + $0x78] sm:$0xff] 0.0
          %428 = vst [vmem:[#allocation2 + $0x80] sm:$0xff] 0.0
          %429 = vst [vmem:[#allocation2 + $0x88] sm:$0xff] 0.0
          %430 = vst [vmem:[#allocation2 + $0x90] sm:$0xff] 0.0
          %431 = vst [vmem:[#allocation2 + $0x98] sm:$0xff] 0.0
          %432 = vst [vmem:[#allocation2 + $0xa0] sm:$0xff] 0.0
          %433 = vst [vmem:[#allocation2 + $0xa8] sm:$0xff] 0.0
          %434 = vst [vmem:[#allocation2 + $0xb0] sm:$0xff] 0.0
          %435 = vst [vmem:[#allocation2 + $0xb8] sm:$0xff] 0.0
          %436 = vst [vmem:[#allocation2 + $0xc0] sm:$0xff] 0.0
          %437 = vst [vmem:[#allocation2 + $0xc8] sm:$0xff] 0.0
          %438 = vst [vmem:[#allocation2 + $0xd0] sm:$0xff] 0.0
          %439 = vst [vmem:[#allocation2 + $0xd8] sm:$0xff] 0.0
          %440 = vst [vmem:[#allocation2 + $0xe0] sm:$0xff] 0.0
          %441 = vst [vmem:[#allocation2 + $0xe8] sm:$0xff] 0.0
          %442 = vst [vmem:[#allocation2 + $0xf0] sm:$0xff] 0.0
          %443 = vst [vmem:[#allocation2 + $0xf8] sm:$0xff] 0.0
        $region82: #{graphsage_forward.2} parent=73 // pred_fallthru
          _
        %s444 = smul.u32 %s21, 256
        %v445 = vld [vmem:[#allocation2] sm:$0xff]
        %v446 = vld [vmem:[#allocation2 + $0x8] sm:$0xff]
        %v447 = vld [vmem:[#allocation2 + $0x10] sm:$0xff]
        %v448 = vld [vmem:[#allocation2 + $0x18] sm:$0xff]
        %v449 = vld [vmem:[#allocation2 + $0x20] sm:$0xff]
        %v450 = vld [vmem:[#allocation2 + $0x28] sm:$0xff]
        %v451 = vld [vmem:[#allocation2 + $0x30] sm:$0xff]
        %v452 = vld [vmem:[#allocation2 + $0x38] sm:$0xff]
        %v453 = vld [vmem:[#allocation2 + $0x40] sm:$0xff]
        %v454 = vld [vmem:[#allocation2 + $0x48] sm:$0xff]
        %v455 = vld [vmem:[#allocation2 + $0x50] sm:$0xff]
        %v456 = vld [vmem:[#allocation2 + $0x58] sm:$0xff]
        %v457 = vld [vmem:[#allocation2 + $0x60] sm:$0xff]
        %v458 = vld [vmem:[#allocation2 + $0x68] sm:$0xff]
        %v459 = vld [vmem:[#allocation2 + $0x70] sm:$0xff]
        %v460 = vld [vmem:[#allocation2 + $0x78] sm:$0xff]
        %v461 = vld [vmem:[#allocation2 + $0x80] sm:$0xff]
        %v462 = vld [vmem:[#allocation2 + $0x88] sm:$0xff]
        %v463 = vld [vmem:[#allocation2 + $0x90] sm:$0xff]
        %v464 = vld [vmem:[#allocation2 + $0x98] sm:$0xff]
        %v465 = vld [vmem:[#allocation2 + $0xa0] sm:$0xff]
        %v466 = vld [vmem:[#allocation2 + $0xa8] sm:$0xff]
        %v467 = vld [vmem:[#allocation2 + $0xb0] sm:$0xff]
        %v468 = vld [vmem:[#allocation2 + $0xb8] sm:$0xff]
        %v469 = vld [vmem:[#allocation2 + $0xc0] sm:$0xff]
        %v470 = vld [vmem:[#allocation2 + $0xc8] sm:$0xff]
        %v471 = vld [vmem:[#allocation2 + $0xd0] sm:$0xff]
        %v472 = vld [vmem:[#allocation2 + $0xd8] sm:$0xff]
        %v473 = vld [vmem:[#allocation2 + $0xe0] sm:$0xff]
        %v474 = vld [vmem:[#allocation2 + $0xe8] sm:$0xff]
        %v475 = vld [vmem:[#allocation2 + $0xf0] sm:$0xff]
        %v476 = vld [vmem:[#allocation2 + $0xf8] sm:$0xff]
        %v477 = vld [vmem:[%s372] sm:$0xff]
        %v478 = vld [vmem:[%s372 + $0x8] sm:$0xff]
        %v479 = vld [vmem:[%s372 + $0x10] sm:$0xff]
        %v480 = vld [vmem:[%s372 + $0x18] sm:$0xff]
        %v481 = vld [vmem:[%s372 + $0x20] sm:$0xff]
        %v482 = vld [vmem:[%s372 + $0x28] sm:$0xff]
        %v483 = vld [vmem:[%s372 + $0x30] sm:$0xff]
        %v484 = vld [vmem:[%s372 + $0x38] sm:$0xff]
        %v485 = vld [vmem:[%s372 + $0x40] sm:$0xff]
        %v486 = vld [vmem:[%s372 + $0x48] sm:$0xff]
        %v487 = vld [vmem:[%s372 + $0x50] sm:$0xff]
        %v488 = vld [vmem:[%s372 + $0x58] sm:$0xff]
        %v489 = vld [vmem:[%s372 + $0x60] sm:$0xff]
        %v490 = vld [vmem:[%s372 + $0x68] sm:$0xff]
        %v491 = vld [vmem:[%s372 + $0x70] sm:$0xff]
        %v492 = vld [vmem:[%s372 + $0x78] sm:$0xff]
        %v493 = vld [vmem:[%s372 + $0x80] sm:$0xff]
        %v494 = vld [vmem:[%s372 + $0x88] sm:$0xff]
        %v495 = vld [vmem:[%s372 + $0x90] sm:$0xff]
        %v496 = vld [vmem:[%s372 + $0x98] sm:$0xff]
        %v497 = vld [vmem:[%s372 + $0xa0] sm:$0xff]
        %v498 = vld [vmem:[%s372 + $0xa8] sm:$0xff]
        %v499 = vld [vmem:[%s372 + $0xb0] sm:$0xff]
        %v500 = vld [vmem:[%s372 + $0xb8] sm:$0xff]
        %v501 = vld [vmem:[%s372 + $0xc0] sm:$0xff]
        %v502 = vld [vmem:[%s372 + $0xc8] sm:$0xff]
        %v503 = vld [vmem:[%s372 + $0xd0] sm:$0xff]
        %v504 = vld [vmem:[%s372 + $0xd8] sm:$0xff]
        %v505 = vld [vmem:[%s372 + $0xe0] sm:$0xff]
        %v506 = vld [vmem:[%s372 + $0xe8] sm:$0xff]
        %v507 = vld [vmem:[%s372 + $0xf0] sm:$0xff]
        %v508 = vld [vmem:[%s372 + $0xf8] sm:$0xff]
        %s509 = sshra.s32 %s444, 3
        %s510 = sand.u32 %s444, 7
        %s511 = smul.addr %s509, 4
        %s512 = scalar_lea.vmem %s1, %s511
        %v513 = vld [vmem:[%s512] sm:$0xf]
        %v514 = vld [vmem:[%s512 + $0x4] sm:$0xf]
        %v515 = vld [vmem:[%s512 + $0x8] sm:$0xf]
        %v516 = vld [vmem:[%s512 + $0xc] sm:$0xf]
        %v517 = vld [vmem:[%s512 + $0x10] sm:$0xf]
        %v518 = vld [vmem:[%s512 + $0x14] sm:$0xf]
        %v519 = vld [vmem:[%s512 + $0x18] sm:$0xf]
        %v520 = vld [vmem:[%s512 + $0x1c] sm:$0xf]
        %v521 = vld [vmem:[%s512 + $0x20] sm:$0xf]
        %v522 = vld [vmem:[%s512 + $0x24] sm:$0xf]
        %v523 = vld [vmem:[%s512 + $0x28] sm:$0xf]
        %v524 = vld [vmem:[%s512 + $0x2c] sm:$0xf]
        %v525 = vld [vmem:[%s512 + $0x30] sm:$0xf]
        %v526 = vld [vmem:[%s512 + $0x34] sm:$0xf]
        %v527 = vld [vmem:[%s512 + $0x38] sm:$0xf]
        %v528 = vld [vmem:[%s512 + $0x3c] sm:$0xf]
        %v529 = vld [vmem:[%s512 + $0x40] sm:$0xf]
        %v530 = vld [vmem:[%s512 + $0x44] sm:$0xf]
        %v531 = vld [vmem:[%s512 + $0x48] sm:$0xf]
        %v532 = vld [vmem:[%s512 + $0x4c] sm:$0xf]
        %v533 = vld [vmem:[%s512 + $0x50] sm:$0xf]
        %v534 = vld [vmem:[%s512 + $0x54] sm:$0xf]
        %v535 = vld [vmem:[%s512 + $0x58] sm:$0xf]
        %v536 = vld [vmem:[%s512 + $0x5c] sm:$0xf]
        %v537 = vld [vmem:[%s512 + $0x60] sm:$0xf]
        %v538 = vld [vmem:[%s512 + $0x64] sm:$0xf]
        %v539 = vld [vmem:[%s512 + $0x68] sm:$0xf]
        %v540 = vld [vmem:[%s512 + $0x6c] sm:$0xf]
        %v541 = vld [vmem:[%s512 + $0x70] sm:$0xf]
        %v542 = vld [vmem:[%s512 + $0x74] sm:$0xf]
        %v543 = vld [vmem:[%s512 + $0x78] sm:$0xf]
        %v544 = vld [vmem:[%s512 + $0x7c] sm:$0xf]
        %v577 = vunpack.c.l.b16 %v477
        %v578 = vunpack.c.h.b16 %v477
        %v579 = vunpack.c.l.b16 %v478
        %v580 = vunpack.c.h.b16 %v478
        %v581 = vunpack.c.l.b16 %v479
        %v582 = vunpack.c.h.b16 %v479
        %v583 = vunpack.c.l.b16 %v480
        %v584 = vunpack.c.h.b16 %v480
        %v585 = vunpack.c.l.b16 %v481
        %v586 = vunpack.c.h.b16 %v481
        %v587 = vunpack.c.l.b16 %v482
        %v588 = vunpack.c.h.b16 %v482
        %v589 = vunpack.c.l.b16 %v483
        %v590 = vunpack.c.h.b16 %v483
        %v591 = vunpack.c.l.b16 %v484
        %v592 = vunpack.c.h.b16 %v484
        %v593 = vunpack.c.l.b16 %v485
        %v594 = vunpack.c.h.b16 %v485
        %v595 = vunpack.c.l.b16 %v486
        %v596 = vunpack.c.h.b16 %v486
        %v597 = vunpack.c.l.b16 %v487
        %v598 = vunpack.c.h.b16 %v487
        %v599 = vunpack.c.l.b16 %v488
        %v600 = vunpack.c.h.b16 %v488
        %v601 = vunpack.c.l.b16 %v489
        %v602 = vunpack.c.h.b16 %v489
        %v603 = vunpack.c.l.b16 %v490
        %v604 = vunpack.c.h.b16 %v490
        %v605 = vunpack.c.l.b16 %v491
        %v606 = vunpack.c.h.b16 %v491
        %v607 = vunpack.c.l.b16 %v492
        %v608 = vunpack.c.h.b16 %v492
        %v609 = vunpack.c.l.b16 %v493
        %v610 = vunpack.c.h.b16 %v493
        %v611 = vunpack.c.l.b16 %v494
        %v612 = vunpack.c.h.b16 %v494
        %v613 = vunpack.c.l.b16 %v495
        %v614 = vunpack.c.h.b16 %v495
        %v615 = vunpack.c.l.b16 %v496
        %v616 = vunpack.c.h.b16 %v496
        %v617 = vunpack.c.l.b16 %v497
        %v618 = vunpack.c.h.b16 %v497
        %v619 = vunpack.c.l.b16 %v498
        %v620 = vunpack.c.h.b16 %v498
        %v621 = vunpack.c.l.b16 %v499
        %v622 = vunpack.c.h.b16 %v499
        %v623 = vunpack.c.l.b16 %v500
        %v624 = vunpack.c.h.b16 %v500
        %v625 = vunpack.c.l.b16 %v501
        %v626 = vunpack.c.h.b16 %v501
        %v627 = vunpack.c.l.b16 %v502
        %v628 = vunpack.c.h.b16 %v502
        %v629 = vunpack.c.l.b16 %v503
        %v630 = vunpack.c.h.b16 %v503
        %v631 = vunpack.c.l.b16 %v504
        %v632 = vunpack.c.h.b16 %v504
        %v633 = vunpack.c.l.b16 %v505
        %v634 = vunpack.c.h.b16 %v505
        %v635 = vunpack.c.l.b16 %v506
        %v636 = vunpack.c.h.b16 %v506
        %v637 = vunpack.c.l.b16 %v507
        %v638 = vunpack.c.h.b16 %v507
        %v639 = vunpack.c.l.b16 %v508
        %v640 = vunpack.c.h.b16 %v508
        %v641 = vpack.c.b16 %v579, %v577
        %v642 = vpack.c.b16 %v580, %v578
        %v643 = vpack.c.b16 %v583, %v581
        %v644 = vpack.c.b16 %v584, %v582
        %v645 = vpack.c.b16 %v587, %v585
        %v646 = vpack.c.b16 %v588, %v586
        %v647 = vpack.c.b16 %v591, %v589
        %v648 = vpack.c.b16 %v592, %v590
        %v649 = vpack.c.b16 %v595, %v593
        %v650 = vpack.c.b16 %v596, %v594
        %v651 = vpack.c.b16 %v599, %v597
        %v652 = vpack.c.b16 %v600, %v598
        %v653 = vpack.c.b16 %v603, %v601
        %v654 = vpack.c.b16 %v604, %v602
        %v655 = vpack.c.b16 %v607, %v605
        %v656 = vpack.c.b16 %v608, %v606
        %v657 = vpack.c.b16 %v611, %v609
        %v658 = vpack.c.b16 %v612, %v610
        %v659 = vpack.c.b16 %v615, %v613
        %v660 = vpack.c.b16 %v616, %v614
        %v661 = vpack.c.b16 %v619, %v617
        %v662 = vpack.c.b16 %v620, %v618
        %v663 = vpack.c.b16 %v623, %v621
        %v664 = vpack.c.b16 %v624, %v622
        %v665 = vpack.c.b16 %v627, %v625
        %v666 = vpack.c.b16 %v628, %v626
        %v667 = vpack.c.b16 %v631, %v629
        %v668 = vpack.c.b16 %v632, %v630
        %v669 = vpack.c.b16 %v635, %v633
        %v670 = vpack.c.b16 %v636, %v634
        %v671 = vpack.c.b16 %v639, %v637
        %v672 = vpack.c.b16 %v640, %v638
        %v737 = vunpack.c.l.b16 %v513
        %v738 = vunpack.c.l.b16 %v514
        %v739 = vunpack.c.l.b16 %v515
        %v740 = vunpack.c.l.b16 %v516
        %v741 = vunpack.c.l.b16 %v517
        %v742 = vunpack.c.l.b16 %v518
        %v743 = vunpack.c.l.b16 %v519
        %v744 = vunpack.c.l.b16 %v520
        %v745 = vunpack.c.l.b16 %v521
        %v746 = vunpack.c.l.b16 %v522
        %v747 = vunpack.c.l.b16 %v523
        %v748 = vunpack.c.l.b16 %v524
        %v749 = vunpack.c.l.b16 %v525
        %v750 = vunpack.c.l.b16 %v526
        %v751 = vunpack.c.l.b16 %v527
        %v752 = vunpack.c.l.b16 %v528
        %v753 = vunpack.c.l.b16 %v529
        %v754 = vunpack.c.l.b16 %v530
        %v755 = vunpack.c.l.b16 %v531
        %v756 = vunpack.c.l.b16 %v532
        %v757 = vunpack.c.l.b16 %v533
        %v758 = vunpack.c.l.b16 %v534
        %v759 = vunpack.c.l.b16 %v535
        %v760 = vunpack.c.l.b16 %v536
        %v761 = vunpack.c.l.b16 %v537
        %v762 = vunpack.c.l.b16 %v538
        %v763 = vunpack.c.l.b16 %v539
        %v764 = vunpack.c.l.b16 %v540
        %v765 = vunpack.c.l.b16 %v541
        %v766 = vunpack.c.l.b16 %v542
        %v767 = vunpack.c.l.b16 %v543
        %v768 = vunpack.c.l.b16 %v544
        %v769 = vpack.c.b16 %v738, %v737
        %v770 = vpack.c.b16 %v740, %v739
        %v771 = vpack.c.b16 %v742, %v741
        %v772 = vpack.c.b16 %v744, %v743
        %v773 = vpack.c.b16 %v746, %v745
        %v774 = vpack.c.b16 %v748, %v747
        %v775 = vpack.c.b16 %v750, %v749
        %v776 = vpack.c.b16 %v752, %v751
        %v777 = vpack.c.b16 %v754, %v753
        %v778 = vpack.c.b16 %v756, %v755
        %v779 = vpack.c.b16 %v758, %v757
        %v780 = vpack.c.b16 %v760, %v759
        %v781 = vpack.c.b16 %v762, %v761
        %v782 = vpack.c.b16 %v764, %v763
        %v783 = vpack.c.b16 %v766, %v765
        %v784 = vpack.c.b16 %v768, %v767
        %801 = vmatprep.subr.bf16.mxu0 0
        %802 = vmatpush1.bf16.msra.mxu0 %v776
        %803 = vmatprep.subr.bf16.mxu0 0
        %804 = vmatpush1.bf16.msra.mxu0 %v775
        %805 = vmatprep.subr.bf16.mxu0 0
        %806 = vmatpush1.bf16.msra.mxu0 %v774
        %807 = vmatprep.subr.bf16.mxu0 0
        %808 = vmatpush1.bf16.msra.mxu0 %v773
        %809 = vmatprep.subr.bf16.mxu0 0
        %810 = vmatpush1.bf16.msra.mxu0 %v772
        %811 = vmatprep.subr.bf16.mxu0 0
        %812 = vmatpush1.bf16.msra.mxu0 %v771
        %813 = vmatprep.subr.bf16.mxu0 0
        %814 = vmatpush1.bf16.msra.mxu0 %v770
        %815 = vmatprep.subr.bf16.mxu0 0
        %816 = vmatpush1.bf16.msra.mxu0 %v769
        %817 = vmatprep.subr.bf16.mxu0 0
        %818 = vmatpush2.bf16.msra.mxu0 %v784
        %819 = vmatprep.subr.bf16.mxu0 0
        %820 = vmatpush2.bf16.msra.mxu0 %v783
        %821 = vmatprep.subr.bf16.mxu0 0
        %822 = vmatpush2.bf16.msra.mxu0 %v782
        %823 = vmatprep.subr.bf16.mxu0 0
        %824 = vmatpush2.bf16.msra.mxu0 %v781
        %825 = vmatprep.subr.bf16.mxu0 0
        %826 = vmatpush2.bf16.msra.mxu0 %v780
        %827 = vmatprep.subr.bf16.mxu0 0
        %828 = vmatpush2.bf16.msra.mxu0 %v779
        %829 = vmatprep.subr.bf16.mxu0 0
        %830 = vmatpush2.bf16.msra.mxu0 %v778
        %831 = vmatprep.subr.bf16.mxu0 0
        %832 = vmatpush2.bf16.msra.mxu0 %v777
        %833 = vmatprep.mubr.bf16.mxu0 %v642
        %834 = vmatmul.mubr.bf16.gmra.mxu0 %v641
        %v835 = vpop.f32.mrf.mxu0
        %v836 = vadd.f32 0.0, %v835
        %v837 = vpop.f32.mrf.mxu0
        %v838 = vpop.f32.mrf.mxu0
        %v839 = vadd.f32 0.0, %v838
        %v840 = vpop.f32.mrf.mxu0
        %841 = vmatprep.mubr.bf16.mxu0 %v644
        %842 = vmatmul.mubr.bf16.gmra.mxu0 %v643
        %v843 = vpop.f32.mrf.mxu0
        %v844 = vadd.f32 0.0, %v843
        %v845 = vpop.f32.mrf.mxu0
        %v846 = vpop.f32.mrf.mxu0
        %v847 = vadd.f32 0.0, %v846
        %v848 = vpop.f32.mrf.mxu0
        %849 = vmatprep.mubr.bf16.mxu0 %v646
        %850 = vmatmul.mubr.bf16.gmra.mxu0 %v645
        %v851 = vpop.f32.mrf.mxu0
        %v852 = vadd.f32 0.0, %v851
        %v853 = vpop.f32.mrf.mxu0
        %v854 = vpop.f32.mrf.mxu0
        %v855 = vadd.f32 0.0, %v854
        %v856 = vpop.f32.mrf.mxu0
        %857 = vmatprep.mubr.bf16.mxu0 %v648
        %858 = vmatmul.mubr.bf16.gmra.mxu0 %v647
        %v859 = vpop.f32.mrf.mxu0
        %v860 = vadd.f32 0.0, %v859
        %v861 = vpop.f32.mrf.mxu0
        %v862 = vpop.f32.mrf.mxu0
        %v863 = vadd.f32 0.0, %v862
        %v864 = vpop.f32.mrf.mxu0
        %865 = vmatprep.mubr.bf16.mxu0 %v650
        %866 = vmatmul.mubr.bf16.gmra.mxu0 %v649
        %v867 = vpop.f32.mrf.mxu0
        %v868 = vadd.f32 0.0, %v867
        %v869 = vpop.f32.mrf.mxu0
        %v870 = vpop.f32.mrf.mxu0
        %v871 = vadd.f32 0.0, %v870
        %v872 = vpop.f32.mrf.mxu0
        %873 = vmatprep.mubr.bf16.mxu0 %v652
        %874 = vmatmul.mubr.bf16.gmra.mxu0 %v651
        %v875 = vpop.f32.mrf.mxu0
        %v876 = vadd.f32 0.0, %v875
        %v877 = vpop.f32.mrf.mxu0
        %v878 = vpop.f32.mrf.mxu0
        %v879 = vadd.f32 0.0, %v878
        %v880 = vpop.f32.mrf.mxu0
        %881 = vmatprep.mubr.bf16.mxu0 %v654
        %882 = vmatmul.mubr.bf16.gmra.mxu0 %v653
        %v883 = vpop.f32.mrf.mxu0
        %v884 = vadd.f32 0.0, %v883
        %v885 = vpop.f32.mrf.mxu0
        %v886 = vpop.f32.mrf.mxu0
        %v887 = vadd.f32 0.0, %v886
        %v888 = vpop.f32.mrf.mxu0
        %889 = vmatprep.mubr.bf16.mxu0 %v656
        %890 = vmatmul.mubr.bf16.gmra.mxu0 %v655
        %v891 = vpop.f32.mrf.mxu0
        %v892 = vadd.f32 0.0, %v891
        %v893 = vpop.f32.mrf.mxu0
        %v894 = vpop.f32.mrf.mxu0
        %v895 = vadd.f32 0.0, %v894
        %v896 = vpop.f32.mrf.mxu0
        %897 = vmatprep.mubr.bf16.mxu0 %v658
        %898 = vmatmul.mubr.bf16.gmra.mxu0 %v657
        %v899 = vpop.f32.mrf.mxu0
        %v900 = vadd.f32 0.0, %v899
        %v901 = vpop.f32.mrf.mxu0
        %v902 = vpop.f32.mrf.mxu0
        %v903 = vadd.f32 0.0, %v902
        %v904 = vpop.f32.mrf.mxu0
        %905 = vmatprep.mubr.bf16.mxu0 %v660
        %906 = vmatmul.mubr.bf16.gmra.mxu0 %v659
        %v907 = vpop.f32.mrf.mxu0
        %v908 = vadd.f32 0.0, %v907
        %v909 = vpop.f32.mrf.mxu0
        %v910 = vpop.f32.mrf.mxu0
        %v911 = vadd.f32 0.0, %v910
        %v912 = vpop.f32.mrf.mxu0
        %913 = vmatprep.mubr.bf16.mxu0 %v662
        %914 = vmatmul.mubr.bf16.gmra.mxu0 %v661
        %v915 = vpop.f32.mrf.mxu0
        %v916 = vadd.f32 0.0, %v915
        %v917 = vpop.f32.mrf.mxu0
        %v918 = vpop.f32.mrf.mxu0
        %v919 = vadd.f32 0.0, %v918
        %v920 = vpop.f32.mrf.mxu0
        %921 = vmatprep.mubr.bf16.mxu0 %v664
        %922 = vmatmul.mubr.bf16.gmra.mxu0 %v663
        %v923 = vpop.f32.mrf.mxu0
        %v924 = vadd.f32 0.0, %v923
        %v925 = vpop.f32.mrf.mxu0
        %v926 = vpop.f32.mrf.mxu0
        %v927 = vadd.f32 0.0, %v926
        %v928 = vpop.f32.mrf.mxu0
        %929 = vmatprep.mubr.bf16.mxu0 %v666
        %930 = vmatmul.mubr.bf16.gmra.mxu0 %v665
        %v931 = vpop.f32.mrf.mxu0
        %v932 = vadd.f32 0.0, %v931
        %v933 = vpop.f32.mrf.mxu0
        %v934 = vpop.f32.mrf.mxu0
        %v935 = vadd.f32 0.0, %v934
        %v936 = vpop.f32.mrf.mxu0
        %937 = vmatprep.mubr.bf16.mxu0 %v668
        %938 = vmatmul.mubr.bf16.gmra.mxu0 %v667
        %v939 = vpop.f32.mrf.mxu0
        %v940 = vadd.f32 0.0, %v939
        %v941 = vpop.f32.mrf.mxu0
        %v942 = vpop.f32.mrf.mxu0
        %v943 = vadd.f32 0.0, %v942
        %v944 = vpop.f32.mrf.mxu0
        %945 = vmatprep.mubr.bf16.mxu0 %v670
        %946 = vmatmul.mubr.bf16.gmra.mxu0 %v669
        %v947 = vpop.f32.mrf.mxu0
        %v948 = vadd.f32 0.0, %v947
        %v949 = vpop.f32.mrf.mxu0
        %v950 = vpop.f32.mrf.mxu0
        %v951 = vadd.f32 0.0, %v950
        %v952 = vpop.f32.mrf.mxu0
        %953 = vmatprep.mubr.bf16.mxu0 %v672
        %954 = vmatmul.mubr.bf16.gmra.mxu0 %v671
        %v955 = vpop.f32.mrf.mxu0
        %v956 = vadd.f32 0.0, %v955
        %v957 = vpop.f32.mrf.mxu0
        %v958 = vpop.f32.mrf.mxu0
        %v959 = vadd.f32 0.0, %v958
        %v960 = vpop.f32.mrf.mxu0
        %961 = vdwg.mxu0
        %v962 = vadd.f32 %v445, %v836
        %v963 = vadd.f32 %v446, %v839
        %v964 = vadd.f32 %v447, %v844
        %v965 = vadd.f32 %v448, %v847
        %v966 = vadd.f32 %v449, %v852
        %v967 = vadd.f32 %v450, %v855
        %v968 = vadd.f32 %v451, %v860
        %v969 = vadd.f32 %v452, %v863
        %v970 = vadd.f32 %v453, %v868
        %v971 = vadd.f32 %v454, %v871
        %v972 = vadd.f32 %v455, %v876
        %v973 = vadd.f32 %v456, %v879
        %v974 = vadd.f32 %v457, %v884
        %v975 = vadd.f32 %v458, %v887
        %v976 = vadd.f32 %v459, %v892
        %v977 = vadd.f32 %v460, %v895
        %v978 = vadd.f32 %v461, %v900
        %v979 = vadd.f32 %v462, %v903
        %v980 = vadd.f32 %v463, %v908
        %v981 = vadd.f32 %v464, %v911
        %v982 = vadd.f32 %v465, %v916
        %v983 = vadd.f32 %v466, %v919
        %v984 = vadd.f32 %v467, %v924
        %v985 = vadd.f32 %v468, %v927
        %v986 = vadd.f32 %v469, %v932
        %v987 = vadd.f32 %v470, %v935
        %v988 = vadd.f32 %v471, %v940
        %v989 = vadd.f32 %v472, %v943
        %v990 = vadd.f32 %v473, %v948
        %v991 = vadd.f32 %v474, %v951
        %v992 = vadd.f32 %v475, %v956
        %v993 = vadd.f32 %v476, %v959
        %994 = vst [vmem:[#allocation2] sm:$0xff] %v962
        %995 = vst [vmem:[#allocation2 + $0x8] sm:$0xff] %v963
        %996 = vst [vmem:[#allocation2 + $0x10] sm:$0xff] %v964
        %997 = vst [vmem:[#allocation2 + $0x18] sm:$0xff] %v965
        %998 = vst [vmem:[#allocation2 + $0x20] sm:$0xff] %v966
        %999 = vst [vmem:[#allocation2 + $0x28] sm:$0xff] %v967
        %1000 = vst [vmem:[#allocation2 + $0x30] sm:$0xff] %v968
        %1001 = vst [vmem:[#allocation2 + $0x38] sm:$0xff] %v969
        %1002 = vst [vmem:[#allocation2 + $0x40] sm:$0xff] %v970
        %1003 = vst [vmem:[#allocation2 + $0x48] sm:$0xff] %v971
        %1004 = vst [vmem:[#allocation2 + $0x50] sm:$0xff] %v972
        %1005 = vst [vmem:[#allocation2 + $0x58] sm:$0xff] %v973
        %1006 = vst [vmem:[#allocation2 + $0x60] sm:$0xff] %v974
        %1007 = vst [vmem:[#allocation2 + $0x68] sm:$0xff] %v975
        %1008 = vst [vmem:[#allocation2 + $0x70] sm:$0xff] %v976
        %1009 = vst [vmem:[#allocation2 + $0x78] sm:$0xff] %v977
        %1010 = vst [vmem:[#allocation2 + $0x80] sm:$0xff] %v978
        %1011 = vst [vmem:[#allocation2 + $0x88] sm:$0xff] %v979
        %1012 = vst [vmem:[#allocation2 + $0x90] sm:$0xff] %v980
        %1013 = vst [vmem:[#allocation2 + $0x98] sm:$0xff] %v981
        %1014 = vst [vmem:[#allocation2 + $0xa0] sm:$0xff] %v982
        %1015 = vst [vmem:[#allocation2 + $0xa8] sm:$0xff] %v983
        %1016 = vst [vmem:[#allocation2 + $0xb0] sm:$0xff] %v984
        %1017 = vst [vmem:[#allocation2 + $0xb8] sm:$0xff] %v985
        %1018 = vst [vmem:[#allocation2 + $0xc0] sm:$0xff] %v986
        %1019 = vst [vmem:[#allocation2 + $0xc8] sm:$0xff] %v987
        %1020 = vst [vmem:[#allocation2 + $0xd0] sm:$0xff] %v988
        %1021 = vst [vmem:[#allocation2 + $0xd8] sm:$0xff] %v989
        %1022 = vst [vmem:[#allocation2 + $0xe0] sm:$0xff] %v990
        %1023 = vst [vmem:[#allocation2 + $0xe8] sm:$0xff] %v991
        %1024 = vst [vmem:[#allocation2 + $0xf0] sm:$0xff] %v992
        %1025 = vst [vmem:[#allocation2 + $0xf8] sm:$0xff] %v993
        %p1026 = scmp.eq.s32.totalorder %s21, 1
        // Predicated region
        $region83: #{graphsage_forward.2} parent=73 // pred_check
          %p1027 = pneg %p1026
        $region84: #{graphsage_forward.2} parent=73 // pred_check_branch
          %1029 = sbr.rel (%p1027) target = $region86
        $region85: #{graphsage_forward.2} parent=73 // pred_region
          %v1030 = vld [vmem:[#allocation2] sm:$0xff]
          %v1031 = vld [vmem:[#allocation2 + $0x8] sm:$0xff]
          %v1032 = vld [vmem:[#allocation2 + $0x10] sm:$0xff]
          %v1033 = vld [vmem:[#allocation2 + $0x18] sm:$0xff]
          %v1034 = vld [vmem:[#allocation2 + $0x20] sm:$0xff]
          %v1035 = vld [vmem:[#allocation2 + $0x28] sm:$0xff]
          %v1036 = vld [vmem:[#allocation2 + $0x30] sm:$0xff]
          %v1037 = vld [vmem:[#allocation2 + $0x38] sm:$0xff]
          %v1038 = vld [vmem:[#allocation2 + $0x40] sm:$0xff]
          %v1039 = vld [vmem:[#allocation2 + $0x48] sm:$0xff]
          %v1040 = vld [vmem:[#allocation2 + $0x50] sm:$0xff]
          %v1041 = vld [vmem:[#allocation2 + $0x58] sm:$0xff]
          %v1042 = vld [vmem:[#allocation2 + $0x60] sm:$0xff]
          %v1043 = vld [vmem:[#allocation2 + $0x68] sm:$0xff]
          %v1044 = vld [vmem:[#allocation2 + $0x70] sm:$0xff]
          %v1045 = vld [vmem:[#allocation2 + $0x78] sm:$0xff]
          %v1046 = vld [vmem:[#allocation2 + $0x80] sm:$0xff]
          %v1047 = vld [vmem:[#allocation2 + $0x88] sm:$0xff]
          %v1048 = vld [vmem:[#allocation2 + $0x90] sm:$0xff]
          %v1049 = vld [vmem:[#allocation2 + $0x98] sm:$0xff]
          %v1050 = vld [vmem:[#allocation2 + $0xa0] sm:$0xff]
          %v1051 = vld [vmem:[#allocation2 + $0xa8] sm:$0xff]
          %v1052 = vld [vmem:[#allocation2 + $0xb0] sm:$0xff]
          %v1053 = vld [vmem:[#allocation2 + $0xb8] sm:$0xff]
          %v1054 = vld [vmem:[#allocation2 + $0xc0] sm:$0xff]
          %v1055 = vld [vmem:[#allocation2 + $0xc8] sm:$0xff]
          %v1056 = vld [vmem:[#allocation2 + $0xd0] sm:$0xff]
          %v1057 = vld [vmem:[#allocation2 + $0xd8] sm:$0xff]
          %v1058 = vld [vmem:[#allocation2 + $0xe0] sm:$0xff]
          %v1059 = vld [vmem:[#allocation2 + $0xe8] sm:$0xff]
          %v1060 = vld [vmem:[#allocation2 + $0xf0] sm:$0xff]
          %v1061 = vld [vmem:[#allocation2 + $0xf8] sm:$0xff]
          %v1062 = vpack.c.bf16 %v1031, %v1030
          %v1063 = vpack.c.bf16 %v1033, %v1032
          %v1064 = vpack.c.bf16 %v1035, %v1034
          %v1065 = vpack.c.bf16 %v1037, %v1036
          %v1066 = vpack.c.bf16 %v1039, %v1038
          %v1067 = vpack.c.bf16 %v1041, %v1040
          %v1068 = vpack.c.bf16 %v1043, %v1042
          %v1069 = vpack.c.bf16 %v1045, %v1044
          %v1070 = vpack.c.bf16 %v1047, %v1046
          %v1071 = vpack.c.bf16 %v1049, %v1048
          %v1072 = vpack.c.bf16 %v1051, %v1050
          %v1073 = vpack.c.bf16 %v1053, %v1052
          %v1074 = vpack.c.bf16 %v1055, %v1054
          %v1075 = vpack.c.bf16 %v1057, %v1056
          %v1076 = vpack.c.bf16 %v1059, %v1058
          %v1077 = vpack.c.bf16 %v1061, %v1060
          %v1078 = vld [vmem:[%s2] sm:$0xff]
          %v1079 = vld [vmem:[%s2 + $0x8] sm:$0xff]
          %v1080 = vld [vmem:[%s2 + $0x10] sm:$0xff]
          %v1081 = vld [vmem:[%s2 + $0x18] sm:$0xff]
          %v1082 = vld [vmem:[%s2 + $0x20] sm:$0xff]
          %v1083 = vld [vmem:[%s2 + $0x28] sm:$0xff]
          %v1084 = vld [vmem:[%s2 + $0x30] sm:$0xff]
          %v1085 = vld [vmem:[%s2 + $0x38] sm:$0xff]
          %v1086 = vld [vmem:[%s2 + $0x40] sm:$0xff]
          %v1087 = vld [vmem:[%s2 + $0x48] sm:$0xff]
          %v1088 = vld [vmem:[%s2 + $0x50] sm:$0xff]
          %v1089 = vld [vmem:[%s2 + $0x58] sm:$0xff]
          %v1090 = vld [vmem:[%s2 + $0x60] sm:$0xff]
          %v1091 = vld [vmem:[%s2 + $0x68] sm:$0xff]
          %v1092 = vld [vmem:[%s2 + $0x70] sm:$0xff]
          %v1093 = vld [vmem:[%s2 + $0x78] sm:$0xff]
          %s1094 = smul.u32 %s20, 256
          %s1095 = sshra.s32 %s1094, 3
          %s1096 = sand.u32 %s1094, 7
          %s1097 = smul.addr %s1095, 4
          %s1098 = scalar_lea.vmem %s1, %s1097
          %v1099 = vld [vmem:[%s1098] sm:$0xf]
          %v1100 = vld [vmem:[%s1098 + $0x4] sm:$0xf]
          %v1101 = vld [vmem:[%s1098 + $0x8] sm:$0xf]
          %v1102 = vld [vmem:[%s1098 + $0xc] sm:$0xf]
          %v1103 = vld [vmem:[%s1098 + $0x10] sm:$0xf]
          %v1104 = vld [vmem:[%s1098 + $0x14] sm:$0xf]
          %v1105 = vld [vmem:[%s1098 + $0x18] sm:$0xf]
          %v1106 = vld [vmem:[%s1098 + $0x1c] sm:$0xf]
          %v1107 = vld [vmem:[%s1098 + $0x20] sm:$0xf]
          %v1108 = vld [vmem:[%s1098 + $0x24] sm:$0xf]
          %v1109 = vld [vmem:[%s1098 + $0x28] sm:$0xf]
          %v1110 = vld [vmem:[%s1098 + $0x2c] sm:$0xf]
          %v1111 = vld [vmem:[%s1098 + $0x30] sm:$0xf]
          %v1112 = vld [vmem:[%s1098 + $0x34] sm:$0xf]
          %v1113 = vld [vmem:[%s1098 + $0x38] sm:$0xf]
          %v1114 = vld [vmem:[%s1098 + $0x3c] sm:$0xf]
          %v1115 = vld [vmem:[%s1098 + $0x40] sm:$0xf]
          %v1116 = vld [vmem:[%s1098 + $0x44] sm:$0xf]
          %v1117 = vld [vmem:[%s1098 + $0x48] sm:$0xf]
          %v1118 = vld [vmem:[%s1098 + $0x4c] sm:$0xf]
          %v1119 = vld [vmem:[%s1098 + $0x50] sm:$0xf]
          %v1120 = vld [vmem:[%s1098 + $0x54] sm:$0xf]
          %v1121 = vld [vmem:[%s1098 + $0x58] sm:$0xf]
          %v1122 = vld [vmem:[%s1098 + $0x5c] sm:$0xf]
          %v1123 = vld [vmem:[%s1098 + $0x60] sm:$0xf]
          %v1124 = vld [vmem:[%s1098 + $0x64] sm:$0xf]
          %v1125 = vld [vmem:[%s1098 + $0x68] sm:$0xf]
          %v1126 = vld [vmem:[%s1098 + $0x6c] sm:$0xf]
          %v1127 = vld [vmem:[%s1098 + $0x70] sm:$0xf]
          %v1128 = vld [vmem:[%s1098 + $0x74] sm:$0xf]
          %v1129 = vld [vmem:[%s1098 + $0x78] sm:$0xf]
          %v1130 = vld [vmem:[%s1098 + $0x7c] sm:$0xf]
          %v1131 = vld [vmem:[%s3] sm:$0xff]
          %v1132 = vld [vmem:[%s3 + $0x8] sm:$0xff]
          %v1133 = vld [vmem:[%s3 + $0x10] sm:$0xff]
          %v1134 = vld [vmem:[%s3 + $0x18] sm:$0xff]
          %v1135 = vld [vmem:[%s3 + $0x20] sm:$0xff]
          %v1136 = vld [vmem:[%s3 + $0x28] sm:$0xff]
          %v1137 = vld [vmem:[%s3 + $0x30] sm:$0xff]
          %v1138 = vld [vmem:[%s3 + $0x38] sm:$0xff]
          %v1139 = vld [vmem:[%s3 + $0x40] sm:$0xff]
          %v1140 = vld [vmem:[%s3 + $0x48] sm:$0xff]
          %v1141 = vld [vmem:[%s3 + $0x50] sm:$0xff]
          %v1142 = vld [vmem:[%s3 + $0x58] sm:$0xff]
          %v1143 = vld [vmem:[%s3 + $0x60] sm:$0xff]
          %v1144 = vld [vmem:[%s3 + $0x68] sm:$0xff]
          %v1145 = vld [vmem:[%s3 + $0x70] sm:$0xff]
          %v1146 = vld [vmem:[%s3 + $0x78] sm:$0xff]
          %v1179 = vunpack.c.l.b16 %v1099
          %v1180 = vunpack.c.l.b16 %v1100
          %v1181 = vunpack.c.l.b16 %v1101
          %v1182 = vunpack.c.l.b16 %v1102
          %v1183 = vunpack.c.l.b16 %v1103
          %v1184 = vunpack.c.l.b16 %v1104
          %v1185 = vunpack.c.l.b16 %v1105
          %v1186 = vunpack.c.l.b16 %v1106
          %v1187 = vunpack.c.l.b16 %v1107
          %v1188 = vunpack.c.l.b16 %v1108
          %v1189 = vunpack.c.l.b16 %v1109
          %v1190 = vunpack.c.l.b16 %v1110
          %v1191 = vunpack.c.l.b16 %v1111
          %v1192 = vunpack.c.l.b16 %v1112
          %v1193 = vunpack.c.l.b16 %v1113
          %v1194 = vunpack.c.l.b16 %v1114
          %v1195 = vunpack.c.l.b16 %v1115
          %v1196 = vunpack.c.l.b16 %v1116
          %v1197 = vunpack.c.l.b16 %v1117
          %v1198 = vunpack.c.l.b16 %v1118
          %v1199 = vunpack.c.l.b16 %v1119
          %v1200 = vunpack.c.l.b16 %v1120
          %v1201 = vunpack.c.l.b16 %v1121
          %v1202 = vunpack.c.l.b16 %v1122
          %v1203 = vunpack.c.l.b16 %v1123
          %v1204 = vunpack.c.l.b16 %v1124
          %v1205 = vunpack.c.l.b16 %v1125
          %v1206 = vunpack.c.l.b16 %v1126
          %v1207 = vunpack.c.l.b16 %v1127
          %v1208 = vunpack.c.l.b16 %v1128
          %v1209 = vunpack.c.l.b16 %v1129
          %v1210 = vunpack.c.l.b16 %v1130
          %v1211 = vpack.c.b16 %v1180, %v1179
          %v1212 = vpack.c.b16 %v1182, %v1181
          %v1213 = vpack.c.b16 %v1184, %v1183
          %v1214 = vpack.c.b16 %v1186, %v1185
          %v1215 = vpack.c.b16 %v1188, %v1187
          %v1216 = vpack.c.b16 %v1190, %v1189
          %v1217 = vpack.c.b16 %v1192, %v1191
          %v1218 = vpack.c.b16 %v1194, %v1193
          %v1219 = vpack.c.b16 %v1196, %v1195
          %v1220 = vpack.c.b16 %v1198, %v1197
          %v1221 = vpack.c.b16 %v1200, %v1199
          %v1222 = vpack.c.b16 %v1202, %v1201
          %v1223 = vpack.c.b16 %v1204, %v1203
          %v1224 = vpack.c.b16 %v1206, %v1205
          %v1225 = vpack.c.b16 %v1208, %v1207
          %v1226 = vpack.c.b16 %v1210, %v1209
          %v1259 = vunpack.c.l.b16 %v1131
          %v1260 = vunpack.c.h.b16 %v1131
          %v1261 = vunpack.c.l.b16 %v1132
          %v1262 = vunpack.c.h.b16 %v1132
          %v1263 = vunpack.c.l.b16 %v1133
          %v1264 = vunpack.c.h.b16 %v1133
          %v1265 = vunpack.c.l.b16 %v1134
          %v1266 = vunpack.c.h.b16 %v1134
          %v1267 = vunpack.c.l.b16 %v1135
          %v1268 = vunpack.c.h.b16 %v1135
          %v1269 = vunpack.c.l.b16 %v1136
          %v1270 = vunpack.c.h.b16 %v1136
          %v1271 = vunpack.c.l.b16 %v1137
          %v1272 = vunpack.c.h.b16 %v1137
          %v1273 = vunpack.c.l.b16 %v1138
          %v1274 = vunpack.c.h.b16 %v1138
          %v1275 = vunpack.c.l.b16 %v1139
          %v1276 = vunpack.c.h.b16 %v1139
          %v1277 = vunpack.c.l.b16 %v1140
          %v1278 = vunpack.c.h.b16 %v1140
          %v1279 = vunpack.c.l.b16 %v1141
          %v1280 = vunpack.c.h.b16 %v1141
          %v1281 = vunpack.c.l.b16 %v1142
          %v1282 = vunpack.c.h.b16 %v1142
          %v1283 = vunpack.c.l.b16 %v1143
          %v1284 = vunpack.c.h.b16 %v1143
          %v1285 = vunpack.c.l.b16 %v1144
          %v1286 = vunpack.c.h.b16 %v1144
          %v1287 = vunpack.c.l.b16 %v1145
          %v1288 = vunpack.c.h.b16 %v1145
          %v1289 = vunpack.c.l.b16 %v1146
          %v1290 = vunpack.c.h.b16 %v1146
          %v1291 = vpack.c.b16 %v1261, %v1259
          %v1292 = vpack.c.b16 %v1262, %v1260
          %v1293 = vpack.c.b16 %v1265, %v1263
          %v1294 = vpack.c.b16 %v1266, %v1264
          %v1295 = vpack.c.b16 %v1269, %v1267
          %v1296 = vpack.c.b16 %v1270, %v1268
          %v1297 = vpack.c.b16 %v1273, %v1271
          %v1298 = vpack.c.b16 %v1274, %v1272
          %v1299 = vpack.c.b16 %v1277, %v1275
          %v1300 = vpack.c.b16 %v1278, %v1276
          %v1301 = vpack.c.b16 %v1281, %v1279
          %v1302 = vpack.c.b16 %v1282, %v1280
          %v1303 = vpack.c.b16 %v1285, %v1283
          %v1304 = vpack.c.b16 %v1286, %v1284
          %v1305 = vpack.c.b16 %v1289, %v1287
          %v1306 = vpack.c.b16 %v1290, %v1288
          %1323 = vmatprep.subr.bf16.mxu0 %v1306
          %1324 = vmatpush1.bf16.msra.mxu0 %v1305
          %1325 = vmatprep.subr.bf16.mxu0 %v1304
          %1326 = vmatpush1.bf16.msra.mxu0 %v1303
          %1327 = vmatprep.subr.bf16.mxu0 %v1302
          %1328 = vmatpush1.bf16.msra.mxu0 %v1301
          %1329 = vmatprep.subr.bf16.mxu0 %v1300
          %1330 = vmatpush1.bf16.msra.mxu0 %v1299
          %1331 = vmatprep.subr.bf16.mxu0 %v1298
          %1332 = vmatpush1.bf16.msra.mxu0 %v1297
          %1333 = vmatprep.subr.bf16.mxu0 %v1296
          %1334 = vmatpush1.bf16.msra.mxu0 %v1295
          %1335 = vmatprep.subr.bf16.mxu0 %v1294
          %1336 = vmatpush1.bf16.msra.mxu0 %v1293
          %1337 = vmatprep.subr.bf16.mxu0 %v1292
          %1338 = vmatpush1.bf16.msra.mxu0 %v1291
          %1339 = vmatprep.subr.bf16.mxu0 0
          %1340 = vmatpush2.bf16.msra.mxu0 0
          %1341 = vmatprep.subr.bf16.mxu0 0
          %1342 = vmatpush2.bf16.msra.mxu0 0
          %1343 = vmatprep.subr.bf16.mxu0 0
          %1344 = vmatpush2.bf16.msra.mxu0 0
          %1345 = vmatprep.subr.bf16.mxu0 0
          %1346 = vmatpush2.bf16.msra.mxu0 0
          %1347 = vmatprep.subr.bf16.mxu0 0
          %1348 = vmatpush2.bf16.msra.mxu0 0
          %1349 = vmatprep.subr.bf16.mxu0 0
          %1350 = vmatpush2.bf16.msra.mxu0 0
          %1351 = vmatprep.subr.bf16.mxu0 0
          %1352 = vmatpush2.bf16.msra.mxu0 0
          %1353 = vmatprep.subr.bf16.mxu0 0
          %1354 = vmatpush2.bf16.msra.mxu0 0
          %1355 = vmatprep.mubr.bf16.mxu0 0
          %1356 = vmatmul.mubr.bf16.gmra.mxu0 %v1211
          %v1357 = vpop.f32.mrf.mxu0
          %v1358 = vadd.f32 0.0, %v1357
          %v1359 = vpop.f32.mrf.mxu0
          %v1360 = vadd.f32 0.0, %v1359
          %v1361 = vpop.f32.mrf.mxu0
          %v1362 = vadd.f32 0.0, %v1361
          %v1363 = vpop.f32.mrf.mxu0
          %v1364 = vadd.f32 0.0, %v1363
          %1365 = vmatprep.mubr.bf16.mxu0 0
          %1366 = vmatmul.mubr.bf16.gmra.mxu0 %v1212
          %v1367 = vpop.f32.mrf.mxu0
          %v1368 = vadd.f32 0.0, %v1367
          %v1369 = vpop.f32.mrf.mxu0
          %v1370 = vadd.f32 0.0, %v1369
          %v1371 = vpop.f32.mrf.mxu0
          %v1372 = vadd.f32 0.0, %v1371
          %v1373 = vpop.f32.mrf.mxu0
          %v1374 = vadd.f32 0.0, %v1373
          %1375 = vmatprep.mubr.bf16.mxu0 0
          %1376 = vmatmul.mubr.bf16.gmra.mxu0 %v1213
          %v1377 = vpop.f32.mrf.mxu0
          %v1378 = vadd.f32 0.0, %v1377
          %v1379 = vpop.f32.mrf.mxu0
          %v1380 = vadd.f32 0.0, %v1379
          %v1381 = vpop.f32.mrf.mxu0
          %v1382 = vadd.f32 0.0, %v1381
          %v1383 = vpop.f32.mrf.mxu0
          %v1384 = vadd.f32 0.0, %v1383
          %1385 = vmatprep.mubr.bf16.mxu0 0
          %1386 = vmatmul.mubr.bf16.gmra.mxu0 %v1214
          %v1387 = vpop.f32.mrf.mxu0
          %v1388 = vadd.f32 0.0, %v1387
          %v1389 = vpop.f32.mrf.mxu0
          %v1390 = vadd.f32 0.0, %v1389
          %v1391 = vpop.f32.mrf.mxu0
          %v1392 = vadd.f32 0.0, %v1391
          %v1393 = vpop.f32.mrf.mxu0
          %v1394 = vadd.f32 0.0, %v1393
          %1395 = vmatprep.mubr.bf16.mxu0 0
          %1396 = vmatmul.mubr.bf16.gmra.mxu0 %v1215
          %v1397 = vpop.f32.mrf.mxu0
          %v1398 = vadd.f32 0.0, %v1397
          %v1399 = vpop.f32.mrf.mxu0
          %v1400 = vadd.f32 0.0, %v1399
          %v1401 = vpop.f32.mrf.mxu0
          %v1402 = vadd.f32 0.0, %v1401
          %v1403 = vpop.f32.mrf.mxu0
          %v1404 = vadd.f32 0.0, %v1403
          %1405 = vmatprep.mubr.bf16.mxu0 0
          %1406 = vmatmul.mubr.bf16.gmra.mxu0 %v1216
          %v1407 = vpop.f32.mrf.mxu0
          %v1408 = vadd.f32 0.0, %v1407
          %v1409 = vpop.f32.mrf.mxu0
          %v1410 = vadd.f32 0.0, %v1409
          %v1411 = vpop.f32.mrf.mxu0
          %v1412 = vadd.f32 0.0, %v1411
          %v1413 = vpop.f32.mrf.mxu0
          %v1414 = vadd.f32 0.0, %v1413
          %1415 = vmatprep.mubr.bf16.mxu0 0
          %1416 = vmatmul.mubr.bf16.gmra.mxu0 %v1217
          %v1417 = vpop.f32.mrf.mxu0
          %v1418 = vadd.f32 0.0, %v1417
          %v1419 = vpop.f32.mrf.mxu0
          %v1420 = vadd.f32 0.0, %v1419
          %v1421 = vpop.f32.mrf.mxu0
          %v1422 = vadd.f32 0.0, %v1421
          %v1423 = vpop.f32.mrf.mxu0
          %v1424 = vadd.f32 0.0, %v1423
          %1425 = vmatprep.mubr.bf16.mxu0 0
          %1426 = vmatmul.mubr.bf16.gmra.mxu0 %v1218
          %v1427 = vpop.f32.mrf.mxu0
          %v1428 = vadd.f32 0.0, %v1427
          %v1429 = vpop.f32.mrf.mxu0
          %v1430 = vadd.f32 0.0, %v1429
          %v1431 = vpop.f32.mrf.mxu0
          %v1432 = vadd.f32 0.0, %v1431
          %v1433 = vpop.f32.mrf.mxu0
          %v1434 = vadd.f32 0.0, %v1433
          %1435 = vmatprep.mubr.bf16.mxu0 0
          %1436 = vmatmul.mubr.bf16.gmra.mxu0 %v1219
          %v1437 = vpop.f32.mrf.mxu0
          %v1438 = vadd.f32 0.0, %v1437
          %v1439 = vpop.f32.mrf.mxu0
          %v1440 = vadd.f32 0.0, %v1439
          %v1441 = vpop.f32.mrf.mxu0
          %v1442 = vadd.f32 0.0, %v1441
          %v1443 = vpop.f32.mrf.mxu0
          %v1444 = vadd.f32 0.0, %v1443
          %1445 = vmatprep.mubr.bf16.mxu0 0
          %1446 = vmatmul.mubr.bf16.gmra.mxu0 %v1220
          %v1447 = vpop.f32.mrf.mxu0
          %v1448 = vadd.f32 0.0, %v1447
          %v1449 = vpop.f32.mrf.mxu0
          %v1450 = vadd.f32 0.0, %v1449
          %v1451 = vpop.f32.mrf.mxu0
          %v1452 = vadd.f32 0.0, %v1451
          %v1453 = vpop.f32.mrf.mxu0
          %v1454 = vadd.f32 0.0, %v1453
          %1455 = vmatprep.mubr.bf16.mxu0 0
          %1456 = vmatmul.mubr.bf16.gmra.mxu0 %v1221
          %v1457 = vpop.f32.mrf.mxu0
          %v1458 = vadd.f32 0.0, %v1457
          %v1459 = vpop.f32.mrf.mxu0
          %v1460 = vadd.f32 0.0, %v1459
          %v1461 = vpop.f32.mrf.mxu0
          %v1462 = vadd.f32 0.0, %v1461
          %v1463 = vpop.f32.mrf.mxu0
          %v1464 = vadd.f32 0.0, %v1463
          %1465 = vmatprep.mubr.bf16.mxu0 0
          %1466 = vmatmul.mubr.bf16.gmra.mxu0 %v1222
          %v1467 = vpop.f32.mrf.mxu0
          %v1468 = vadd.f32 0.0, %v1467
          %v1469 = vpop.f32.mrf.mxu0
          %v1470 = vadd.f32 0.0, %v1469
          %v1471 = vpop.f32.mrf.mxu0
          %v1472 = vadd.f32 0.0, %v1471
          %v1473 = vpop.f32.mrf.mxu0
          %v1474 = vadd.f32 0.0, %v1473
          %1475 = vmatprep.mubr.bf16.mxu0 0
          %1476 = vmatmul.mubr.bf16.gmra.mxu0 %v1223
          %v1477 = vpop.f32.mrf.mxu0
          %v1478 = vadd.f32 0.0, %v1477
          %v1479 = vpop.f32.mrf.mxu0
          %v1480 = vadd.f32 0.0, %v1479
          %v1481 = vpop.f32.mrf.mxu0
          %v1482 = vadd.f32 0.0, %v1481
          %v1483 = vpop.f32.mrf.mxu0
          %v1484 = vadd.f32 0.0, %v1483
          %1485 = vmatprep.mubr.bf16.mxu0 0
          %1486 = vmatmul.mubr.bf16.gmra.mxu0 %v1224
          %v1487 = vpop.f32.mrf.mxu0
          %v1488 = vadd.f32 0.0, %v1487
          %v1489 = vpop.f32.mrf.mxu0
          %v1490 = vadd.f32 0.0, %v1489
          %v1491 = vpop.f32.mrf.mxu0
          %v1492 = vadd.f32 0.0, %v1491
          %v1493 = vpop.f32.mrf.mxu0
          %v1494 = vadd.f32 0.0, %v1493
          %1495 = vmatprep.mubr.bf16.mxu0 0
          %1496 = vmatmul.mubr.bf16.gmra.mxu0 %v1225
          %v1497 = vpop.f32.mrf.mxu0
          %v1498 = vadd.f32 0.0, %v1497
          %v1499 = vpop.f32.mrf.mxu0
          %v1500 = vadd.f32 0.0, %v1499
          %v1501 = vpop.f32.mrf.mxu0
          %v1502 = vadd.f32 0.0, %v1501
          %v1503 = vpop.f32.mrf.mxu0
          %v1504 = vadd.f32 0.0, %v1503
          %1505 = vmatprep.mubr.bf16.mxu0 0
          %1506 = vmatmul.mubr.bf16.gmra.mxu0 %v1226
          %v1507 = vpop.f32.mrf.mxu0
          %v1508 = vadd.f32 0.0, %v1507
          %v1509 = vpop.f32.mrf.mxu0
          %v1510 = vadd.f32 0.0, %v1509
          %v1511 = vpop.f32.mrf.mxu0
          %v1512 = vadd.f32 0.0, %v1511
          %v1513 = vpop.f32.mrf.mxu0
          %v1514 = vadd.f32 0.0, %v1513
          %1515 = vdwg.mxu0
          %v1532 = vunpack.c.l.b16 %v1078
          %v1533 = vunpack.c.h.b16 %v1078
          %v1534 = vunpack.c.l.b16 %v1079
          %v1535 = vunpack.c.h.b16 %v1079
          %v1536 = vunpack.c.l.b16 %v1080
          %v1537 = vunpack.c.h.b16 %v1080
          %v1538 = vunpack.c.l.b16 %v1081
          %v1539 = vunpack.c.h.b16 %v1081
          %v1540 = vunpack.c.l.b16 %v1082
          %v1541 = vunpack.c.h.b16 %v1082
          %v1542 = vunpack.c.l.b16 %v1083
          %v1543 = vunpack.c.h.b16 %v1083
          %v1544 = vunpack.c.l.b16 %v1084
          %v1545 = vunpack.c.h.b16 %v1084
          %v1546 = vunpack.c.l.b16 %v1085
          %v1547 = vunpack.c.h.b16 %v1085
          %v1548 = vunpack.c.l.b16 %v1086
          %v1549 = vunpack.c.h.b16 %v1086
          %v1550 = vunpack.c.l.b16 %v1087
          %v1551 = vunpack.c.h.b16 %v1087
          %v1552 = vunpack.c.l.b16 %v1088
          %v1553 = vunpack.c.h.b16 %v1088
          %v1554 = vunpack.c.l.b16 %v1089
          %v1555 = vunpack.c.h.b16 %v1089
          %v1556 = vunpack.c.l.b16 %v1090
          %v1557 = vunpack.c.h.b16 %v1090
          %v1558 = vunpack.c.l.b16 %v1091
          %v1559 = vunpack.c.h.b16 %v1091
          %v1560 = vunpack.c.l.b16 %v1092
          %v1561 = vunpack.c.h.b16 %v1092
          %v1562 = vunpack.c.l.b16 %v1093
          %v1563 = vunpack.c.h.b16 %v1093
          %v1564 = vpack.c.b16 %v1534, %v1532
          %v1565 = vpack.c.b16 %v1535, %v1533
          %v1566 = vpack.c.b16 %v1538, %v1536
          %v1567 = vpack.c.b16 %v1539, %v1537
          %v1568 = vpack.c.b16 %v1542, %v1540
          %v1569 = vpack.c.b16 %v1543, %v1541
          %v1570 = vpack.c.b16 %v1546, %v1544
          %v1571 = vpack.c.b16 %v1547, %v1545
          %v1572 = vpack.c.b16 %v1550, %v1548
          %v1573 = vpack.c.b16 %v1551, %v1549
          %v1574 = vpack.c.b16 %v1554, %v1552
          %v1575 = vpack.c.b16 %v1555, %v1553
          %v1576 = vpack.c.b16 %v1558, %v1556
          %v1577 = vpack.c.b16 %v1559, %v1557
          %v1578 = vpack.c.b16 %v1562, %v1560
          %v1579 = vpack.c.b16 %v1563, %v1561
          %1596 = vmatprep.subr.bf16.mxu0 %v1579
          %1597 = vmatpush1.bf16.msra.mxu0 %v1578
          %1598 = vmatprep.subr.bf16.mxu0 %v1577
          %1599 = vmatpush1.bf16.msra.mxu0 %v1576
          %1600 = vmatprep.subr.bf16.mxu0 %v1575
          %1601 = vmatpush1.bf16.msra.mxu0 %v1574
          %1602 = vmatprep.subr.bf16.mxu0 %v1573
          %1603 = vmatpush1.bf16.msra.mxu0 %v1572
          %1604 = vmatprep.subr.bf16.mxu0 %v1571
          %1605 = vmatpush1.bf16.msra.mxu0 %v1570
          %1606 = vmatprep.subr.bf16.mxu0 %v1569
          %1607 = vmatpush1.bf16.msra.mxu0 %v1568
          %1608 = vmatprep.subr.bf16.mxu0 %v1567
          %1609 = vmatpush1.bf16.msra.mxu0 %v1566
          %1610 = vmatprep.subr.bf16.mxu0 %v1565
          %1611 = vmatpush1.bf16.msra.mxu0 %v1564
          %1612 = vmatprep.subr.bf16.mxu0 0
          %1613 = vmatpush2.bf16.msra.mxu0 0
          %1614 = vmatprep.subr.bf16.mxu0 0
          %1615 = vmatpush2.bf16.msra.mxu0 0
          %1616 = vmatprep.subr.bf16.mxu0 0
          %1617 = vmatpush2.bf16.msra.mxu0 0
          %1618 = vmatprep.subr.bf16.mxu0 0
          %1619 = vmatpush2.bf16.msra.mxu0 0
          %1620 = vmatprep.subr.bf16.mxu0 0
          %1621 = vmatpush2.bf16.msra.mxu0 0
          %1622 = vmatprep.subr.bf16.mxu0 0
          %1623 = vmatpush2.bf16.msra.mxu0 0
          %1624 = vmatprep.subr.bf16.mxu0 0
          %1625 = vmatpush2.bf16.msra.mxu0 0
          %1626 = vmatprep.subr.bf16.mxu0 0
          %1627 = vmatpush2.bf16.msra.mxu0 0
          %1628 = vmatprep.mubr.bf16.mxu0 0
          %1629 = vmatmul.mubr.bf16.gmra.mxu0 %v1062
          %v1630 = vpop.f32.mrf.mxu0
          %v1631 = vadd.f32 %v1358, %v1630
          %v1632 = vpop.f32.mrf.mxu0
          %v1633 = vadd.f32 %v1360, %v1632
          %v1634 = vpop.f32.mrf.mxu0
          %v1635 = vadd.f32 %v1362, %v1634
          %v1636 = vpop.f32.mrf.mxu0
          %v1637 = vadd.f32 %v1364, %v1636
          %1638 = vmatprep.mubr.bf16.mxu0 0
          %1639 = vmatmul.mubr.bf16.gmra.mxu0 %v1063
          %v1640 = vpop.f32.mrf.mxu0
          %v1641 = vadd.f32 %v1368, %v1640
          %v1642 = vpop.f32.mrf.mxu0
          %v1643 = vadd.f32 %v1370, %v1642
          %v1644 = vpop.f32.mrf.mxu0
          %v1645 = vadd.f32 %v1372, %v1644
          %v1646 = vpop.f32.mrf.mxu0
          %v1647 = vadd.f32 %v1374, %v1646
          %1648 = vmatprep.mubr.bf16.mxu0 0
          %1649 = vmatmul.mubr.bf16.gmra.mxu0 %v1064
          %v1650 = vpop.f32.mrf.mxu0
          %v1651 = vadd.f32 %v1378, %v1650
          %v1652 = vpop.f32.mrf.mxu0
          %v1653 = vadd.f32 %v1380, %v1652
          %v1654 = vpop.f32.mrf.mxu0
          %v1655 = vadd.f32 %v1382, %v1654
          %v1656 = vpop.f32.mrf.mxu0
          %v1657 = vadd.f32 %v1384, %v1656
          %1658 = vmatprep.mubr.bf16.mxu0 0
          %1659 = vmatmul.mubr.bf16.gmra.mxu0 %v1065
          %v1660 = vpop.f32.mrf.mxu0
          %v1661 = vadd.f32 %v1388, %v1660
          %v1662 = vpop.f32.mrf.mxu0
          %v1663 = vadd.f32 %v1390, %v1662
          %v1664 = vpop.f32.mrf.mxu0
          %v1665 = vadd.f32 %v1392, %v1664
          %v1666 = vpop.f32.mrf.mxu0
          %v1667 = vadd.f32 %v1394, %v1666
          %1668 = vmatprep.mubr.bf16.mxu0 0
          %1669 = vmatmul.mubr.bf16.gmra.mxu0 %v1066
          %v1670 = vpop.f32.mrf.mxu0
          %v1671 = vadd.f32 %v1398, %v1670
          %v1672 = vpop.f32.mrf.mxu0
          %v1673 = vadd.f32 %v1400, %v1672
          %v1674 = vpop.f32.mrf.mxu0
          %v1675 = vadd.f32 %v1402, %v1674
          %v1676 = vpop.f32.mrf.mxu0
          %v1677 = vadd.f32 %v1404, %v1676
          %1678 = vmatprep.mubr.bf16.mxu0 0
          %1679 = vmatmul.mubr.bf16.gmra.mxu0 %v1067
          %v1680 = vpop.f32.mrf.mxu0
          %v1681 = vadd.f32 %v1408, %v1680
          %v1682 = vpop.f32.mrf.mxu0
          %v1683 = vadd.f32 %v1410, %v1682
          %v1684 = vpop.f32.mrf.mxu0
          %v1685 = vadd.f32 %v1412, %v1684
          %v1686 = vpop.f32.mrf.mxu0
          %v1687 = vadd.f32 %v1414, %v1686
          %1688 = vmatprep.mubr.bf16.mxu0 0
          %1689 = vmatmul.mubr.bf16.gmra.mxu0 %v1068
          %v1690 = vpop.f32.mrf.mxu0
          %v1691 = vadd.f32 %v1418, %v1690
          %v1692 = vpop.f32.mrf.mxu0
          %v1693 = vadd.f32 %v1420, %v1692
          %v1694 = vpop.f32.mrf.mxu0
          %v1695 = vadd.f32 %v1422, %v1694
          %v1696 = vpop.f32.mrf.mxu0
          %v1697 = vadd.f32 %v1424, %v1696
          %1698 = vmatprep.mubr.bf16.mxu0 0
          %1699 = vmatmul.mubr.bf16.gmra.mxu0 %v1069
          %v1700 = vpop.f32.mrf.mxu0
          %v1701 = vadd.f32 %v1428, %v1700
          %v1702 = vpop.f32.mrf.mxu0
          %v1703 = vadd.f32 %v1430, %v1702
          %v1704 = vpop.f32.mrf.mxu0
          %v1705 = vadd.f32 %v1432, %v1704
          %v1706 = vpop.f32.mrf.mxu0
          %v1707 = vadd.f32 %v1434, %v1706
          %1708 = vmatprep.mubr.bf16.mxu0 0
          %1709 = vmatmul.mubr.bf16.gmra.mxu0 %v1070
          %v1710 = vpop.f32.mrf.mxu0
          %v1711 = vadd.f32 %v1438, %v1710
          %v1712 = vpop.f32.mrf.mxu0
          %v1713 = vadd.f32 %v1440, %v1712
          %v1714 = vpop.f32.mrf.mxu0
          %v1715 = vadd.f32 %v1442, %v1714
          %v1716 = vpop.f32.mrf.mxu0
          %v1717 = vadd.f32 %v1444, %v1716
          %1718 = vmatprep.mubr.bf16.mxu0 0
          %1719 = vmatmul.mubr.bf16.gmra.mxu0 %v1071
          %v1720 = vpop.f32.mrf.mxu0
          %v1721 = vadd.f32 %v1448, %v1720
          %v1722 = vpop.f32.mrf.mxu0
          %v1723 = vadd.f32 %v1450, %v1722
          %v1724 = vpop.f32.mrf.mxu0
          %v1725 = vadd.f32 %v1452, %v1724
          %v1726 = vpop.f32.mrf.mxu0
          %v1727 = vadd.f32 %v1454, %v1726
          %1728 = vmatprep.mubr.bf16.mxu0 0
          %1729 = vmatmul.mubr.bf16.gmra.mxu0 %v1072
          %v1730 = vpop.f32.mrf.mxu0
          %v1731 = vadd.f32 %v1458, %v1730
          %v1732 = vpop.f32.mrf.mxu0
          %v1733 = vadd.f32 %v1460, %v1732
          %v1734 = vpop.f32.mrf.mxu0
          %v1735 = vadd.f32 %v1462, %v1734
          %v1736 = vpop.f32.mrf.mxu0
          %v1737 = vadd.f32 %v1464, %v1736
          %1738 = vmatprep.mubr.bf16.mxu0 0
          %1739 = vmatmul.mubr.bf16.gmra.mxu0 %v1073
          %v1740 = vpop.f32.mrf.mxu0
          %v1741 = vadd.f32 %v1468, %v1740
          %v1742 = vpop.f32.mrf.mxu0
          %v1743 = vadd.f32 %v1470, %v1742
          %v1744 = vpop.f32.mrf.mxu0
          %v1745 = vadd.f32 %v1472, %v1744
          %v1746 = vpop.f32.mrf.mxu0
          %v1747 = vadd.f32 %v1474, %v1746
          %1748 = vmatprep.mubr.bf16.mxu0 0
          %1749 = vmatmul.mubr.bf16.gmra.mxu0 %v1074
          %v1750 = vpop.f32.mrf.mxu0
          %v1751 = vadd.f32 %v1478, %v1750
          %v1752 = vpop.f32.mrf.mxu0
          %v1753 = vadd.f32 %v1480, %v1752
          %v1754 = vpop.f32.mrf.mxu0
          %v1755 = vadd.f32 %v1482, %v1754
          %v1756 = vpop.f32.mrf.mxu0
          %v1757 = vadd.f32 %v1484, %v1756
          %1758 = vmatprep.mubr.bf16.mxu0 0
          %1759 = vmatmul.mubr.bf16.gmra.mxu0 %v1075
          %v1760 = vpop.f32.mrf.mxu0
          %v1761 = vadd.f32 %v1488, %v1760
          %v1762 = vpop.f32.mrf.mxu0
          %v1763 = vadd.f32 %v1490, %v1762
          %v1764 = vpop.f32.mrf.mxu0
          %v1765 = vadd.f32 %v1492, %v1764
          %v1766 = vpop.f32.mrf.mxu0
          %v1767 = vadd.f32 %v1494, %v1766
          %1768 = vmatprep.mubr.bf16.mxu0 0
          %1769 = vmatmul.mubr.bf16.gmra.mxu0 %v1076
          %v1770 = vpop.f32.mrf.mxu0
          %v1771 = vadd.f32 %v1498, %v1770
          %v1772 = vpop.f32.mrf.mxu0
          %v1773 = vadd.f32 %v1500, %v1772
          %v1774 = vpop.f32.mrf.mxu0
          %v1775 = vadd.f32 %v1502, %v1774
          %v1776 = vpop.f32.mrf.mxu0
          %v1777 = vadd.f32 %v1504, %v1776
          %1778 = vmatprep.mubr.bf16.mxu0 0
          %1779 = vmatmul.mubr.bf16.gmra.mxu0 %v1077
          %v1780 = vpop.f32.mrf.mxu0
          %v1781 = vadd.f32 %v1508, %v1780
          %v1782 = vpop.f32.mrf.mxu0
          %v1783 = vadd.f32 %v1510, %v1782
          %v1784 = vpop.f32.mrf.mxu0
          %v1785 = vadd.f32 %v1512, %v1784
          %v1786 = vpop.f32.mrf.mxu0
          %v1787 = vadd.f32 %v1514, %v1786
          %1788 = vdwg.mxu0
          %v1789 = vld [vmem:[%s4] sm:$0x3]
          %v1791 = vlaneseq
          %v1792 = vshrl.u32 %v1791, 7
          %v1793 = vsub.s32 0, %v1792
          %v1794 = vrot.slane %v1789, %v1793
          %v1795 = vlaneseq
          %v1796 = vshrl.u32 %v1795, 7
          %v1797 = vsub.s32 1, %v1796
          %v1798 = vrot.slane %v1789, %v1797
          %v1801 = vadd.f32 %v1631, %v1794
          %v1802 = vadd.f32 %v1633, %v1798
          %v1803 = vadd.f32 %v1635, %v1794
          %v1804 = vadd.f32 %v1637, %v1798
          %v1805 = vadd.f32 %v1641, %v1794
          %v1806 = vadd.f32 %v1643, %v1798
          %v1807 = vadd.f32 %v1645, %v1794
          %v1808 = vadd.f32 %v1647, %v1798
          %v1809 = vadd.f32 %v1651, %v1794
          %v1810 = vadd.f32 %v1653, %v1798
          %v1811 = vadd.f32 %v1655, %v1794
          %v1812 = vadd.f32 %v1657, %v1798
          %v1813 = vadd.f32 %v1661, %v1794
          %v1814 = vadd.f32 %v1663, %v1798
          %v1815 = vadd.f32 %v1665, %v1794
          %v1816 = vadd.f32 %v1667, %v1798
          %v1817 = vadd.f32 %v1671, %v1794
          %v1818 = vadd.f32 %v1673, %v1798
          %v1819 = vadd.f32 %v1675, %v1794
          %v1820 = vadd.f32 %v1677, %v1798
          %v1821 = vadd.f32 %v1681, %v1794
          %v1822 = vadd.f32 %v1683, %v1798
          %v1823 = vadd.f32 %v1685, %v1794
          %v1824 = vadd.f32 %v1687, %v1798
          %v1825 = vadd.f32 %v1691, %v1794
          %v1826 = vadd.f32 %v1693, %v1798
          %v1827 = vadd.f32 %v1695, %v1794
          %v1828 = vadd.f32 %v1697, %v1798
          %v1829 = vadd.f32 %v1701, %v1794
          %v1830 = vadd.f32 %v1703, %v1798
          %v1831 = vadd.f32 %v1705, %v1794
          %v1832 = vadd.f32 %v1707, %v1798
          %v1833 = vadd.f32 %v1711, %v1794
          %v1834 = vadd.f32 %v1713, %v1798
          %v1835 = vadd.f32 %v1715, %v1794
          %v1836 = vadd.f32 %v1717, %v1798
          %v1837 = vadd.f32 %v1721, %v1794
          %v1838 = vadd.f32 %v1723, %v1798
          %v1839 = vadd.f32 %v1725, %v1794
          %v1840 = vadd.f32 %v1727, %v1798
          %v1841 = vadd.f32 %v1731, %v1794
          %v1842 = vadd.f32 %v1733, %v1798
          %v1843 = vadd.f32 %v1735, %v1794
          %v1844 = vadd.f32 %v1737, %v1798
          %v1845 = vadd.f32 %v1741, %v1794
          %v1846 = vadd.f32 %v1743, %v1798
          %v1847 = vadd.f32 %v1745, %v1794
          %v1848 = vadd.f32 %v1747, %v1798
          %v1849 = vadd.f32 %v1751, %v1794
          %v1850 = vadd.f32 %v1753, %v1798
          %v1851 = vadd.f32 %v1755, %v1794
          %v1852 = vadd.f32 %v1757, %v1798
          %v1853 = vadd.f32 %v1761, %v1794
          %v1854 = vadd.f32 %v1763, %v1798
          %v1855 = vadd.f32 %v1765, %v1794
          %v1856 = vadd.f32 %v1767, %v1798
          %v1857 = vadd.f32 %v1771, %v1794
          %v1858 = vadd.f32 %v1773, %v1798
          %v1859 = vadd.f32 %v1775, %v1794
          %v1860 = vadd.f32 %v1777, %v1798
          %v1861 = vadd.f32 %v1781, %v1794
          %v1862 = vadd.f32 %v1783, %v1798
          %v1863 = vadd.f32 %v1785, %v1794
          %v1864 = vadd.f32 %v1787, %v1798
          %v1865 = vmax.f32 %v1801, 0.0
          %v1866 = vmax.f32 %v1802, 0.0
          %v1867 = vmax.f32 %v1803, 0.0
          %v1868 = vmax.f32 %v1804, 0.0
          %v1869 = vmax.f32 %v1805, 0.0
          %v1870 = vmax.f32 %v1806, 0.0
          %v1871 = vmax.f32 %v1807, 0.0
          %v1872 = vmax.f32 %v1808, 0.0
          %v1873 = vmax.f32 %v1809, 0.0
          %v1874 = vmax.f32 %v1810, 0.0
          %v1875 = vmax.f32 %v1811, 0.0
          %v1876 = vmax.f32 %v1812, 0.0
          %v1877 = vmax.f32 %v1813, 0.0
          %v1878 = vmax.f32 %v1814, 0.0
          %v1879 = vmax.f32 %v1815, 0.0
          %v1880 = vmax.f32 %v1816, 0.0
          %v1881 = vmax.f32 %v1817, 0.0
          %v1882 = vmax.f32 %v1818, 0.0
          %v1883 = vmax.f32 %v1819, 0.0
          %v1884 = vmax.f32 %v1820, 0.0
          %v1885 = vmax.f32 %v1821, 0.0
          %v1886 = vmax.f32 %v1822, 0.0
          %v1887 = vmax.f32 %v1823, 0.0
          %v1888 = vmax.f32 %v1824, 0.0
          %v1889 = vmax.f32 %v1825, 0.0
          %v1890 = vmax.f32 %v1826, 0.0
          %v1891 = vmax.f32 %v1827, 0.0
          %v1892 = vmax.f32 %v1828, 0.0
          %v1893 = vmax.f32 %v1829, 0.0
          %v1894 = vmax.f32 %v1830, 0.0
          %v1895 = vmax.f32 %v1831, 0.0
          %v1896 = vmax.f32 %v1832, 0.0
          %v1897 = vmax.f32 %v1833, 0.0
          %v1898 = vmax.f32 %v1834, 0.0
          %v1899 = vmax.f32 %v1835, 0.0
          %v1900 = vmax.f32 %v1836, 0.0
          %v1901 = vmax.f32 %v1837, 0.0
          %v1902 = vmax.f32 %v1838, 0.0
          %v1903 = vmax.f32 %v1839, 0.0
          %v1904 = vmax.f32 %v1840, 0.0
          %v1905 = vmax.f32 %v1841, 0.0
          %v1906 = vmax.f32 %v1842, 0.0
          %v1907 = vmax.f32 %v1843, 0.0
          %v1908 = vmax.f32 %v1844, 0.0
          %v1909 = vmax.f32 %v1845, 0.0
          %v1910 = vmax.f32 %v1846, 0.0
          %v1911 = vmax.f32 %v1847, 0.0
          %v1912 = vmax.f32 %v1848, 0.0
          %v1913 = vmax.f32 %v1849, 0.0
          %v1914 = vmax.f32 %v1850, 0.0
          %v1915 = vmax.f32 %v1851, 0.0
          %v1916 = vmax.f32 %v1852, 0.0
          %v1917 = vmax.f32 %v1853, 0.0
          %v1918 = vmax.f32 %v1854, 0.0
          %v1919 = vmax.f32 %v1855, 0.0
          %v1920 = vmax.f32 %v1856, 0.0
          %v1921 = vmax.f32 %v1857, 0.0
          %v1922 = vmax.f32 %v1858, 0.0
          %v1923 = vmax.f32 %v1859, 0.0
          %v1924 = vmax.f32 %v1860, 0.0
          %v1925 = vmax.f32 %v1861, 0.0
          %v1926 = vmax.f32 %v1862, 0.0
          %v1927 = vmax.f32 %v1863, 0.0
          %v1928 = vmax.f32 %v1864, 0.0
          %v1929 = vpack.c.bf16 %v1867, %v1865
          %v1930 = vpack.c.bf16 %v1868, %v1866
          %v1931 = vpack.c.bf16 %v1871, %v1869
          %v1932 = vpack.c.bf16 %v1872, %v1870
          %v1933 = vpack.c.bf16 %v1875, %v1873
          %v1934 = vpack.c.bf16 %v1876, %v1874
          %v1935 = vpack.c.bf16 %v1879, %v1877
          %v1936 = vpack.c.bf16 %v1880, %v1878
          %v1937 = vpack.c.bf16 %v1883, %v1881
          %v1938 = vpack.c.bf16 %v1884, %v1882
          %v1939 = vpack.c.bf16 %v1887, %v1885
          %v1940 = vpack.c.bf16 %v1888, %v1886
          %v1941 = vpack.c.bf16 %v1891, %v1889
          %v1942 = vpack.c.bf16 %v1892, %v1890
          %v1943 = vpack.c.bf16 %v1895, %v1893
          %v1944 = vpack.c.bf16 %v1896, %v1894
          %v1945 = vpack.c.bf16 %v1899, %v1897
          %v1946 = vpack.c.bf16 %v1900, %v1898
          %v1947 = vpack.c.bf16 %v1903, %v1901
          %v1948 = vpack.c.bf16 %v1904, %v1902
          %v1949 = vpack.c.bf16 %v1907, %v1905
          %v1950 = vpack.c.bf16 %v1908, %v1906
          %v1951 = vpack.c.bf16 %v1911, %v1909
          %v1952 = vpack.c.bf16 %v1912, %v1910
          %v1953 = vpack.c.bf16 %v1915, %v1913
          %v1954 = vpack.c.bf16 %v1916, %v1914
          %v1955 = vpack.c.bf16 %v1919, %v1917
          %v1956 = vpack.c.bf16 %v1920, %v1918
          %v1957 = vpack.c.bf16 %v1923, %v1921
          %v1958 = vpack.c.bf16 %v1924, %v1922
          %v1959 = vpack.c.bf16 %v1927, %v1925
          %v1960 = vpack.c.bf16 %v1928, %v1926
          %v1993 = vunpack.c.l.b16 %v1929
          %v1994 = vunpack.c.l.b16 %v1930
          %v1995 = vunpack.c.h.b16 %v1929
          %v1996 = vunpack.c.h.b16 %v1930
          %v1997 = vunpack.c.l.b16 %v1931
          %v1998 = vunpack.c.l.b16 %v1932
          %v1999 = vunpack.c.h.b16 %v1931
          %v2000 = vunpack.c.h.b16 %v1932
          %v2001 = vunpack.c.l.b16 %v1933
          %v2002 = vunpack.c.l.b16 %v1934
          %v2003 = vunpack.c.h.b16 %v1933
          %v2004 = vunpack.c.h.b16 %v1934
          %v2005 = vunpack.c.l.b16 %v1935
          %v2006 = vunpack.c.l.b16 %v1936
          %v2007 = vunpack.c.h.b16 %v1935
          %v2008 = vunpack.c.h.b16 %v1936
          %v2009 = vunpack.c.l.b16 %v1937
          %v2010 = vunpack.c.l.b16 %v1938
          %v2011 = vunpack.c.h.b16 %v1937
          %v2012 = vunpack.c.h.b16 %v1938
          %v2013 = vunpack.c.l.b16 %v1939
          %v2014 = vunpack.c.l.b16 %v1940
          %v2015 = vunpack.c.h.b16 %v1939
          %v2016 = vunpack.c.h.b16 %v1940
          %v2017 = vunpack.c.l.b16 %v1941
          %v2018 = vunpack.c.l.b16 %v1942
          %v2019 = vunpack.c.h.b16 %v1941
          %v2020 = vunpack.c.h.b16 %v1942
          %v2021 = vunpack.c.l.b16 %v1943
          %v2022 = vunpack.c.l.b16 %v1944
          %v2023 = vunpack.c.h.b16 %v1943
          %v2024 = vunpack.c.h.b16 %v1944
          %v2025 = vunpack.c.l.b16 %v1945
          %v2026 = vunpack.c.l.b16 %v1946
          %v2027 = vunpack.c.h.b16 %v1945
          %v2028 = vunpack.c.h.b16 %v1946
          %v2029 = vunpack.c.l.b16 %v1947
          %v2030 = vunpack.c.l.b16 %v1948
          %v2031 = vunpack.c.h.b16 %v1947
          %v2032 = vunpack.c.h.b16 %v1948
          %v2033 = vunpack.c.l.b16 %v1949
          %v2034 = vunpack.c.l.b16 %v1950
          %v2035 = vunpack.c.h.b16 %v1949
          %v2036 = vunpack.c.h.b16 %v1950
          %v2037 = vunpack.c.l.b16 %v1951
          %v2038 = vunpack.c.l.b16 %v1952
          %v2039 = vunpack.c.h.b16 %v1951
          %v2040 = vunpack.c.h.b16 %v1952
          %v2041 = vunpack.c.l.b16 %v1953
          %v2042 = vunpack.c.l.b16 %v1954
          %v2043 = vunpack.c.h.b16 %v1953
          %v2044 = vunpack.c.h.b16 %v1954
          %v2045 = vunpack.c.l.b16 %v1955
          %v2046 = vunpack.c.l.b16 %v1956
          %v2047 = vunpack.c.h.b16 %v1955
          %v2048 = vunpack.c.h.b16 %v1956
          %v2049 = vunpack.c.l.b16 %v1957
          %v2050 = vunpack.c.l.b16 %v1958
          %v2051 = vunpack.c.h.b16 %v1957
          %v2052 = vunpack.c.h.b16 %v1958
          %v2053 = vunpack.c.l.b16 %v1959
          %v2054 = vunpack.c.l.b16 %v1960
          %v2055 = vunpack.c.h.b16 %v1959
          %v2056 = vunpack.c.h.b16 %v1960
          %v2057 = vpack.c.b16 %v1994, %v1993
          %v2058 = vpack.c.b16 %v1996, %v1995
          %v2059 = vpack.c.b16 %v1998, %v1997
          %v2060 = vpack.c.b16 %v2000, %v1999
          %v2061 = vpack.c.b16 %v2002, %v2001
          %v2062 = vpack.c.b16 %v2004, %v2003
          %v2063 = vpack.c.b16 %v2006, %v2005
          %v2064 = vpack.c.b16 %v2008, %v2007
          %v2065 = vpack.c.b16 %v2010, %v2009
          %v2066 = vpack.c.b16 %v2012, %v2011
          %v2067 = vpack.c.b16 %v2014, %v2013
          %v2068 = vpack.c.b16 %v2016, %v2015
          %v2069 = vpack.c.b16 %v2018, %v2017
          %v2070 = vpack.c.b16 %v2020, %v2019
          %v2071 = vpack.c.b16 %v2022, %v2021
          %v2072 = vpack.c.b16 %v2024, %v2023
          %v2073 = vpack.c.b16 %v2026, %v2025
          %v2074 = vpack.c.b16 %v2028, %v2027
          %v2075 = vpack.c.b16 %v2030, %v2029
          %v2076 = vpack.c.b16 %v2032, %v2031
          %v2077 = vpack.c.b16 %v2034, %v2033
          %v2078 = vpack.c.b16 %v2036, %v2035
          %v2079 = vpack.c.b16 %v2038, %v2037
          %v2080 = vpack.c.b16 %v2040, %v2039
          %v2081 = vpack.c.b16 %v2042, %v2041
          %v2082 = vpack.c.b16 %v2044, %v2043
          %v2083 = vpack.c.b16 %v2046, %v2045
          %v2084 = vpack.c.b16 %v2048, %v2047
          %v2085 = vpack.c.b16 %v2050, %v2049
          %v2086 = vpack.c.b16 %v2052, %v2051
          %v2087 = vpack.c.b16 %v2054, %v2053
          %v2088 = vpack.c.b16 %v2056, %v2055
          %2121 = vst [vmem:[%s405] sm:$0xff] %v2057
          %2122 = vst [vmem:[%s405 + $0x8] sm:$0xff] %v2058
          %2123 = vst [vmem:[%s405 + $0x10] sm:$0xff] %v2059
          %2124 = vst [vmem:[%s405 + $0x18] sm:$0xff] %v2060
          %2125 = vst [vmem:[%s405 + $0x20] sm:$0xff] %v2061
          %2126 = vst [vmem:[%s405 + $0x28] sm:$0xff] %v2062
          %2127 = vst [vmem:[%s405 + $0x30] sm:$0xff] %v2063
          %2128 = vst [vmem:[%s405 + $0x38] sm:$0xff] %v2064
          %2129 = vst [vmem:[%s405 + $0x40] sm:$0xff] %v2065
          %2130 = vst [vmem:[%s405 + $0x48] sm:$0xff] %v2066
          %2131 = vst [vmem:[%s405 + $0x50] sm:$0xff] %v2067
          %2132 = vst [vmem:[%s405 + $0x58] sm:$0xff] %v2068
          %2133 = vst [vmem:[%s405 + $0x60] sm:$0xff] %v2069
          %2134 = vst [vmem:[%s405 + $0x68] sm:$0xff] %v2070
          %2135 = vst [vmem:[%s405 + $0x70] sm:$0xff] %v2071
          %2136 = vst [vmem:[%s405 + $0x78] sm:$0xff] %v2072
          %2137 = vst [vmem:[%s405 + $0x80] sm:$0xff] %v2073
          %2138 = vst [vmem:[%s405 + $0x88] sm:$0xff] %v2074
          %2139 = vst [vmem:[%s405 + $0x90] sm:$0xff] %v2075
          %2140 = vst [vmem:[%s405 + $0x98] sm:$0xff] %v2076
          %2141 = vst [vmem:[%s405 + $0xa0] sm:$0xff] %v2077
          %2142 = vst [vmem:[%s405 + $0xa8] sm:$0xff] %v2078
          %2143 = vst [vmem:[%s405 + $0xb0] sm:$0xff] %v2079
          %2144 = vst [vmem:[%s405 + $0xb8] sm:$0xff] %v2080
          %2145 = vst [vmem:[%s405 + $0xc0] sm:$0xff] %v2081
          %2146 = vst [vmem:[%s405 + $0xc8] sm:$0xff] %v2082
          %2147 = vst [vmem:[%s405 + $0xd0] sm:$0xff] %v2083
          %2148 = vst [vmem:[%s405 + $0xd8] sm:$0xff] %v2084
          %2149 = vst [vmem:[%s405 + $0xe0] sm:$0xff] %v2085
          %2150 = vst [vmem:[%s405 + $0xe8] sm:$0xff] %v2086
          %2151 = vst [vmem:[%s405 + $0xf0] sm:$0xff] %v2087
          %2152 = vst [vmem:[%s405 + $0xf8] sm:$0xff] %v2088
        $region86: #{graphsage_forward.2} parent=73 // pred_fallthru
          _
        %s2153 = smul.u32 32, %s20
        %p2154 = scmp.lt.s32.totalorder %s2153, 63
        %s2155 = scalar_select %p2154, %s2153, 63
        %s2156 = smul.addr %s2155, 2
        %s2157 = smul.addr %s2156, 4
        %s2158 = scalar_lea.vmem %s5, %s2157
        // Predicated region
        $region87: #{graphsage_forward.2} parent=73 // pred_check
          %p2159 = pneg %p158
        $region88: #{graphsage_forward.2} parent=73 // pred_check_branch
          %2161 = sbr.rel (%p2159) target = $region90
        $region89: #{graphsage_forward.2} parent=73 // pred_region
          %s2162 = smul.u32 32, %s20
        $region90: #{graphsage_forward.2} parent=73 // pred_fallthru
          _
      $region74: #{graphsage_forward.2} parent=5 // pred_fallthru
        _
      %p2163 = scmp.le.s32.totalorder 2, %s11
      // Predicated region
      $region91: #{graphsage_forward.2} parent=5 // pred_check
        %p2164 = pneg %p2163
      $region92: #{graphsage_forward.2} parent=5 // pred_check_branch
        %2166 = sbr.rel (%p2164) target = $region94
      $region93: #{graphsage_forward.2} parent=5 // pred_region
        %s2167 = ssub.s32 %s11, 2
        // Predicated region
        $region95: #{graphsage_forward.2} parent=93 // pred_check
          %p2168 = pneg %p164
        $region96: #{graphsage_forward.2} parent=93 // pred_check_branch
          %2170 = sbr.rel (%p2168) target = $region98
        $region97: #{graphsage_forward.2} parent=93 // pred_region
          %s2171 = smul.u32 32, %s22
          %p2172 = scmp.lt.s32.totalorder %s2171, 63
          %s2173 = scalar_select %p2172, %s2171, 63
          %s2174 = smul.addr %s2173, 2
          %s2175 = smul.addr %s2174, 4
          %s2176 = scalar_lea.vmem %s5, %s2175
        $region98: #{graphsage_forward.2} parent=93 // pred_fallthru
          _
      $region94: #{graphsage_forward.2} parent=5 // pred_fallthru
        _
    $region6: #{graphsage_forward.2} parent=1 // loop_footer
      %s15 = sadd.s32 1, %s11
    $region7: #{graphsage_forward.2} parent=1 // loop_footer_branch
      %10 = sbr.rel target = $region3
    $region8: #{graphsage_forward.2} parent=1 // loop_exit
      _

// kernel: graphsage_forward.3
$region0: #{graphsage_forward.3}
  #allocation0 [shape = 'u32[]', space=smem, size = 0x4, offset = 0x4, fixed_abs, tag = 'smem constant byte address 0x4 - core index']
  #allocation1 [shape = 'u32[144,128]{1,0:T(1,128)}', space=vmem, size = 0x12000, scoped, tag = 'internal scratch']
  #allocation2 [shape = 'f32[256,128]{1,0:T(8,128)}', space=vmem, size = 0x20000, scoped, tag = 'scratch operand']
  %s0 = inlined_call_operand.vmem [shape: bf16[512,512], index: 0, kind: input, shape index: {}]
  %s1 = inlined_call_operand.vmem [shape: bf16[512,128], index: 1, kind: input, shape index: {}]
  %s2 = inlined_call_operand.vmem [shape: bf16[512,256], index: 2, kind: input, shape index: {}]
  %s3 = inlined_call_operand.vmem [shape: bf16[256,128], index: 3, kind: input, shape index: {}]
  %s4 = inlined_call_operand.vmem [shape: f32[1,128], index: 4, kind: input, shape index: {}]
  %s5 = inlined_call_operand.vmem [shape: f32[512,128], index: 5, kind: output, shape index: {}]
  %s6 = sld [smem:[#allocation0]]
  $region99: #{graphsage_forward.3} parent=0
    _
  %s8 = ssub.s32 1, %s6
  %s9 = scalar_select 0, %s8, %s6
  $region1: #{graphsage_forward.3} parent=0
    #allocation3 [shape = 'u8[262144]{0}', space=vmem, size = 0x40000, scoped, tag = 'input window, operand 0']
    loop: start=0, step=1, limit=6
    $region2: #{graphsage_forward.3} parent=1 // loop_pre_header
      _
    $region3: #{graphsage_forward.3} parent=1 // loop_header
      %s11 = sphi 0, %s15
      %p12 = scmp.ge.s32.totalorder %s11, 6
      %s18 = sphi 0, %s30
      %s19 = sphi 0, %s26
      %s20 = sphi 0, %s18
      %s21 = sphi 0, %s19
      %s22 = sphi 0, %s20
      %s23 = sphi 0, %s21
      %s35 = sphi 0, %s37
      %s38 = sphi 0, %s35
      %s39 = sphi 0, %s38
      %s55 = sphi 0, %s39
      %s59 = sphi 0, %s59
      %s61 = sphi 0, %s59
      %s62 = sphi 0, %s61
      %s76 = sphi 0, %s62
      %s82 = sphi 0, %s84
      %s85 = sphi 0, %s82
      %s86 = sphi 0, %s85
      %s102 = sphi 0, %s86
      %s106 = sphi 0, %s106
      %s108 = sphi 0, %s106
      %s109 = sphi 0, %s108
      %s123 = sphi 0, %s109
      %s127 = sphi 0, %s127
      %s129 = sphi 0, %s127
      %s130 = sphi 0, %s129
      %s144 = sphi 0, %s130
      %s150 = sphi 0, %s152
      %s153 = sphi 0, %s150
      %s154 = sphi 0, %s153
      %s170 = sphi 0, %s154
    $region4: #{graphsage_forward.3} parent=1 // loop_header_branch
      %14 = sbr.rel (%p12) target = $region8
    $region5: #{graphsage_forward.3} parent=1 // loop_body
      %s16 = ssub.s32 %s11, 1
      %s17 = ssub.s32 %s11, 2
      %s24 = sadd.s32 1, %s19
      %p25 = scmp.ge.s32.totalorder %s24, 2
      %s26 = scalar_select %p25, 0, %s24
      %s27 = sadd.s32 1, %s18
      %s28 = scalar_select %p25, %s27, %s18
      %p29 = scmp.ge.s32.totalorder %s28, 2
      %s30 = scalar_select %p29, 0, %s28
      %s31 = ssub.s32 %s18, %s30
      %s32 = ssub.s32 %s19, %s26
      %s33 = sor.u32 %s31, %s32
      %p34 = scmp.eq.s32.totalorder %s33, 0
      %s36 = sadd.s32 %s35, 1
      %s37 = scalar_select %p34, %s35, %s36
      %p40 = pneg %p34
      %p41 = scmp.eq.s32.totalorder %s11, 3
      %p42 = por %p40, %p41
      %p43 = scmp.ne.s32.totalorder %s35, %s38
      %p44 = scmp.eq.s32.totalorder %s11, 0
      %p45 = por %p43, %p44
      %p46 = scmp.ne.s32.totalorder %s35, %s38
      %p47 = scmp.eq.s32.totalorder %s16, 3
      %p48 = por %p46, %p47
      %p49 = scmp.ne.s32.totalorder %s38, %s39
      %p50 = scmp.eq.s32.totalorder %s16, 0
      %p51 = por %p49, %p50
      %p52 = scmp.ne.s32.totalorder %s38, %s39
      %p53 = scmp.eq.s32.totalorder %s17, 3
      %p54 = por %p52, %p53
      %p56 = scmp.ne.s32.totalorder %s39, %s55
      %p57 = scmp.eq.s32.totalorder %s17, 0
      %p58 = por %p56, %p57
      %s60 = sadd.s32 %s59, 1
      %p63 = scmp.eq.s32.totalorder %s11, 3
      %p64 = scmp.ne.s32.totalorder %s59, %s61
      %p65 = scmp.eq.s32.totalorder %s11, 0
      %p66 = por %p64, %p65
      %p67 = scmp.ne.s32.totalorder %s59, %s61
      %p68 = scmp.eq.s32.totalorder %s16, 3
      %p69 = por %p67, %p68
      %p70 = scmp.ne.s32.totalorder %s61, %s62
      %p71 = scmp.eq.s32.totalorder %s16, 0
      %p72 = por %p70, %p71
      %p73 = scmp.ne.s32.totalorder %s61, %s62
      %p74 = scmp.eq.s32.totalorder %s17, 3
      %p75 = por %p73, %p74
      %p77 = scmp.ne.s32.totalorder %s62, %s76
      %p78 = scmp.eq.s32.totalorder %s17, 0
      %p79 = por %p77, %p78
      %s80 = ssub.s32 %s18, %s30
      %p81 = scmp.eq.s32.totalorder %s80, 0
      %s83 = sadd.s32 %s82, 1
      %s84 = scalar_select %p81, %s82, %s83
      %p87 = pneg %p81
      %p88 = scmp.eq.s32.totalorder %s11, 3
      %p89 = por %p87, %p88
      %p90 = scmp.ne.s32.totalorder %s82, %s85
      %p91 = scmp.eq.s32.totalorder %s11, 0
      %p92 = por %p90, %p91
      %p93 = scmp.ne.s32.totalorder %s82, %s85
      %p94 = scmp.eq.s32.totalorder %s16, 3
      %p95 = por %p93, %p94
      %p96 = scmp.ne.s32.totalorder %s85, %s86
      %p97 = scmp.eq.s32.totalorder %s16, 0
      %p98 = por %p96, %p97
      %p99 = scmp.ne.s32.totalorder %s85, %s86
      %p100 = scmp.eq.s32.totalorder %s17, 3
      %p101 = por %p99, %p100
      %p103 = scmp.ne.s32.totalorder %s86, %s102
      %p104 = scmp.eq.s32.totalorder %s17, 0
      %p105 = por %p103, %p104
      %s107 = sadd.s32 %s106, 1
      %p110 = scmp.eq.s32.totalorder %s11, 3
      %p111 = scmp.ne.s32.totalorder %s106, %s108
      %p112 = scmp.eq.s32.totalorder %s11, 0
      %p113 = por %p111, %p112
      %p114 = scmp.ne.s32.totalorder %s106, %s108
      %p115 = scmp.eq.s32.totalorder %s16, 3
      %p116 = por %p114, %p115
      %p117 = scmp.ne.s32.totalorder %s108, %s109
      %p118 = scmp.eq.s32.totalorder %s16, 0
      %p119 = por %p117, %p118
      %p120 = scmp.ne.s32.totalorder %s108, %s109
      %p121 = scmp.eq.s32.totalorder %s17, 3
      %p122 = por %p120, %p121
      %p124 = scmp.ne.s32.totalorder %s109, %s123
      %p125 = scmp.eq.s32.totalorder %s17, 0
      %p126 = por %p124, %p125
      %s128 = sadd.s32 %s127, 1
      %p131 = scmp.eq.s32.totalorder %s11, 3
      %p132 = scmp.ne.s32.totalorder %s127, %s129
      %p133 = scmp.eq.s32.totalorder %s11, 0
      %p134 = por %p132, %p133
      %p135 = scmp.ne.s32.totalorder %s127, %s129
      %p136 = scmp.eq.s32.totalorder %s16, 3
      %p137 = por %p135, %p136
      %p138 = scmp.ne.s32.totalorder %s129, %s130
      %p139 = scmp.eq.s32.totalorder %s16, 0
      %p140 = por %p138, %p139
      %p141 = scmp.ne.s32.totalorder %s129, %s130
      %p142 = scmp.eq.s32.totalorder %s17, 3
      %p143 = por %p141, %p142
      %p145 = scmp.ne.s32.totalorder %s130, %s144
      %p146 = scmp.eq.s32.totalorder %s17, 0
      %p147 = por %p145, %p146
      %s148 = ssub.s32 %s18, %s30
      %p149 = scmp.eq.s32.totalorder %s148, 0
      %s151 = sadd.s32 %s150, 1
      %s152 = scalar_select %p149, %s150, %s151
      %p155 = pneg %p149
      %p156 = scmp.eq.s32.totalorder %s11, 3
      %p157 = por %p155, %p156
      %p158 = scmp.ne.s32.totalorder %s150, %s153
      %p159 = scmp.eq.s32.totalorder %s11, 0
      %p160 = por %p158, %p159
      %p161 = scmp.ne.s32.totalorder %s150, %s153
      %p162 = scmp.eq.s32.totalorder %s16, 3
      %p163 = por %p161, %p162
      %p164 = scmp.ne.s32.totalorder %s153, %s154
      %p165 = scmp.eq.s32.totalorder %s16, 0
      %p166 = por %p164, %p165
      %p167 = scmp.ne.s32.totalorder %s153, %s154
      %p168 = scmp.eq.s32.totalorder %s17, 3
      %p169 = por %p167, %p168
      %p171 = scmp.ne.s32.totalorder %s154, %s170
      %p172 = scmp.eq.s32.totalorder %s17, 0
      %p173 = por %p171, %p172
      %p174 = scmp.le.s32.totalorder 1, %s11
      %p175 = scmp.lt.s32.totalorder %s11, 5
      %p176 = pnand %p174, %p175
      %p177 = pneg %p176
      // Predicated region
      $region9: #{graphsage_forward.3} parent=5 // pred_check
        _
      $region10: #{graphsage_forward.3} parent=5 // pred_check_branch
        %179 = sbr.rel (%p176) target = $region12
      $region11: #{graphsage_forward.3} parent=5 // pred_region
        %s180 = ssub.s32 %s11, 1
        // Predicated region
        $region13: #{graphsage_forward.3} parent=11 // pred_check
          %p181 = pneg %p72
        $region14: #{graphsage_forward.3} parent=11 // pred_check_branch
          %183 = sbr.rel (%p181) target = $region16
        $region15: #{graphsage_forward.3} parent=11 // pred_region
          _
        $region16: #{graphsage_forward.3} parent=11 // pred_fallthru
          _
        // Predicated region
        $region17: #{graphsage_forward.3} parent=11 // pred_check
          %p184 = pneg %p119
        $region18: #{graphsage_forward.3} parent=11 // pred_check_branch
          %186 = sbr.rel (%p184) target = $region20
        $region19: #{graphsage_forward.3} parent=11 // pred_region
          _
        $region20: #{graphsage_forward.3} parent=11 // pred_fallthru
          _
        // Predicated region
        $region21: #{graphsage_forward.3} parent=11 // pred_check
          %p187 = pneg %p140
        $region22: #{graphsage_forward.3} parent=11 // pred_check_branch
          %189 = sbr.rel (%p187) target = $region24
        $region23: #{graphsage_forward.3} parent=11 // pred_region
          _
        $region24: #{graphsage_forward.3} parent=11 // pred_fallthru
          _
      $region12: #{graphsage_forward.3} parent=5 // pred_fallthru
        _
      %p190 = scmp.lt.s32.totalorder %s11, 4
      // Predicated region
      $region25: #{graphsage_forward.3} parent=5 // pred_check
        %p191 = pneg %p190
      $region26: #{graphsage_forward.3} parent=5 // pred_check_branch
        %193 = sbr.rel (%p191) target = $region28
      $region27: #{graphsage_forward.3} parent=5 // pred_region
        // Predicated region
        $region29: #{graphsage_forward.3} parent=27 // pred_check
          %p194 = pneg %p45
        $region30: #{graphsage_forward.3} parent=27 // pred_check_branch
          %196 = sbr.rel (%p194) target = $region32
        $region31: #{graphsage_forward.3} parent=27 // pred_region
          %s197 = sand.u32 %s35, 1
          %s198 = sand.u32 %s35, 1
          %s199 = smul.addr %s198, 256
          %s200 = scalar_lea.vmem [#allocation3], %s199
          %s201 = smul.u32 32, %s18
          %s202 = smul.u32 2, %s19
          %s203 = smul.addr %s201, 4
          %s204 = sadd.s32 %s202, %s203
          %s205 = smul.addr %s204, 4
          %s206 = scalar_lea.vmem %s0, %s205
          // Predicated region
          $region33: #{graphsage_forward.3} parent=31 // pred_check
            _
          $region34: #{graphsage_forward.3} parent=31 // pred_check_branch
            %208 = sbr.rel (0) target = $region36
          $region35: #{graphsage_forward.3} parent=31 // pred_region
            // Predicated region
            $region37: #{graphsage_forward.3} parent=35 // pred_check
              _
            $region38: #{graphsage_forward.3} parent=35 // pred_check_branch
              %210 = sbr.rel (0) target = $region40
            $region39: #{graphsage_forward.3} parent=35 // pred_region
              // Predicated region
              $region52: #{graphsage_forward.3} parent=39 // pred_check
                _
              $region53: #{graphsage_forward.3} parent=39 // pred_check_branch
                %288 = sbr.rel (0) target = $region55
              $region54: #{graphsage_forward.3} parent=39 // pred_region
                loop: start=0, step=1, limit=1
                $region56: #{graphsage_forward.3} parent=54 // loop_pre_header
                  _
                $region57: #{graphsage_forward.3} parent=54 // loop_header
                  %s290 = sphi 0, %s294
                  %p291 = scmp.ge.s32.totalorder %s290, 1
                  %s295 = sphi %s206, %s206
                  %s296 = sphi %s200, %s200
                $region58: #{graphsage_forward.3} parent=54 // loop_header_branch
                  %293 = sbr.rel (%p291) target = $region62
                $region59: #{graphsage_forward.3} parent=54 // loop_body
                  %v297 = vld [vmem:[%s295] sm:$0xff]
                  %298 = vst [vmem:[%s296] sm:$0xff] %v297
                  %v299 = vld [vmem:[%s295 + $0x10] sm:$0xff]
                  %300 = vst [vmem:[%s296 + $0x8] sm:$0xff] %v299
                  %v301 = vld [vmem:[%s295 + $0x20] sm:$0xff]
                  %302 = vst [vmem:[%s296 + $0x10] sm:$0xff] %v301
                  %v303 = vld [vmem:[%s295 + $0x30] sm:$0xff]
                  %304 = vst [vmem:[%s296 + $0x18] sm:$0xff] %v303
                  %v305 = vld [vmem:[%s295 + $0x40] sm:$0xff]
                  %306 = vst [vmem:[%s296 + $0x20] sm:$0xff] %v305
                  %v307 = vld [vmem:[%s295 + $0x50] sm:$0xff]
                  %308 = vst [vmem:[%s296 + $0x28] sm:$0xff] %v307
                  %v309 = vld [vmem:[%s295 + $0x60] sm:$0xff]
                  %310 = vst [vmem:[%s296 + $0x30] sm:$0xff] %v309
                  %v311 = vld [vmem:[%s295 + $0x70] sm:$0xff]
                  %312 = vst [vmem:[%s296 + $0x38] sm:$0xff] %v311
                  %v313 = vld [vmem:[%s295 + $0x80] sm:$0xff]
                  %314 = vst [vmem:[%s296 + $0x40] sm:$0xff] %v313
                  %v315 = vld [vmem:[%s295 + $0x90] sm:$0xff]
                  %316 = vst [vmem:[%s296 + $0x48] sm:$0xff] %v315
                  %v317 = vld [vmem:[%s295 + $0xa0] sm:$0xff]
                  %318 = vst [vmem:[%s296 + $0x50] sm:$0xff] %v317
                  %v319 = vld [vmem:[%s295 + $0xb0] sm:$0xff]
                  %320 = vst [vmem:[%s296 + $0x58] sm:$0xff] %v319
                  %v321 = vld [vmem:[%s295 + $0xc0] sm:$0xff]
                  %322 = vst [vmem:[%s296 + $0x60] sm:$0xff] %v321
                  %v323 = vld [vmem:[%s295 + $0xd0] sm:$0xff]
                  %324 = vst [vmem:[%s296 + $0x68] sm:$0xff] %v323
                  %v325 = vld [vmem:[%s295 + $0xe0] sm:$0xff]
                  %326 = vst [vmem:[%s296 + $0x70] sm:$0xff] %v325
                  %v327 = vld [vmem:[%s295 + $0xf0] sm:$0xff]
                  %328 = vst [vmem:[%s296 + $0x78] sm:$0xff] %v327
                  %v329 = vld [vmem:[%s295 + $0x100] sm:$0xff]
                  %330 = vst [vmem:[%s296 + $0x80] sm:$0xff] %v329
                  %v331 = vld [vmem:[%s295 + $0x110] sm:$0xff]
                  %332 = vst [vmem:[%s296 + $0x88] sm:$0xff] %v331
                  %v333 = vld [vmem:[%s295 + $0x120] sm:$0xff]
                  %334 = vst [vmem:[%s296 + $0x90] sm:$0xff] %v333
                  %v335 = vld [vmem:[%s295 + $0x130] sm:$0xff]
                  %336 = vst [vmem:[%s296 + $0x98] sm:$0xff] %v335
                  %v337 = vld [vmem:[%s295 + $0x140] sm:$0xff]
                  %338 = vst [vmem:[%s296 + $0xa0] sm:$0xff] %v337
                  %v339 = vld [vmem:[%s295 + $0x150] sm:$0xff]
                  %340 = vst [vmem:[%s296 + $0xa8] sm:$0xff] %v339
                  %v341 = vld [vmem:[%s295 + $0x160] sm:$0xff]
                  %342 = vst [vmem:[%s296 + $0xb0] sm:$0xff] %v341
                  %v343 = vld [vmem:[%s295 + $0x170] sm:$0xff]
                  %344 = vst [vmem:[%s296 + $0xb8] sm:$0xff] %v343
                  %v345 = vld [vmem:[%s295 + $0x180] sm:$0xff]
                  %346 = vst [vmem:[%s296 + $0xc0] sm:$0xff] %v345
                  %v347 = vld [vmem:[%s295 + $0x190] sm:$0xff]
                  %348 = vst [vmem:[%s296 + $0xc8] sm:$0xff] %v347
                  %v349 = vld [vmem:[%s295 + $0x1a0] sm:$0xff]
                  %350 = vst [vmem:[%s296 + $0xd0] sm:$0xff] %v349
                  %v351 = vld [vmem:[%s295 + $0x1b0] sm:$0xff]
                  %352 = vst [vmem:[%s296 + $0xd8] sm:$0xff] %v351
                  %v353 = vld [vmem:[%s295 + $0x1c0] sm:$0xff]
                  %354 = vst [vmem:[%s296 + $0xe0] sm:$0xff] %v353
                  %v355 = vld [vmem:[%s295 + $0x1d0] sm:$0xff]
                  %356 = vst [vmem:[%s296 + $0xe8] sm:$0xff] %v355
                  %v357 = vld [vmem:[%s295 + $0x1e0] sm:$0xff]
                  %358 = vst [vmem:[%s296 + $0xf0] sm:$0xff] %v357
                  %v359 = vld [vmem:[%s295 + $0x1f0] sm:$0xff]
                  %360 = vst [vmem:[%s296 + $0xf8] sm:$0xff] %v359
                $region60: #{graphsage_forward.3} parent=54 // loop_footer
                  %s294 = sadd.s32 1, %s290
                $region61: #{graphsage_forward.3} parent=54 // loop_footer_branch
                  %289 = sbr.rel target = $region57
                $region62: #{graphsage_forward.3} parent=54 // loop_exit
                  _
              $region55: #{graphsage_forward.3} parent=39 // pred_fallthru
                _
              // Predicated region
              $region63: #{graphsage_forward.3} parent=39 // pred_check
                _
              $region64: #{graphsage_forward.3} parent=39 // pred_check_branch
                %362 = sbr.rel target = $region66
              $region65: #{graphsage_forward.3} parent=39 // pred_region
                _
              $region66: #{graphsage_forward.3} parent=39 // pred_fallthru
                _
            $region40: #{graphsage_forward.3} parent=35 // pred_fallthru
              _
            // Predicated region
            $region41: #{graphsage_forward.3} parent=35 // pred_check
              _
            $region42: #{graphsage_forward.3} parent=35 // pred_check_branch
              %212 = sbr.rel target = $region44
            $region43: #{graphsage_forward.3} parent=35 // pred_region
              %s214 = ssub.s32 256, 1
              loop: start=0, step=1, limit=1
              $region45: #{graphsage_forward.3} parent=43 // loop_pre_header
                _
              $region46: #{graphsage_forward.3} parent=43 // loop_header
                %s216 = sphi 0, %s220
                %p217 = scmp.ge.s32.totalorder %s216, 1
                %s221 = sphi %s206, %s206
                %s222 = sphi %s200, %s200
              $region47: #{graphsage_forward.3} parent=43 // loop_header_branch
                %219 = sbr.rel (%p217) target = $region51
              $region48: #{graphsage_forward.3} parent=43 // loop_body
                %v223 = vld [vmem:[%s221] sm:%s214]
                %224 = vst [vmem:[%s222] sm:%s214] %v223
                %v225 = vld [vmem:[%s221 + $0x10] sm:%s214]
                %226 = vst [vmem:[%s222 + $0x8] sm:%s214] %v225
                %v227 = vld [vmem:[%s221 + $0x20] sm:%s214]
                %228 = vst [vmem:[%s222 + $0x10] sm:%s214] %v227
                %v229 = vld [vmem:[%s221 + $0x30] sm:%s214]
                %230 = vst [vmem:[%s222 + $0x18] sm:%s214] %v229
                %v231 = vld [vmem:[%s221 + $0x40] sm:%s214]
                %232 = vst [vmem:[%s222 + $0x20] sm:%s214] %v231
                %v233 = vld [vmem:[%s221 + $0x50] sm:%s214]
                %234 = vst [vmem:[%s222 + $0x28] sm:%s214] %v233
                %v235 = vld [vmem:[%s221 + $0x60] sm:%s214]
                %236 = vst [vmem:[%s222 + $0x30] sm:%s214] %v235
                %v237 = vld [vmem:[%s221 + $0x70] sm:%s214]
                %238 = vst [vmem:[%s222 + $0x38] sm:%s214] %v237
                %v239 = vld [vmem:[%s221 + $0x80] sm:%s214]
                %240 = vst [vmem:[%s222 + $0x40] sm:%s214] %v239
                %v241 = vld [vmem:[%s221 + $0x90] sm:%s214]
                %242 = vst [vmem:[%s222 + $0x48] sm:%s214] %v241
                %v243 = vld [vmem:[%s221 + $0xa0] sm:%s214]
                %244 = vst [vmem:[%s222 + $0x50] sm:%s214] %v243
                %v245 = vld [vmem:[%s221 + $0xb0] sm:%s214]
                %246 = vst [vmem:[%s222 + $0x58] sm:%s214] %v245
                %v247 = vld [vmem:[%s221 + $0xc0] sm:%s214]
                %248 = vst [vmem:[%s222 + $0x60] sm:%s214] %v247
                %v249 = vld [vmem:[%s221 + $0xd0] sm:%s214]
                %250 = vst [vmem:[%s222 + $0x68] sm:%s214] %v249
                %v251 = vld [vmem:[%s221 + $0xe0] sm:%s214]
                %252 = vst [vmem:[%s222 + $0x70] sm:%s214] %v251
                %v253 = vld [vmem:[%s221 + $0xf0] sm:%s214]
                %254 = vst [vmem:[%s222 + $0x78] sm:%s214] %v253
                %v255 = vld [vmem:[%s221 + $0x100] sm:%s214]
                %256 = vst [vmem:[%s222 + $0x80] sm:%s214] %v255
                %v257 = vld [vmem:[%s221 + $0x110] sm:%s214]
                %258 = vst [vmem:[%s222 + $0x88] sm:%s214] %v257
                %v259 = vld [vmem:[%s221 + $0x120] sm:%s214]
                %260 = vst [vmem:[%s222 + $0x90] sm:%s214] %v259
                %v261 = vld [vmem:[%s221 + $0x130] sm:%s214]
                %262 = vst [vmem:[%s222 + $0x98] sm:%s214] %v261
                %v263 = vld [vmem:[%s221 + $0x140] sm:%s214]
                %264 = vst [vmem:[%s222 + $0xa0] sm:%s214] %v263
                %v265 = vld [vmem:[%s221 + $0x150] sm:%s214]
                %266 = vst [vmem:[%s222 + $0xa8] sm:%s214] %v265
                %v267 = vld [vmem:[%s221 + $0x160] sm:%s214]
                %268 = vst [vmem:[%s222 + $0xb0] sm:%s214] %v267
                %v269 = vld [vmem:[%s221 + $0x170] sm:%s214]
                %270 = vst [vmem:[%s222 + $0xb8] sm:%s214] %v269
                %v271 = vld [vmem:[%s221 + $0x180] sm:%s214]
                %272 = vst [vmem:[%s222 + $0xc0] sm:%s214] %v271
                %v273 = vld [vmem:[%s221 + $0x190] sm:%s214]
                %274 = vst [vmem:[%s222 + $0xc8] sm:%s214] %v273
                %v275 = vld [vmem:[%s221 + $0x1a0] sm:%s214]
                %276 = vst [vmem:[%s222 + $0xd0] sm:%s214] %v275
                %v277 = vld [vmem:[%s221 + $0x1b0] sm:%s214]
                %278 = vst [vmem:[%s222 + $0xd8] sm:%s214] %v277
                %v279 = vld [vmem:[%s221 + $0x1c0] sm:%s214]
                %280 = vst [vmem:[%s222 + $0xe0] sm:%s214] %v279
                %v281 = vld [vmem:[%s221 + $0x1d0] sm:%s214]
                %282 = vst [vmem:[%s222 + $0xe8] sm:%s214] %v281
                %v283 = vld [vmem:[%s221 + $0x1e0] sm:%s214]
                %284 = vst [vmem:[%s222 + $0xf0] sm:%s214] %v283
                %v285 = vld [vmem:[%s221 + $0x1f0] sm:%s214]
                %286 = vst [vmem:[%s222 + $0xf8] sm:%s214] %v285
              $region49: #{graphsage_forward.3} parent=43 // loop_footer
                %s220 = sadd.s32 1, %s216
              $region50: #{graphsage_forward.3} parent=43 // loop_footer_branch
                %215 = sbr.rel target = $region46
              $region51: #{graphsage_forward.3} parent=43 // loop_exit
                _
            $region44: #{graphsage_forward.3} parent=35 // pred_fallthru
              _
          $region36: #{graphsage_forward.3} parent=31 // pred_fallthru
            _
          %363 = vnop
        $region32: #{graphsage_forward.3} parent=27 // pred_fallthru
          _
        // Predicated region
        $region67: #{graphsage_forward.3} parent=27 // pred_check
          %p364 = pneg %p92
        $region68: #{graphsage_forward.3} parent=27 // pred_check_branch
          %366 = sbr.rel (%p364) target = $region70
        $region69: #{graphsage_forward.3} parent=27 // pred_region
          %s367 = smul.u32 32, %s18
          %p368 = scmp.lt.s32.totalorder %s367, 63
          %s369 = scalar_select %p368, %s367, 63
          %s370 = smul.addr %s369, 2
          %s371 = smul.addr %s370, 4
          %s372 = scalar_lea.vmem %s2, %s371
          %s373 = smul.u32 32, %s18
        $region70: #{graphsage_forward.3} parent=27 // pred_fallthru
          _
      $region28: #{graphsage_forward.3} parent=5 // pred_fallthru
        _
      %p374 = scmp.le.s32.totalorder 1, %s11
      %p375 = scmp.lt.s32.totalorder %s11, 5
      %p376 = pnand %p374, %p375
      %p377 = pneg %p376
      // Predicated region
      $region71: #{graphsage_forward.3} parent=5 // pred_check
        _
      $region72: #{graphsage_forward.3} parent=5 // pred_check_branch
        %379 = sbr.rel (%p376) target = $region74
      $region73: #{graphsage_forward.3} parent=5 // pred_region
        %s380 = ssub.s32 %s11, 1
        %s381 = sand.u32 %s38, 1
        %s382 = sand.u32 %s38, 1
        %s383 = smul.addr %s382, 256
        %s384 = scalar_lea.vmem [#allocation3], %s383
        // Predicated region
        $region75: #{graphsage_forward.3} parent=73 // pred_check
          %p385 = pneg %p51
        $region76: #{graphsage_forward.3} parent=73 // pred_check_branch
          %387 = sbr.rel (%p385) target = $region78
        $region77: #{graphsage_forward.3} parent=73 // pred_region
          _
        $region78: #{graphsage_forward.3} parent=73 // pred_fallthru
          _
        %s388 = sand.u32 %s38, 1
        %s389 = sand.u32 %s38, 1
        %s390 = smul.addr %s389, 256
        %s391 = scalar_lea.vmem [#allocation3], %s390
        %p392 = pneg %p51
        %p393 = pneg %p48
        %p394 = pneg %p72
        %p395 = pneg %p69
        %s396 = smul.u32 32, %s20
        %p397 = scmp.lt.s32.totalorder %s396, 63
        %s398 = scalar_select %p397, %s396, 63
        %s399 = smul.addr %s398, 2
        %s400 = smul.addr %s399, 4
        %s401 = scalar_lea.vmem %s2, %s400
        %p402 = pneg %p98
        %p403 = pneg %p95
        %p404 = pneg %p119
        %p405 = pneg %p116
        %p406 = pneg %p140
        %p407 = pneg %p137
        %p408 = pneg %p166
        %p409 = pneg %p163
        %s410 = smul.u32 32, %s20
        %p411 = scmp.lt.s32.totalorder %s410, 63
        %s412 = scalar_select %p411, %s410, 63
        %s413 = smul.addr %s412, 8
        %s414 = scalar_lea.vmem %s5, %s413
        %s415 = smul.u32 32, %s20
        %s416 = smul.u32 2, %s21
        %s417 = smul.u32 32, %s20
        %p418 = scmp.lt.s32.totalorder %s417, 63
        %s419 = scalar_select %p418, %s417, 63
        %s420 = smul.addr %s419, 2
        %s421 = smul.addr %s420, 4
        %s422 = scalar_lea.vmem %s2, %s421
        %s423 = smul.u32 32, %s20
        %s424 = smul.u32 32, %s20
        %p425 = scmp.lt.s32.totalorder %s424, 63
        %s426 = scalar_select %p425, %s424, 63
        %s427 = smul.addr %s426, 8
        %s428 = scalar_lea.vmem %s5, %s427
        %s429 = smul.u32 32, %s20
        %p431 = scmp.eq.s32.totalorder %s21, 0
        // Predicated region
        $region79: #{graphsage_forward.3} parent=73 // pred_check
          %p432 = pneg %p431
        $region80: #{graphsage_forward.3} parent=73 // pred_check_branch
          %434 = sbr.rel (%p432) target = $region82
        $region81: #{graphsage_forward.3} parent=73 // pred_region
          %435 = vst [vmem:[#allocation2] sm:$0xff] 0.0
          %436 = vst [vmem:[#allocation2 + $0x8] sm:$0xff] 0.0
          %437 = vst [vmem:[#allocation2 + $0x10] sm:$0xff] 0.0
          %438 = vst [vmem:[#allocation2 + $0x18] sm:$0xff] 0.0
          %439 = vst [vmem:[#allocation2 + $0x20] sm:$0xff] 0.0
          %440 = vst [vmem:[#allocation2 + $0x28] sm:$0xff] 0.0
          %441 = vst [vmem:[#allocation2 + $0x30] sm:$0xff] 0.0
          %442 = vst [vmem:[#allocation2 + $0x38] sm:$0xff] 0.0
          %443 = vst [vmem:[#allocation2 + $0x40] sm:$0xff] 0.0
          %444 = vst [vmem:[#allocation2 + $0x48] sm:$0xff] 0.0
          %445 = vst [vmem:[#allocation2 + $0x50] sm:$0xff] 0.0
          %446 = vst [vmem:[#allocation2 + $0x58] sm:$0xff] 0.0
          %447 = vst [vmem:[#allocation2 + $0x60] sm:$0xff] 0.0
          %448 = vst [vmem:[#allocation2 + $0x68] sm:$0xff] 0.0
          %449 = vst [vmem:[#allocation2 + $0x70] sm:$0xff] 0.0
          %450 = vst [vmem:[#allocation2 + $0x78] sm:$0xff] 0.0
          %451 = vst [vmem:[#allocation2 + $0x80] sm:$0xff] 0.0
          %452 = vst [vmem:[#allocation2 + $0x88] sm:$0xff] 0.0
          %453 = vst [vmem:[#allocation2 + $0x90] sm:$0xff] 0.0
          %454 = vst [vmem:[#allocation2 + $0x98] sm:$0xff] 0.0
          %455 = vst [vmem:[#allocation2 + $0xa0] sm:$0xff] 0.0
          %456 = vst [vmem:[#allocation2 + $0xa8] sm:$0xff] 0.0
          %457 = vst [vmem:[#allocation2 + $0xb0] sm:$0xff] 0.0
          %458 = vst [vmem:[#allocation2 + $0xb8] sm:$0xff] 0.0
          %459 = vst [vmem:[#allocation2 + $0xc0] sm:$0xff] 0.0
          %460 = vst [vmem:[#allocation2 + $0xc8] sm:$0xff] 0.0
          %461 = vst [vmem:[#allocation2 + $0xd0] sm:$0xff] 0.0
          %462 = vst [vmem:[#allocation2 + $0xd8] sm:$0xff] 0.0
          %463 = vst [vmem:[#allocation2 + $0xe0] sm:$0xff] 0.0
          %464 = vst [vmem:[#allocation2 + $0xe8] sm:$0xff] 0.0
          %465 = vst [vmem:[#allocation2 + $0xf0] sm:$0xff] 0.0
          %466 = vst [vmem:[#allocation2 + $0xf8] sm:$0xff] 0.0
        $region82: #{graphsage_forward.3} parent=73 // pred_fallthru
          _
        %s467 = smul.u32 %s21, 256
        %v468 = vld [vmem:[#allocation2] sm:$0xff]
        %v469 = vld [vmem:[#allocation2 + $0x8] sm:$0xff]
        %v470 = vld [vmem:[#allocation2 + $0x10] sm:$0xff]
        %v471 = vld [vmem:[#allocation2 + $0x18] sm:$0xff]
        %v472 = vld [vmem:[#allocation2 + $0x20] sm:$0xff]
        %v473 = vld [vmem:[#allocation2 + $0x28] sm:$0xff]
        %v474 = vld [vmem:[#allocation2 + $0x30] sm:$0xff]
        %v475 = vld [vmem:[#allocation2 + $0x38] sm:$0xff]
        %v476 = vld [vmem:[#allocation2 + $0x40] sm:$0xff]
        %v477 = vld [vmem:[#allocation2 + $0x48] sm:$0xff]
        %v478 = vld [vmem:[#allocation2 + $0x50] sm:$0xff]
        %v479 = vld [vmem:[#allocation2 + $0x58] sm:$0xff]
        %v480 = vld [vmem:[#allocation2 + $0x60] sm:$0xff]
        %v481 = vld [vmem:[#allocation2 + $0x68] sm:$0xff]
        %v482 = vld [vmem:[#allocation2 + $0x70] sm:$0xff]
        %v483 = vld [vmem:[#allocation2 + $0x78] sm:$0xff]
        %v484 = vld [vmem:[#allocation2 + $0x80] sm:$0xff]
        %v485 = vld [vmem:[#allocation2 + $0x88] sm:$0xff]
        %v486 = vld [vmem:[#allocation2 + $0x90] sm:$0xff]
        %v487 = vld [vmem:[#allocation2 + $0x98] sm:$0xff]
        %v488 = vld [vmem:[#allocation2 + $0xa0] sm:$0xff]
        %v489 = vld [vmem:[#allocation2 + $0xa8] sm:$0xff]
        %v490 = vld [vmem:[#allocation2 + $0xb0] sm:$0xff]
        %v491 = vld [vmem:[#allocation2 + $0xb8] sm:$0xff]
        %v492 = vld [vmem:[#allocation2 + $0xc0] sm:$0xff]
        %v493 = vld [vmem:[#allocation2 + $0xc8] sm:$0xff]
        %v494 = vld [vmem:[#allocation2 + $0xd0] sm:$0xff]
        %v495 = vld [vmem:[#allocation2 + $0xd8] sm:$0xff]
        %v496 = vld [vmem:[#allocation2 + $0xe0] sm:$0xff]
        %v497 = vld [vmem:[#allocation2 + $0xe8] sm:$0xff]
        %v498 = vld [vmem:[#allocation2 + $0xf0] sm:$0xff]
        %v499 = vld [vmem:[#allocation2 + $0xf8] sm:$0xff]
        %v500 = vld [vmem:[%s384] sm:$0xff]
        %v501 = vld [vmem:[%s384 + $0x8] sm:$0xff]
        %v502 = vld [vmem:[%s384 + $0x10] sm:$0xff]
        %v503 = vld [vmem:[%s384 + $0x18] sm:$0xff]
        %v504 = vld [vmem:[%s384 + $0x20] sm:$0xff]
        %v505 = vld [vmem:[%s384 + $0x28] sm:$0xff]
        %v506 = vld [vmem:[%s384 + $0x30] sm:$0xff]
        %v507 = vld [vmem:[%s384 + $0x38] sm:$0xff]
        %v508 = vld [vmem:[%s384 + $0x40] sm:$0xff]
        %v509 = vld [vmem:[%s384 + $0x48] sm:$0xff]
        %v510 = vld [vmem:[%s384 + $0x50] sm:$0xff]
        %v511 = vld [vmem:[%s384 + $0x58] sm:$0xff]
        %v512 = vld [vmem:[%s384 + $0x60] sm:$0xff]
        %v513 = vld [vmem:[%s384 + $0x68] sm:$0xff]
        %v514 = vld [vmem:[%s384 + $0x70] sm:$0xff]
        %v515 = vld [vmem:[%s384 + $0x78] sm:$0xff]
        %v516 = vld [vmem:[%s384 + $0x80] sm:$0xff]
        %v517 = vld [vmem:[%s384 + $0x88] sm:$0xff]
        %v518 = vld [vmem:[%s384 + $0x90] sm:$0xff]
        %v519 = vld [vmem:[%s384 + $0x98] sm:$0xff]
        %v520 = vld [vmem:[%s384 + $0xa0] sm:$0xff]
        %v521 = vld [vmem:[%s384 + $0xa8] sm:$0xff]
        %v522 = vld [vmem:[%s384 + $0xb0] sm:$0xff]
        %v523 = vld [vmem:[%s384 + $0xb8] sm:$0xff]
        %v524 = vld [vmem:[%s384 + $0xc0] sm:$0xff]
        %v525 = vld [vmem:[%s384 + $0xc8] sm:$0xff]
        %v526 = vld [vmem:[%s384 + $0xd0] sm:$0xff]
        %v527 = vld [vmem:[%s384 + $0xd8] sm:$0xff]
        %v528 = vld [vmem:[%s384 + $0xe0] sm:$0xff]
        %v529 = vld [vmem:[%s384 + $0xe8] sm:$0xff]
        %v530 = vld [vmem:[%s384 + $0xf0] sm:$0xff]
        %v531 = vld [vmem:[%s384 + $0xf8] sm:$0xff]
        %s532 = sshra.s32 %s467, 3
        %s533 = sand.u32 %s467, 7
        %s534 = smul.addr %s532, 4
        %s535 = scalar_lea.vmem %s1, %s534
        %v536 = vld [vmem:[%s535] sm:$0xf]
        %v537 = vld [vmem:[%s535 + $0x4] sm:$0xf]
        %v538 = vld [vmem:[%s535 + $0x8] sm:$0xf]
        %v539 = vld [vmem:[%s535 + $0xc] sm:$0xf]
        %v540 = vld [vmem:[%s535 + $0x10] sm:$0xf]
        %v541 = vld [vmem:[%s535 + $0x14] sm:$0xf]
        %v542 = vld [vmem:[%s535 + $0x18] sm:$0xf]
        %v543 = vld [vmem:[%s535 + $0x1c] sm:$0xf]
        %v544 = vld [vmem:[%s535 + $0x20] sm:$0xf]
        %v545 = vld [vmem:[%s535 + $0x24] sm:$0xf]
        %v546 = vld [vmem:[%s535 + $0x28] sm:$0xf]
        %v547 = vld [vmem:[%s535 + $0x2c] sm:$0xf]
        %v548 = vld [vmem:[%s535 + $0x30] sm:$0xf]
        %v549 = vld [vmem:[%s535 + $0x34] sm:$0xf]
        %v550 = vld [vmem:[%s535 + $0x38] sm:$0xf]
        %v551 = vld [vmem:[%s535 + $0x3c] sm:$0xf]
        %v552 = vld [vmem:[%s535 + $0x40] sm:$0xf]
        %v553 = vld [vmem:[%s535 + $0x44] sm:$0xf]
        %v554 = vld [vmem:[%s535 + $0x48] sm:$0xf]
        %v555 = vld [vmem:[%s535 + $0x4c] sm:$0xf]
        %v556 = vld [vmem:[%s535 + $0x50] sm:$0xf]
        %v557 = vld [vmem:[%s535 + $0x54] sm:$0xf]
        %v558 = vld [vmem:[%s535 + $0x58] sm:$0xf]
        %v559 = vld [vmem:[%s535 + $0x5c] sm:$0xf]
        %v560 = vld [vmem:[%s535 + $0x60] sm:$0xf]
        %v561 = vld [vmem:[%s535 + $0x64] sm:$0xf]
        %v562 = vld [vmem:[%s535 + $0x68] sm:$0xf]
        %v563 = vld [vmem:[%s535 + $0x6c] sm:$0xf]
        %v564 = vld [vmem:[%s535 + $0x70] sm:$0xf]
        %v565 = vld [vmem:[%s535 + $0x74] sm:$0xf]
        %v566 = vld [vmem:[%s535 + $0x78] sm:$0xf]
        %v567 = vld [vmem:[%s535 + $0x7c] sm:$0xf]
        %v600 = vunpack.c.l.b16 %v500
        %v601 = vunpack.c.h.b16 %v500
        %v602 = vunpack.c.l.b16 %v501
        %v603 = vunpack.c.h.b16 %v501
        %v604 = vunpack.c.l.b16 %v502
        %v605 = vunpack.c.h.b16 %v502
        %v606 = vunpack.c.l.b16 %v503
        %v607 = vunpack.c.h.b16 %v503
        %v608 = vunpack.c.l.b16 %v504
        %v609 = vunpack.c.h.b16 %v504
        %v610 = vunpack.c.l.b16 %v505
        %v611 = vunpack.c.h.b16 %v505
        %v612 = vunpack.c.l.b16 %v506
        %v613 = vunpack.c.h.b16 %v506
        %v614 = vunpack.c.l.b16 %v507
        %v615 = vunpack.c.h.b16 %v507
        %v616 = vunpack.c.l.b16 %v508
        %v617 = vunpack.c.h.b16 %v508
        %v618 = vunpack.c.l.b16 %v509
        %v619 = vunpack.c.h.b16 %v509
        %v620 = vunpack.c.l.b16 %v510
        %v621 = vunpack.c.h.b16 %v510
        %v622 = vunpack.c.l.b16 %v511
        %v623 = vunpack.c.h.b16 %v511
        %v624 = vunpack.c.l.b16 %v512
        %v625 = vunpack.c.h.b16 %v512
        %v626 = vunpack.c.l.b16 %v513
        %v627 = vunpack.c.h.b16 %v513
        %v628 = vunpack.c.l.b16 %v514
        %v629 = vunpack.c.h.b16 %v514
        %v630 = vunpack.c.l.b16 %v515
        %v631 = vunpack.c.h.b16 %v515
        %v632 = vunpack.c.l.b16 %v516
        %v633 = vunpack.c.h.b16 %v516
        %v634 = vunpack.c.l.b16 %v517
        %v635 = vunpack.c.h.b16 %v517
        %v636 = vunpack.c.l.b16 %v518
        %v637 = vunpack.c.h.b16 %v518
        %v638 = vunpack.c.l.b16 %v519
        %v639 = vunpack.c.h.b16 %v519
        %v640 = vunpack.c.l.b16 %v520
        %v641 = vunpack.c.h.b16 %v520
        %v642 = vunpack.c.l.b16 %v521
        %v643 = vunpack.c.h.b16 %v521
        %v644 = vunpack.c.l.b16 %v522
        %v645 = vunpack.c.h.b16 %v522
        %v646 = vunpack.c.l.b16 %v523
        %v647 = vunpack.c.h.b16 %v523
        %v648 = vunpack.c.l.b16 %v524
        %v649 = vunpack.c.h.b16 %v524
        %v650 = vunpack.c.l.b16 %v525
        %v651 = vunpack.c.h.b16 %v525
        %v652 = vunpack.c.l.b16 %v526
        %v653 = vunpack.c.h.b16 %v526
        %v654 = vunpack.c.l.b16 %v527
        %v655 = vunpack.c.h.b16 %v527
        %v656 = vunpack.c.l.b16 %v528
        %v657 = vunpack.c.h.b16 %v528
        %v658 = vunpack.c.l.b16 %v529
        %v659 = vunpack.c.h.b16 %v529
        %v660 = vunpack.c.l.b16 %v530
        %v661 = vunpack.c.h.b16 %v530
        %v662 = vunpack.c.l.b16 %v531
        %v663 = vunpack.c.h.b16 %v531
        %v664 = vpack.c.b16 %v602, %v600
        %v665 = vpack.c.b16 %v603, %v601
        %v666 = vpack.c.b16 %v606, %v604
        %v667 = vpack.c.b16 %v607, %v605
        %v668 = vpack.c.b16 %v610, %v608
        %v669 = vpack.c.b16 %v611, %v609
        %v670 = vpack.c.b16 %v614, %v612
        %v671 = vpack.c.b16 %v615, %v613
        %v672 = vpack.c.b16 %v618, %v616
        %v673 = vpack.c.b16 %v619, %v617
        %v674 = vpack.c.b16 %v622, %v620
        %v675 = vpack.c.b16 %v623, %v621
        %v676 = vpack.c.b16 %v626, %v624
        %v677 = vpack.c.b16 %v627, %v625
        %v678 = vpack.c.b16 %v630, %v628
        %v679 = vpack.c.b16 %v631, %v629
        %v680 = vpack.c.b16 %v634, %v632
        %v681 = vpack.c.b16 %v635, %v633
        %v682 = vpack.c.b16 %v638, %v636
        %v683 = vpack.c.b16 %v639, %v637
        %v684 = vpack.c.b16 %v642, %v640
        %v685 = vpack.c.b16 %v643, %v641
        %v686 = vpack.c.b16 %v646, %v644
        %v687 = vpack.c.b16 %v647, %v645
        %v688 = vpack.c.b16 %v650, %v648
        %v689 = vpack.c.b16 %v651, %v649
        %v690 = vpack.c.b16 %v654, %v652
        %v691 = vpack.c.b16 %v655, %v653
        %v692 = vpack.c.b16 %v658, %v656
        %v693 = vpack.c.b16 %v659, %v657
        %v694 = vpack.c.b16 %v662, %v660
        %v695 = vpack.c.b16 %v663, %v661
        %v760 = vunpack.c.l.b16 %v536
        %v761 = vunpack.c.l.b16 %v537
        %v762 = vunpack.c.l.b16 %v538
        %v763 = vunpack.c.l.b16 %v539
        %v764 = vunpack.c.l.b16 %v540
        %v765 = vunpack.c.l.b16 %v541
        %v766 = vunpack.c.l.b16 %v542
        %v767 = vunpack.c.l.b16 %v543
        %v768 = vunpack.c.l.b16 %v544
        %v769 = vunpack.c.l.b16 %v545
        %v770 = vunpack.c.l.b16 %v546
        %v771 = vunpack.c.l.b16 %v547
        %v772 = vunpack.c.l.b16 %v548
        %v773 = vunpack.c.l.b16 %v549
        %v774 = vunpack.c.l.b16 %v550
        %v775 = vunpack.c.l.b16 %v551
        %v776 = vunpack.c.l.b16 %v552
        %v777 = vunpack.c.l.b16 %v553
        %v778 = vunpack.c.l.b16 %v554
        %v779 = vunpack.c.l.b16 %v555
        %v780 = vunpack.c.l.b16 %v556
        %v781 = vunpack.c.l.b16 %v557
        %v782 = vunpack.c.l.b16 %v558
        %v783 = vunpack.c.l.b16 %v559
        %v784 = vunpack.c.l.b16 %v560
        %v785 = vunpack.c.l.b16 %v561
        %v786 = vunpack.c.l.b16 %v562
        %v787 = vunpack.c.l.b16 %v563
        %v788 = vunpack.c.l.b16 %v564
        %v789 = vunpack.c.l.b16 %v565
        %v790 = vunpack.c.l.b16 %v566
        %v791 = vunpack.c.l.b16 %v567
        %v792 = vpack.c.b16 %v761, %v760
        %v793 = vpack.c.b16 %v763, %v762
        %v794 = vpack.c.b16 %v765, %v764
        %v795 = vpack.c.b16 %v767, %v766
        %v796 = vpack.c.b16 %v769, %v768
        %v797 = vpack.c.b16 %v771, %v770
        %v798 = vpack.c.b16 %v773, %v772
        %v799 = vpack.c.b16 %v775, %v774
        %v800 = vpack.c.b16 %v777, %v776
        %v801 = vpack.c.b16 %v779, %v778
        %v802 = vpack.c.b16 %v781, %v780
        %v803 = vpack.c.b16 %v783, %v782
        %v804 = vpack.c.b16 %v785, %v784
        %v805 = vpack.c.b16 %v787, %v786
        %v806 = vpack.c.b16 %v789, %v788
        %v807 = vpack.c.b16 %v791, %v790
        %824 = vmatprep.subr.bf16.mxu0 0
        %825 = vmatpush1.bf16.msra.mxu0 %v799
        %826 = vmatprep.subr.bf16.mxu0 0
        %827 = vmatpush1.bf16.msra.mxu0 %v798
        %828 = vmatprep.subr.bf16.mxu0 0
        %829 = vmatpush1.bf16.msra.mxu0 %v797
        %830 = vmatprep.subr.bf16.mxu0 0
        %831 = vmatpush1.bf16.msra.mxu0 %v796
        %832 = vmatprep.subr.bf16.mxu0 0
        %833 = vmatpush1.bf16.msra.mxu0 %v795
        %834 = vmatprep.subr.bf16.mxu0 0
        %835 = vmatpush1.bf16.msra.mxu0 %v794
        %836 = vmatprep.subr.bf16.mxu0 0
        %837 = vmatpush1.bf16.msra.mxu0 %v793
        %838 = vmatprep.subr.bf16.mxu0 0
        %839 = vmatpush1.bf16.msra.mxu0 %v792
        %840 = vmatprep.subr.bf16.mxu0 0
        %841 = vmatpush2.bf16.msra.mxu0 %v807
        %842 = vmatprep.subr.bf16.mxu0 0
        %843 = vmatpush2.bf16.msra.mxu0 %v806
        %844 = vmatprep.subr.bf16.mxu0 0
        %845 = vmatpush2.bf16.msra.mxu0 %v805
        %846 = vmatprep.subr.bf16.mxu0 0
        %847 = vmatpush2.bf16.msra.mxu0 %v804
        %848 = vmatprep.subr.bf16.mxu0 0
        %849 = vmatpush2.bf16.msra.mxu0 %v803
        %850 = vmatprep.subr.bf16.mxu0 0
        %851 = vmatpush2.bf16.msra.mxu0 %v802
        %852 = vmatprep.subr.bf16.mxu0 0
        %853 = vmatpush2.bf16.msra.mxu0 %v801
        %854 = vmatprep.subr.bf16.mxu0 0
        %855 = vmatpush2.bf16.msra.mxu0 %v800
        %856 = vmatprep.mubr.bf16.mxu0 %v665
        %857 = vmatmul.mubr.bf16.gmra.mxu0 %v664
        %v858 = vpop.f32.mrf.mxu0
        %v859 = vadd.f32 0.0, %v858
        %v860 = vpop.f32.mrf.mxu0
        %v861 = vpop.f32.mrf.mxu0
        %v862 = vadd.f32 0.0, %v861
        %v863 = vpop.f32.mrf.mxu0
        %864 = vmatprep.mubr.bf16.mxu0 %v667
        %865 = vmatmul.mubr.bf16.gmra.mxu0 %v666
        %v866 = vpop.f32.mrf.mxu0
        %v867 = vadd.f32 0.0, %v866
        %v868 = vpop.f32.mrf.mxu0
        %v869 = vpop.f32.mrf.mxu0
        %v870 = vadd.f32 0.0, %v869
        %v871 = vpop.f32.mrf.mxu0
        %872 = vmatprep.mubr.bf16.mxu0 %v669
        %873 = vmatmul.mubr.bf16.gmra.mxu0 %v668
        %v874 = vpop.f32.mrf.mxu0
        %v875 = vadd.f32 0.0, %v874
        %v876 = vpop.f32.mrf.mxu0
        %v877 = vpop.f32.mrf.mxu0
        %v878 = vadd.f32 0.0, %v877
        %v879 = vpop.f32.mrf.mxu0
        %880 = vmatprep.mubr.bf16.mxu0 %v671
        %881 = vmatmul.mubr.bf16.gmra.mxu0 %v670
        %v882 = vpop.f32.mrf.mxu0
        %v883 = vadd.f32 0.0, %v882
        %v884 = vpop.f32.mrf.mxu0
        %v885 = vpop.f32.mrf.mxu0
        %v886 = vadd.f32 0.0, %v885
        %v887 = vpop.f32.mrf.mxu0
        %888 = vmatprep.mubr.bf16.mxu0 %v673
        %889 = vmatmul.mubr.bf16.gmra.mxu0 %v672
        %v890 = vpop.f32.mrf.mxu0
        %v891 = vadd.f32 0.0, %v890
        %v892 = vpop.f32.mrf.mxu0
        %v893 = vpop.f32.mrf.mxu0
        %v894 = vadd.f32 0.0, %v893
        %v895 = vpop.f32.mrf.mxu0
        %896 = vmatprep.mubr.bf16.mxu0 %v675
        %897 = vmatmul.mubr.bf16.gmra.mxu0 %v674
        %v898 = vpop.f32.mrf.mxu0
        %v899 = vadd.f32 0.0, %v898
        %v900 = vpop.f32.mrf.mxu0
        %v901 = vpop.f32.mrf.mxu0
        %v902 = vadd.f32 0.0, %v901
        %v903 = vpop.f32.mrf.mxu0
        %904 = vmatprep.mubr.bf16.mxu0 %v677
        %905 = vmatmul.mubr.bf16.gmra.mxu0 %v676
        %v906 = vpop.f32.mrf.mxu0
        %v907 = vadd.f32 0.0, %v906
        %v908 = vpop.f32.mrf.mxu0
        %v909 = vpop.f32.mrf.mxu0
        %v910 = vadd.f32 0.0, %v909
        %v911 = vpop.f32.mrf.mxu0
        %912 = vmatprep.mubr.bf16.mxu0 %v679
        %913 = vmatmul.mubr.bf16.gmra.mxu0 %v678
        %v914 = vpop.f32.mrf.mxu0
        %v915 = vadd.f32 0.0, %v914
        %v916 = vpop.f32.mrf.mxu0
        %v917 = vpop.f32.mrf.mxu0
        %v918 = vadd.f32 0.0, %v917
        %v919 = vpop.f32.mrf.mxu0
        %920 = vmatprep.mubr.bf16.mxu0 %v681
        %921 = vmatmul.mubr.bf16.gmra.mxu0 %v680
        %v922 = vpop.f32.mrf.mxu0
        %v923 = vadd.f32 0.0, %v922
        %v924 = vpop.f32.mrf.mxu0
        %v925 = vpop.f32.mrf.mxu0
        %v926 = vadd.f32 0.0, %v925
        %v927 = vpop.f32.mrf.mxu0
        %928 = vmatprep.mubr.bf16.mxu0 %v683
        %929 = vmatmul.mubr.bf16.gmra.mxu0 %v682
        %v930 = vpop.f32.mrf.mxu0
        %v931 = vadd.f32 0.0, %v930
        %v932 = vpop.f32.mrf.mxu0
        %v933 = vpop.f32.mrf.mxu0
        %v934 = vadd.f32 0.0, %v933
        %v935 = vpop.f32.mrf.mxu0
        %936 = vmatprep.mubr.bf16.mxu0 %v685
        %937 = vmatmul.mubr.bf16.gmra.mxu0 %v684
        %v938 = vpop.f32.mrf.mxu0
        %v939 = vadd.f32 0.0, %v938
        %v940 = vpop.f32.mrf.mxu0
        %v941 = vpop.f32.mrf.mxu0
        %v942 = vadd.f32 0.0, %v941
        %v943 = vpop.f32.mrf.mxu0
        %944 = vmatprep.mubr.bf16.mxu0 %v687
        %945 = vmatmul.mubr.bf16.gmra.mxu0 %v686
        %v946 = vpop.f32.mrf.mxu0
        %v947 = vadd.f32 0.0, %v946
        %v948 = vpop.f32.mrf.mxu0
        %v949 = vpop.f32.mrf.mxu0
        %v950 = vadd.f32 0.0, %v949
        %v951 = vpop.f32.mrf.mxu0
        %952 = vmatprep.mubr.bf16.mxu0 %v689
        %953 = vmatmul.mubr.bf16.gmra.mxu0 %v688
        %v954 = vpop.f32.mrf.mxu0
        %v955 = vadd.f32 0.0, %v954
        %v956 = vpop.f32.mrf.mxu0
        %v957 = vpop.f32.mrf.mxu0
        %v958 = vadd.f32 0.0, %v957
        %v959 = vpop.f32.mrf.mxu0
        %960 = vmatprep.mubr.bf16.mxu0 %v691
        %961 = vmatmul.mubr.bf16.gmra.mxu0 %v690
        %v962 = vpop.f32.mrf.mxu0
        %v963 = vadd.f32 0.0, %v962
        %v964 = vpop.f32.mrf.mxu0
        %v965 = vpop.f32.mrf.mxu0
        %v966 = vadd.f32 0.0, %v965
        %v967 = vpop.f32.mrf.mxu0
        %968 = vmatprep.mubr.bf16.mxu0 %v693
        %969 = vmatmul.mubr.bf16.gmra.mxu0 %v692
        %v970 = vpop.f32.mrf.mxu0
        %v971 = vadd.f32 0.0, %v970
        %v972 = vpop.f32.mrf.mxu0
        %v973 = vpop.f32.mrf.mxu0
        %v974 = vadd.f32 0.0, %v973
        %v975 = vpop.f32.mrf.mxu0
        %976 = vmatprep.mubr.bf16.mxu0 %v695
        %977 = vmatmul.mubr.bf16.gmra.mxu0 %v694
        %v978 = vpop.f32.mrf.mxu0
        %v979 = vadd.f32 0.0, %v978
        %v980 = vpop.f32.mrf.mxu0
        %v981 = vpop.f32.mrf.mxu0
        %v982 = vadd.f32 0.0, %v981
        %v983 = vpop.f32.mrf.mxu0
        %984 = vdwg.mxu0
        %v985 = vadd.f32 %v468, %v859
        %v986 = vadd.f32 %v469, %v862
        %v987 = vadd.f32 %v470, %v867
        %v988 = vadd.f32 %v471, %v870
        %v989 = vadd.f32 %v472, %v875
        %v990 = vadd.f32 %v473, %v878
        %v991 = vadd.f32 %v474, %v883
        %v992 = vadd.f32 %v475, %v886
        %v993 = vadd.f32 %v476, %v891
        %v994 = vadd.f32 %v477, %v894
        %v995 = vadd.f32 %v478, %v899
        %v996 = vadd.f32 %v479, %v902
        %v997 = vadd.f32 %v480, %v907
        %v998 = vadd.f32 %v481, %v910
        %v999 = vadd.f32 %v482, %v915
        %v1000 = vadd.f32 %v483, %v918
        %v1001 = vadd.f32 %v484, %v923
        %v1002 = vadd.f32 %v485, %v926
        %v1003 = vadd.f32 %v486, %v931
        %v1004 = vadd.f32 %v487, %v934
        %v1005 = vadd.f32 %v488, %v939
        %v1006 = vadd.f32 %v489, %v942
        %v1007 = vadd.f32 %v490, %v947
        %v1008 = vadd.f32 %v491, %v950
        %v1009 = vadd.f32 %v492, %v955
        %v1010 = vadd.f32 %v493, %v958
        %v1011 = vadd.f32 %v494, %v963
        %v1012 = vadd.f32 %v495, %v966
        %v1013 = vadd.f32 %v496, %v971
        %v1014 = vadd.f32 %v497, %v974
        %v1015 = vadd.f32 %v498, %v979
        %v1016 = vadd.f32 %v499, %v982
        %1017 = vst [vmem:[#allocation2] sm:$0xff] %v985
        %1018 = vst [vmem:[#allocation2 + $0x8] sm:$0xff] %v986
        %1019 = vst [vmem:[#allocation2 + $0x10] sm:$0xff] %v987
        %1020 = vst [vmem:[#allocation2 + $0x18] sm:$0xff] %v988
        %1021 = vst [vmem:[#allocation2 + $0x20] sm:$0xff] %v989
        %1022 = vst [vmem:[#allocation2 + $0x28] sm:$0xff] %v990
        %1023 = vst [vmem:[#allocation2 + $0x30] sm:$0xff] %v991
        %1024 = vst [vmem:[#allocation2 + $0x38] sm:$0xff] %v992
        %1025 = vst [vmem:[#allocation2 + $0x40] sm:$0xff] %v993
        %1026 = vst [vmem:[#allocation2 + $0x48] sm:$0xff] %v994
        %1027 = vst [vmem:[#allocation2 + $0x50] sm:$0xff] %v995
        %1028 = vst [vmem:[#allocation2 + $0x58] sm:$0xff] %v996
        %1029 = vst [vmem:[#allocation2 + $0x60] sm:$0xff] %v997
        %1030 = vst [vmem:[#allocation2 + $0x68] sm:$0xff] %v998
        %1031 = vst [vmem:[#allocation2 + $0x70] sm:$0xff] %v999
        %1032 = vst [vmem:[#allocation2 + $0x78] sm:$0xff] %v1000
        %1033 = vst [vmem:[#allocation2 + $0x80] sm:$0xff] %v1001
        %1034 = vst [vmem:[#allocation2 + $0x88] sm:$0xff] %v1002
        %1035 = vst [vmem:[#allocation2 + $0x90] sm:$0xff] %v1003
        %1036 = vst [vmem:[#allocation2 + $0x98] sm:$0xff] %v1004
        %1037 = vst [vmem:[#allocation2 + $0xa0] sm:$0xff] %v1005
        %1038 = vst [vmem:[#allocation2 + $0xa8] sm:$0xff] %v1006
        %1039 = vst [vmem:[#allocation2 + $0xb0] sm:$0xff] %v1007
        %1040 = vst [vmem:[#allocation2 + $0xb8] sm:$0xff] %v1008
        %1041 = vst [vmem:[#allocation2 + $0xc0] sm:$0xff] %v1009
        %1042 = vst [vmem:[#allocation2 + $0xc8] sm:$0xff] %v1010
        %1043 = vst [vmem:[#allocation2 + $0xd0] sm:$0xff] %v1011
        %1044 = vst [vmem:[#allocation2 + $0xd8] sm:$0xff] %v1012
        %1045 = vst [vmem:[#allocation2 + $0xe0] sm:$0xff] %v1013
        %1046 = vst [vmem:[#allocation2 + $0xe8] sm:$0xff] %v1014
        %1047 = vst [vmem:[#allocation2 + $0xf0] sm:$0xff] %v1015
        %1048 = vst [vmem:[#allocation2 + $0xf8] sm:$0xff] %v1016
        %p1049 = scmp.eq.s32.totalorder %s21, 1
        // Predicated region
        $region83: #{graphsage_forward.3} parent=73 // pred_check
          %p1050 = pneg %p1049
        $region84: #{graphsage_forward.3} parent=73 // pred_check_branch
          %1052 = sbr.rel (%p1050) target = $region86
        $region85: #{graphsage_forward.3} parent=73 // pred_region
          %v1053 = vld [vmem:[#allocation2] sm:$0xff]
          %v1054 = vld [vmem:[#allocation2 + $0x8] sm:$0xff]
          %v1055 = vld [vmem:[#allocation2 + $0x10] sm:$0xff]
          %v1056 = vld [vmem:[#allocation2 + $0x18] sm:$0xff]
          %v1057 = vld [vmem:[#allocation2 + $0x20] sm:$0xff]
          %v1058 = vld [vmem:[#allocation2 + $0x28] sm:$0xff]
          %v1059 = vld [vmem:[#allocation2 + $0x30] sm:$0xff]
          %v1060 = vld [vmem:[#allocation2 + $0x38] sm:$0xff]
          %v1061 = vld [vmem:[#allocation2 + $0x40] sm:$0xff]
          %v1062 = vld [vmem:[#allocation2 + $0x48] sm:$0xff]
          %v1063 = vld [vmem:[#allocation2 + $0x50] sm:$0xff]
          %v1064 = vld [vmem:[#allocation2 + $0x58] sm:$0xff]
          %v1065 = vld [vmem:[#allocation2 + $0x60] sm:$0xff]
          %v1066 = vld [vmem:[#allocation2 + $0x68] sm:$0xff]
          %v1067 = vld [vmem:[#allocation2 + $0x70] sm:$0xff]
          %v1068 = vld [vmem:[#allocation2 + $0x78] sm:$0xff]
          %v1069 = vld [vmem:[#allocation2 + $0x80] sm:$0xff]
          %v1070 = vld [vmem:[#allocation2 + $0x88] sm:$0xff]
          %v1071 = vld [vmem:[#allocation2 + $0x90] sm:$0xff]
          %v1072 = vld [vmem:[#allocation2 + $0x98] sm:$0xff]
          %v1073 = vld [vmem:[#allocation2 + $0xa0] sm:$0xff]
          %v1074 = vld [vmem:[#allocation2 + $0xa8] sm:$0xff]
          %v1075 = vld [vmem:[#allocation2 + $0xb0] sm:$0xff]
          %v1076 = vld [vmem:[#allocation2 + $0xb8] sm:$0xff]
          %v1077 = vld [vmem:[#allocation2 + $0xc0] sm:$0xff]
          %v1078 = vld [vmem:[#allocation2 + $0xc8] sm:$0xff]
          %v1079 = vld [vmem:[#allocation2 + $0xd0] sm:$0xff]
          %v1080 = vld [vmem:[#allocation2 + $0xd8] sm:$0xff]
          %v1081 = vld [vmem:[#allocation2 + $0xe0] sm:$0xff]
          %v1082 = vld [vmem:[#allocation2 + $0xe8] sm:$0xff]
          %v1083 = vld [vmem:[#allocation2 + $0xf0] sm:$0xff]
          %v1084 = vld [vmem:[#allocation2 + $0xf8] sm:$0xff]
          %v1085 = vld [vmem:[%s422] sm:$0xff]
          %v1086 = vld [vmem:[%s422 + $0x8] sm:$0xff]
          %v1087 = vld [vmem:[%s422 + $0x10] sm:$0xff]
          %v1088 = vld [vmem:[%s422 + $0x18] sm:$0xff]
          %v1089 = vld [vmem:[%s422 + $0x20] sm:$0xff]
          %v1090 = vld [vmem:[%s422 + $0x28] sm:$0xff]
          %v1091 = vld [vmem:[%s422 + $0x30] sm:$0xff]
          %v1092 = vld [vmem:[%s422 + $0x38] sm:$0xff]
          %v1093 = vld [vmem:[%s422 + $0x40] sm:$0xff]
          %v1094 = vld [vmem:[%s422 + $0x48] sm:$0xff]
          %v1095 = vld [vmem:[%s422 + $0x50] sm:$0xff]
          %v1096 = vld [vmem:[%s422 + $0x58] sm:$0xff]
          %v1097 = vld [vmem:[%s422 + $0x60] sm:$0xff]
          %v1098 = vld [vmem:[%s422 + $0x68] sm:$0xff]
          %v1099 = vld [vmem:[%s422 + $0x70] sm:$0xff]
          %v1100 = vld [vmem:[%s422 + $0x78] sm:$0xff]
          %v1101 = vld [vmem:[%s422 + $0x80] sm:$0xff]
          %v1102 = vld [vmem:[%s422 + $0x88] sm:$0xff]
          %v1103 = vld [vmem:[%s422 + $0x90] sm:$0xff]
          %v1104 = vld [vmem:[%s422 + $0x98] sm:$0xff]
          %v1105 = vld [vmem:[%s422 + $0xa0] sm:$0xff]
          %v1106 = vld [vmem:[%s422 + $0xa8] sm:$0xff]
          %v1107 = vld [vmem:[%s422 + $0xb0] sm:$0xff]
          %v1108 = vld [vmem:[%s422 + $0xb8] sm:$0xff]
          %v1109 = vld [vmem:[%s422 + $0xc0] sm:$0xff]
          %v1110 = vld [vmem:[%s422 + $0xc8] sm:$0xff]
          %v1111 = vld [vmem:[%s422 + $0xd0] sm:$0xff]
          %v1112 = vld [vmem:[%s422 + $0xd8] sm:$0xff]
          %v1113 = vld [vmem:[%s422 + $0xe0] sm:$0xff]
          %v1114 = vld [vmem:[%s422 + $0xe8] sm:$0xff]
          %v1115 = vld [vmem:[%s422 + $0xf0] sm:$0xff]
          %v1116 = vld [vmem:[%s422 + $0xf8] sm:$0xff]
          %v1117 = vld [vmem:[%s3] sm:$0xf]
          %v1118 = vld [vmem:[%s3 + $0x4] sm:$0xf]
          %v1119 = vld [vmem:[%s3 + $0x8] sm:$0xf]
          %v1120 = vld [vmem:[%s3 + $0xc] sm:$0xf]
          %v1121 = vld [vmem:[%s3 + $0x10] sm:$0xf]
          %v1122 = vld [vmem:[%s3 + $0x14] sm:$0xf]
          %v1123 = vld [vmem:[%s3 + $0x18] sm:$0xf]
          %v1124 = vld [vmem:[%s3 + $0x1c] sm:$0xf]
          %v1125 = vld [vmem:[%s3 + $0x20] sm:$0xf]
          %v1126 = vld [vmem:[%s3 + $0x24] sm:$0xf]
          %v1127 = vld [vmem:[%s3 + $0x28] sm:$0xf]
          %v1128 = vld [vmem:[%s3 + $0x2c] sm:$0xf]
          %v1129 = vld [vmem:[%s3 + $0x30] sm:$0xf]
          %v1130 = vld [vmem:[%s3 + $0x34] sm:$0xf]
          %v1131 = vld [vmem:[%s3 + $0x38] sm:$0xf]
          %v1132 = vld [vmem:[%s3 + $0x3c] sm:$0xf]
          %v1133 = vld [vmem:[%s3 + $0x40] sm:$0xf]
          %v1134 = vld [vmem:[%s3 + $0x44] sm:$0xf]
          %v1135 = vld [vmem:[%s3 + $0x48] sm:$0xf]
          %v1136 = vld [vmem:[%s3 + $0x4c] sm:$0xf]
          %v1137 = vld [vmem:[%s3 + $0x50] sm:$0xf]
          %v1138 = vld [vmem:[%s3 + $0x54] sm:$0xf]
          %v1139 = vld [vmem:[%s3 + $0x58] sm:$0xf]
          %v1140 = vld [vmem:[%s3 + $0x5c] sm:$0xf]
          %v1141 = vld [vmem:[%s3 + $0x60] sm:$0xf]
          %v1142 = vld [vmem:[%s3 + $0x64] sm:$0xf]
          %v1143 = vld [vmem:[%s3 + $0x68] sm:$0xf]
          %v1144 = vld [vmem:[%s3 + $0x6c] sm:$0xf]
          %v1145 = vld [vmem:[%s3 + $0x70] sm:$0xf]
          %v1146 = vld [vmem:[%s3 + $0x74] sm:$0xf]
          %v1147 = vld [vmem:[%s3 + $0x78] sm:$0xf]
          %v1148 = vld [vmem:[%s3 + $0x7c] sm:$0xf]
          %v1181 = vunpack.c.l.b16 %v1085
          %v1182 = vunpack.c.h.b16 %v1085
          %v1183 = vunpack.c.l.b16 %v1086
          %v1184 = vunpack.c.h.b16 %v1086
          %v1185 = vunpack.c.l.b16 %v1087
          %v1186 = vunpack.c.h.b16 %v1087
          %v1187 = vunpack.c.l.b16 %v1088
          %v1188 = vunpack.c.h.b16 %v1088
          %v1189 = vunpack.c.l.b16 %v1089
          %v1190 = vunpack.c.h.b16 %v1089
          %v1191 = vunpack.c.l.b16 %v1090
          %v1192 = vunpack.c.h.b16 %v1090
          %v1193 = vunpack.c.l.b16 %v1091
          %v1194 = vunpack.c.h.b16 %v1091
          %v1195 = vunpack.c.l.b16 %v1092
          %v1196 = vunpack.c.h.b16 %v1092
          %v1197 = vunpack.c.l.b16 %v1093
          %v1198 = vunpack.c.h.b16 %v1093
          %v1199 = vunpack.c.l.b16 %v1094
          %v1200 = vunpack.c.h.b16 %v1094
          %v1201 = vunpack.c.l.b16 %v1095
          %v1202 = vunpack.c.h.b16 %v1095
          %v1203 = vunpack.c.l.b16 %v1096
          %v1204 = vunpack.c.h.b16 %v1096
          %v1205 = vunpack.c.l.b16 %v1097
          %v1206 = vunpack.c.h.b16 %v1097
          %v1207 = vunpack.c.l.b16 %v1098
          %v1208 = vunpack.c.h.b16 %v1098
          %v1209 = vunpack.c.l.b16 %v1099
          %v1210 = vunpack.c.h.b16 %v1099
          %v1211 = vunpack.c.l.b16 %v1100
          %v1212 = vunpack.c.h.b16 %v1100
          %v1213 = vunpack.c.l.b16 %v1101
          %v1214 = vunpack.c.h.b16 %v1101
          %v1215 = vunpack.c.l.b16 %v1102
          %v1216 = vunpack.c.h.b16 %v1102
          %v1217 = vunpack.c.l.b16 %v1103
          %v1218 = vunpack.c.h.b16 %v1103
          %v1219 = vunpack.c.l.b16 %v1104
          %v1220 = vunpack.c.h.b16 %v1104
          %v1221 = vunpack.c.l.b16 %v1105
          %v1222 = vunpack.c.h.b16 %v1105
          %v1223 = vunpack.c.l.b16 %v1106
          %v1224 = vunpack.c.h.b16 %v1106
          %v1225 = vunpack.c.l.b16 %v1107
          %v1226 = vunpack.c.h.b16 %v1107
          %v1227 = vunpack.c.l.b16 %v1108
          %v1228 = vunpack.c.h.b16 %v1108
          %v1229 = vunpack.c.l.b16 %v1109
          %v1230 = vunpack.c.h.b16 %v1109
          %v1231 = vunpack.c.l.b16 %v1110
          %v1232 = vunpack.c.h.b16 %v1110
          %v1233 = vunpack.c.l.b16 %v1111
          %v1234 = vunpack.c.h.b16 %v1111
          %v1235 = vunpack.c.l.b16 %v1112
          %v1236 = vunpack.c.h.b16 %v1112
          %v1237 = vunpack.c.l.b16 %v1113
          %v1238 = vunpack.c.h.b16 %v1113
          %v1239 = vunpack.c.l.b16 %v1114
          %v1240 = vunpack.c.h.b16 %v1114
          %v1241 = vunpack.c.l.b16 %v1115
          %v1242 = vunpack.c.h.b16 %v1115
          %v1243 = vunpack.c.l.b16 %v1116
          %v1244 = vunpack.c.h.b16 %v1116
          %v1245 = vpack.c.b16 %v1183, %v1181
          %v1246 = vpack.c.b16 %v1184, %v1182
          %v1247 = vpack.c.b16 %v1187, %v1185
          %v1248 = vpack.c.b16 %v1188, %v1186
          %v1249 = vpack.c.b16 %v1191, %v1189
          %v1250 = vpack.c.b16 %v1192, %v1190
          %v1251 = vpack.c.b16 %v1195, %v1193
          %v1252 = vpack.c.b16 %v1196, %v1194
          %v1253 = vpack.c.b16 %v1199, %v1197
          %v1254 = vpack.c.b16 %v1200, %v1198
          %v1255 = vpack.c.b16 %v1203, %v1201
          %v1256 = vpack.c.b16 %v1204, %v1202
          %v1257 = vpack.c.b16 %v1207, %v1205
          %v1258 = vpack.c.b16 %v1208, %v1206
          %v1259 = vpack.c.b16 %v1211, %v1209
          %v1260 = vpack.c.b16 %v1212, %v1210
          %v1261 = vpack.c.b16 %v1215, %v1213
          %v1262 = vpack.c.b16 %v1216, %v1214
          %v1263 = vpack.c.b16 %v1219, %v1217
          %v1264 = vpack.c.b16 %v1220, %v1218
          %v1265 = vpack.c.b16 %v1223, %v1221
          %v1266 = vpack.c.b16 %v1224, %v1222
          %v1267 = vpack.c.b16 %v1227, %v1225
          %v1268 = vpack.c.b16 %v1228, %v1226
          %v1269 = vpack.c.b16 %v1231, %v1229
          %v1270 = vpack.c.b16 %v1232, %v1230
          %v1271 = vpack.c.b16 %v1235, %v1233
          %v1272 = vpack.c.b16 %v1236, %v1234
          %v1273 = vpack.c.b16 %v1239, %v1237
          %v1274 = vpack.c.b16 %v1240, %v1238
          %v1275 = vpack.c.b16 %v1243, %v1241
          %v1276 = vpack.c.b16 %v1244, %v1242
          %v1341 = vunpack.c.l.b16 %v1117
          %v1342 = vunpack.c.l.b16 %v1118
          %v1343 = vunpack.c.l.b16 %v1119
          %v1344 = vunpack.c.l.b16 %v1120
          %v1345 = vunpack.c.l.b16 %v1121
          %v1346 = vunpack.c.l.b16 %v1122
          %v1347 = vunpack.c.l.b16 %v1123
          %v1348 = vunpack.c.l.b16 %v1124
          %v1349 = vunpack.c.l.b16 %v1125
          %v1350 = vunpack.c.l.b16 %v1126
          %v1351 = vunpack.c.l.b16 %v1127
          %v1352 = vunpack.c.l.b16 %v1128
          %v1353 = vunpack.c.l.b16 %v1129
          %v1354 = vunpack.c.l.b16 %v1130
          %v1355 = vunpack.c.l.b16 %v1131
          %v1356 = vunpack.c.l.b16 %v1132
          %v1357 = vunpack.c.l.b16 %v1133
          %v1358 = vunpack.c.l.b16 %v1134
          %v1359 = vunpack.c.l.b16 %v1135
          %v1360 = vunpack.c.l.b16 %v1136
          %v1361 = vunpack.c.l.b16 %v1137
          %v1362 = vunpack.c.l.b16 %v1138
          %v1363 = vunpack.c.l.b16 %v1139
          %v1364 = vunpack.c.l.b16 %v1140
          %v1365 = vunpack.c.l.b16 %v1141
          %v1366 = vunpack.c.l.b16 %v1142
          %v1367 = vunpack.c.l.b16 %v1143
          %v1368 = vunpack.c.l.b16 %v1144
          %v1369 = vunpack.c.l.b16 %v1145
          %v1370 = vunpack.c.l.b16 %v1146
          %v1371 = vunpack.c.l.b16 %v1147
          %v1372 = vunpack.c.l.b16 %v1148
          %v1373 = vpack.c.b16 %v1342, %v1341
          %v1374 = vpack.c.b16 %v1344, %v1343
          %v1375 = vpack.c.b16 %v1346, %v1345
          %v1376 = vpack.c.b16 %v1348, %v1347
          %v1377 = vpack.c.b16 %v1350, %v1349
          %v1378 = vpack.c.b16 %v1352, %v1351
          %v1379 = vpack.c.b16 %v1354, %v1353
          %v1380 = vpack.c.b16 %v1356, %v1355
          %v1381 = vpack.c.b16 %v1358, %v1357
          %v1382 = vpack.c.b16 %v1360, %v1359
          %v1383 = vpack.c.b16 %v1362, %v1361
          %v1384 = vpack.c.b16 %v1364, %v1363
          %v1385 = vpack.c.b16 %v1366, %v1365
          %v1386 = vpack.c.b16 %v1368, %v1367
          %v1387 = vpack.c.b16 %v1370, %v1369
          %v1388 = vpack.c.b16 %v1372, %v1371
          %1405 = vmatprep.subr.bf16.mxu0 0
          %1406 = vmatpush1.bf16.msra.mxu0 %v1380
          %1407 = vmatprep.subr.bf16.mxu0 0
          %1408 = vmatpush1.bf16.msra.mxu0 %v1379
          %1409 = vmatprep.subr.bf16.mxu0 0
          %1410 = vmatpush1.bf16.msra.mxu0 %v1378
          %1411 = vmatprep.subr.bf16.mxu0 0
          %1412 = vmatpush1.bf16.msra.mxu0 %v1377
          %1413 = vmatprep.subr.bf16.mxu0 0
          %1414 = vmatpush1.bf16.msra.mxu0 %v1376
          %1415 = vmatprep.subr.bf16.mxu0 0
          %1416 = vmatpush1.bf16.msra.mxu0 %v1375
          %1417 = vmatprep.subr.bf16.mxu0 0
          %1418 = vmatpush1.bf16.msra.mxu0 %v1374
          %1419 = vmatprep.subr.bf16.mxu0 0
          %1420 = vmatpush1.bf16.msra.mxu0 %v1373
          %1421 = vmatprep.subr.bf16.mxu0 0
          %1422 = vmatpush2.bf16.msra.mxu0 %v1388
          %1423 = vmatprep.subr.bf16.mxu0 0
          %1424 = vmatpush2.bf16.msra.mxu0 %v1387
          %1425 = vmatprep.subr.bf16.mxu0 0
          %1426 = vmatpush2.bf16.msra.mxu0 %v1386
          %1427 = vmatprep.subr.bf16.mxu0 0
          %1428 = vmatpush2.bf16.msra.mxu0 %v1385
          %1429 = vmatprep.subr.bf16.mxu0 0
          %1430 = vmatpush2.bf16.msra.mxu0 %v1384
          %1431 = vmatprep.subr.bf16.mxu0 0
          %1432 = vmatpush2.bf16.msra.mxu0 %v1383
          %1433 = vmatprep.subr.bf16.mxu0 0
          %1434 = vmatpush2.bf16.msra.mxu0 %v1382
          %1435 = vmatprep.subr.bf16.mxu0 0
          %1436 = vmatpush2.bf16.msra.mxu0 %v1381
          %1437 = vmatprep.mubr.bf16.mxu0 %v1246
          %1438 = vmatmul.mubr.bf16.gmra.mxu0 %v1245
          %v1439 = vpop.f32.mrf.mxu0
          %v1440 = vadd.f32 0.0, %v1439
          %v1441 = vpop.f32.mrf.mxu0
          %v1442 = vpop.f32.mrf.mxu0
          %v1443 = vadd.f32 0.0, %v1442
          %v1444 = vpop.f32.mrf.mxu0
          %1445 = vmatprep.mubr.bf16.mxu0 %v1248
          %1446 = vmatmul.mubr.bf16.gmra.mxu0 %v1247
          %v1447 = vpop.f32.mrf.mxu0
          %v1448 = vadd.f32 0.0, %v1447
          %v1449 = vpop.f32.mrf.mxu0
          %v1450 = vpop.f32.mrf.mxu0
          %v1451 = vadd.f32 0.0, %v1450
          %v1452 = vpop.f32.mrf.mxu0
          %1453 = vmatprep.mubr.bf16.mxu0 %v1250
          %1454 = vmatmul.mubr.bf16.gmra.mxu0 %v1249
          %v1455 = vpop.f32.mrf.mxu0
          %v1456 = vadd.f32 0.0, %v1455
          %v1457 = vpop.f32.mrf.mxu0
          %v1458 = vpop.f32.mrf.mxu0
          %v1459 = vadd.f32 0.0, %v1458
          %v1460 = vpop.f32.mrf.mxu0
          %1461 = vmatprep.mubr.bf16.mxu0 %v1252
          %1462 = vmatmul.mubr.bf16.gmra.mxu0 %v1251
          %v1463 = vpop.f32.mrf.mxu0
          %v1464 = vadd.f32 0.0, %v1463
          %v1465 = vpop.f32.mrf.mxu0
          %v1466 = vpop.f32.mrf.mxu0
          %v1467 = vadd.f32 0.0, %v1466
          %v1468 = vpop.f32.mrf.mxu0
          %1469 = vmatprep.mubr.bf16.mxu0 %v1254
          %1470 = vmatmul.mubr.bf16.gmra.mxu0 %v1253
          %v1471 = vpop.f32.mrf.mxu0
          %v1472 = vadd.f32 0.0, %v1471
          %v1473 = vpop.f32.mrf.mxu0
          %v1474 = vpop.f32.mrf.mxu0
          %v1475 = vadd.f32 0.0, %v1474
          %v1476 = vpop.f32.mrf.mxu0
          %1477 = vmatprep.mubr.bf16.mxu0 %v1256
          %1478 = vmatmul.mubr.bf16.gmra.mxu0 %v1255
          %v1479 = vpop.f32.mrf.mxu0
          %v1480 = vadd.f32 0.0, %v1479
          %v1481 = vpop.f32.mrf.mxu0
          %v1482 = vpop.f32.mrf.mxu0
          %v1483 = vadd.f32 0.0, %v1482
          %v1484 = vpop.f32.mrf.mxu0
          %1485 = vmatprep.mubr.bf16.mxu0 %v1258
          %1486 = vmatmul.mubr.bf16.gmra.mxu0 %v1257
          %v1487 = vpop.f32.mrf.mxu0
          %v1488 = vadd.f32 0.0, %v1487
          %v1489 = vpop.f32.mrf.mxu0
          %v1490 = vpop.f32.mrf.mxu0
          %v1491 = vadd.f32 0.0, %v1490
          %v1492 = vpop.f32.mrf.mxu0
          %1493 = vmatprep.mubr.bf16.mxu0 %v1260
          %1494 = vmatmul.mubr.bf16.gmra.mxu0 %v1259
          %v1495 = vpop.f32.mrf.mxu0
          %v1496 = vadd.f32 0.0, %v1495
          %v1497 = vpop.f32.mrf.mxu0
          %v1498 = vpop.f32.mrf.mxu0
          %v1499 = vadd.f32 0.0, %v1498
          %v1500 = vpop.f32.mrf.mxu0
          %1501 = vmatprep.mubr.bf16.mxu0 %v1262
          %1502 = vmatmul.mubr.bf16.gmra.mxu0 %v1261
          %v1503 = vpop.f32.mrf.mxu0
          %v1504 = vadd.f32 0.0, %v1503
          %v1505 = vpop.f32.mrf.mxu0
          %v1506 = vpop.f32.mrf.mxu0
          %v1507 = vadd.f32 0.0, %v1506
          %v1508 = vpop.f32.mrf.mxu0
          %1509 = vmatprep.mubr.bf16.mxu0 %v1264
          %1510 = vmatmul.mubr.bf16.gmra.mxu0 %v1263
          %v1511 = vpop.f32.mrf.mxu0
          %v1512 = vadd.f32 0.0, %v1511
          %v1513 = vpop.f32.mrf.mxu0
          %v1514 = vpop.f32.mrf.mxu0
          %v1515 = vadd.f32 0.0, %v1514
          %v1516 = vpop.f32.mrf.mxu0
          %1517 = vmatprep.mubr.bf16.mxu0 %v1266
          %1518 = vmatmul.mubr.bf16.gmra.mxu0 %v1265
          %v1519 = vpop.f32.mrf.mxu0
          %v1520 = vadd.f32 0.0, %v1519
          %v1521 = vpop.f32.mrf.mxu0
          %v1522 = vpop.f32.mrf.mxu0
          %v1523 = vadd.f32 0.0, %v1522
          %v1524 = vpop.f32.mrf.mxu0
          %1525 = vmatprep.mubr.bf16.mxu0 %v1268
          %1526 = vmatmul.mubr.bf16.gmra.mxu0 %v1267
          %v1527 = vpop.f32.mrf.mxu0
          %v1528 = vadd.f32 0.0, %v1527
          %v1529 = vpop.f32.mrf.mxu0
          %v1530 = vpop.f32.mrf.mxu0
          %v1531 = vadd.f32 0.0, %v1530
          %v1532 = vpop.f32.mrf.mxu0
          %1533 = vmatprep.mubr.bf16.mxu0 %v1270
          %1534 = vmatmul.mubr.bf16.gmra.mxu0 %v1269
          %v1535 = vpop.f32.mrf.mxu0
          %v1536 = vadd.f32 0.0, %v1535
          %v1537 = vpop.f32.mrf.mxu0
          %v1538 = vpop.f32.mrf.mxu0
          %v1539 = vadd.f32 0.0, %v1538
          %v1540 = vpop.f32.mrf.mxu0
          %1541 = vmatprep.mubr.bf16.mxu0 %v1272
          %1542 = vmatmul.mubr.bf16.gmra.mxu0 %v1271
          %v1543 = vpop.f32.mrf.mxu0
          %v1544 = vadd.f32 0.0, %v1543
          %v1545 = vpop.f32.mrf.mxu0
          %v1546 = vpop.f32.mrf.mxu0
          %v1547 = vadd.f32 0.0, %v1546
          %v1548 = vpop.f32.mrf.mxu0
          %1549 = vmatprep.mubr.bf16.mxu0 %v1274
          %1550 = vmatmul.mubr.bf16.gmra.mxu0 %v1273
          %v1551 = vpop.f32.mrf.mxu0
          %v1552 = vadd.f32 0.0, %v1551
          %v1553 = vpop.f32.mrf.mxu0
          %v1554 = vpop.f32.mrf.mxu0
          %v1555 = vadd.f32 0.0, %v1554
          %v1556 = vpop.f32.mrf.mxu0
          %1557 = vmatprep.mubr.bf16.mxu0 %v1276
          %1558 = vmatmul.mubr.bf16.gmra.mxu0 %v1275
          %v1559 = vpop.f32.mrf.mxu0
          %v1560 = vadd.f32 0.0, %v1559
          %v1561 = vpop.f32.mrf.mxu0
          %v1562 = vpop.f32.mrf.mxu0
          %v1563 = vadd.f32 0.0, %v1562
          %v1564 = vpop.f32.mrf.mxu0
          %1565 = vdwg.mxu0
          %v1566 = vadd.f32 %v1053, %v1440
          %v1567 = vadd.f32 %v1054, %v1443
          %v1568 = vadd.f32 %v1055, %v1448
          %v1569 = vadd.f32 %v1056, %v1451
          %v1570 = vadd.f32 %v1057, %v1456
          %v1571 = vadd.f32 %v1058, %v1459
          %v1572 = vadd.f32 %v1059, %v1464
          %v1573 = vadd.f32 %v1060, %v1467
          %v1574 = vadd.f32 %v1061, %v1472
          %v1575 = vadd.f32 %v1062, %v1475
          %v1576 = vadd.f32 %v1063, %v1480
          %v1577 = vadd.f32 %v1064, %v1483
          %v1578 = vadd.f32 %v1065, %v1488
          %v1579 = vadd.f32 %v1066, %v1491
          %v1580 = vadd.f32 %v1067, %v1496
          %v1581 = vadd.f32 %v1068, %v1499
          %v1582 = vadd.f32 %v1069, %v1504
          %v1583 = vadd.f32 %v1070, %v1507
          %v1584 = vadd.f32 %v1071, %v1512
          %v1585 = vadd.f32 %v1072, %v1515
          %v1586 = vadd.f32 %v1073, %v1520
          %v1587 = vadd.f32 %v1074, %v1523
          %v1588 = vadd.f32 %v1075, %v1528
          %v1589 = vadd.f32 %v1076, %v1531
          %v1590 = vadd.f32 %v1077, %v1536
          %v1591 = vadd.f32 %v1078, %v1539
          %v1592 = vadd.f32 %v1079, %v1544
          %v1593 = vadd.f32 %v1080, %v1547
          %v1594 = vadd.f32 %v1081, %v1552
          %v1595 = vadd.f32 %v1082, %v1555
          %v1596 = vadd.f32 %v1083, %v1560
          %v1597 = vadd.f32 %v1084, %v1563
          %v1598 = vld [vmem:[%s4] sm:$0x1]
          %v1600 = vlaneseq
          %v1601 = vshrl.u32 %v1600, 7
          %v1602 = vsub.s32 0, %v1601
          %v1603 = vrot.slane %v1598, %v1602
          %v1605 = vadd.f32 %v1566, %v1603
          %v1606 = vadd.f32 %v1567, %v1603
          %v1607 = vadd.f32 %v1568, %v1603
          %v1608 = vadd.f32 %v1569, %v1603
          %v1609 = vadd.f32 %v1570, %v1603
          %v1610 = vadd.f32 %v1571, %v1603
          %v1611 = vadd.f32 %v1572, %v1603
          %v1612 = vadd.f32 %v1573, %v1603
          %v1613 = vadd.f32 %v1574, %v1603
          %v1614 = vadd.f32 %v1575, %v1603
          %v1615 = vadd.f32 %v1576, %v1603
          %v1616 = vadd.f32 %v1577, %v1603
          %v1617 = vadd.f32 %v1578, %v1603
          %v1618 = vadd.f32 %v1579, %v1603
          %v1619 = vadd.f32 %v1580, %v1603
          %v1620 = vadd.f32 %v1581, %v1603
          %v1621 = vadd.f32 %v1582, %v1603
          %v1622 = vadd.f32 %v1583, %v1603
          %v1623 = vadd.f32 %v1584, %v1603
          %v1624 = vadd.f32 %v1585, %v1603
          %v1625 = vadd.f32 %v1586, %v1603
          %v1626 = vadd.f32 %v1587, %v1603
          %v1627 = vadd.f32 %v1588, %v1603
          %v1628 = vadd.f32 %v1589, %v1603
          %v1629 = vadd.f32 %v1590, %v1603
          %v1630 = vadd.f32 %v1591, %v1603
          %v1631 = vadd.f32 %v1592, %v1603
          %v1632 = vadd.f32 %v1593, %v1603
          %v1633 = vadd.f32 %v1594, %v1603
          %v1634 = vadd.f32 %v1595, %v1603
          %v1635 = vadd.f32 %v1596, %v1603
          %v1636 = vadd.f32 %v1597, %v1603
          %v1637 = vmax.f32 %v1605, 0.0
          %v1638 = vmax.f32 %v1606, 0.0
          %v1639 = vmax.f32 %v1607, 0.0
          %v1640 = vmax.f32 %v1608, 0.0
          %v1641 = vmax.f32 %v1609, 0.0
          %v1642 = vmax.f32 %v1610, 0.0
          %v1643 = vmax.f32 %v1611, 0.0
          %v1644 = vmax.f32 %v1612, 0.0
          %v1645 = vmax.f32 %v1613, 0.0
          %v1646 = vmax.f32 %v1614, 0.0
          %v1647 = vmax.f32 %v1615, 0.0
          %v1648 = vmax.f32 %v1616, 0.0
          %v1649 = vmax.f32 %v1617, 0.0
          %v1650 = vmax.f32 %v1618, 0.0
          %v1651 = vmax.f32 %v1619, 0.0
          %v1652 = vmax.f32 %v1620, 0.0
          %v1653 = vmax.f32 %v1621, 0.0
          %v1654 = vmax.f32 %v1622, 0.0
          %v1655 = vmax.f32 %v1623, 0.0
          %v1656 = vmax.f32 %v1624, 0.0
          %v1657 = vmax.f32 %v1625, 0.0
          %v1658 = vmax.f32 %v1626, 0.0
          %v1659 = vmax.f32 %v1627, 0.0
          %v1660 = vmax.f32 %v1628, 0.0
          %v1661 = vmax.f32 %v1629, 0.0
          %v1662 = vmax.f32 %v1630, 0.0
          %v1663 = vmax.f32 %v1631, 0.0
          %v1664 = vmax.f32 %v1632, 0.0
          %v1665 = vmax.f32 %v1633, 0.0
          %v1666 = vmax.f32 %v1634, 0.0
          %v1667 = vmax.f32 %v1635, 0.0
          %v1668 = vmax.f32 %v1636, 0.0
          %v1669 = vlaneseq
          %v1670 = vand.u32 %v1669, 127
          %vm1671 = vcmp.lt.s32.totalorder %v1670, 4
          %v1672 = vsel %vm1671, %v1637, -1e+30
          %v1673 = vsel %vm1671, %v1638, -1e+30
          %v1674 = vsel %vm1671, %v1639, -1e+30
          %v1675 = vsel %vm1671, %v1640, -1e+30
          %v1676 = vsel %vm1671, %v1641, -1e+30
          %v1677 = vsel %vm1671, %v1642, -1e+30
          %v1678 = vsel %vm1671, %v1643, -1e+30
          %v1679 = vsel %vm1671, %v1644, -1e+30
          %v1680 = vsel %vm1671, %v1645, -1e+30
          %v1681 = vsel %vm1671, %v1646, -1e+30
          %v1682 = vsel %vm1671, %v1647, -1e+30
          %v1683 = vsel %vm1671, %v1648, -1e+30
          %v1684 = vsel %vm1671, %v1649, -1e+30
          %v1685 = vsel %vm1671, %v1650, -1e+30
          %v1686 = vsel %vm1671, %v1651, -1e+30
          %v1687 = vsel %vm1671, %v1652, -1e+30
          %v1688 = vsel %vm1671, %v1653, -1e+30
          %v1689 = vsel %vm1671, %v1654, -1e+30
          %v1690 = vsel %vm1671, %v1655, -1e+30
          %v1691 = vsel %vm1671, %v1656, -1e+30
          %v1692 = vsel %vm1671, %v1657, -1e+30
          %v1693 = vsel %vm1671, %v1658, -1e+30
          %v1694 = vsel %vm1671, %v1659, -1e+30
          %v1695 = vsel %vm1671, %v1660, -1e+30
          %v1696 = vsel %vm1671, %v1661, -1e+30
          %v1697 = vsel %vm1671, %v1662, -1e+30
          %v1698 = vsel %vm1671, %v1663, -1e+30
          %v1699 = vsel %vm1671, %v1664, -1e+30
          %v1700 = vsel %vm1671, %v1665, -1e+30
          %v1701 = vsel %vm1671, %v1666, -1e+30
          %v1702 = vsel %vm1671, %v1667, -1e+30
          %v1703 = vsel %vm1671, %v1668, -1e+30
          %1704 = vmax.xlane.f32.xlu0 %v1672
          %v1705 = vpop.xlane.xlu0 %1704
          %1706 = vmax.xlane.f32.xlu0 %v1673
          %v1707 = vpop.xlane.xlu0 %1706
          %1708 = vmax.xlane.f32.xlu0 %v1674
          %v1709 = vpop.xlane.xlu0 %1708
          %1710 = vmax.xlane.f32.xlu0 %v1675
          %v1711 = vpop.xlane.xlu0 %1710
          %1712 = vmax.xlane.f32.xlu0 %v1676
          %v1713 = vpop.xlane.xlu0 %1712
          %1714 = vmax.xlane.f32.xlu0 %v1677
          %v1715 = vpop.xlane.xlu0 %1714
          %1716 = vmax.xlane.f32.xlu0 %v1678
          %v1717 = vpop.xlane.xlu0 %1716
          %1718 = vmax.xlane.f32.xlu0 %v1679
          %v1719 = vpop.xlane.xlu0 %1718
          %1720 = vmax.xlane.f32.xlu0 %v1680
          %v1721 = vpop.xlane.xlu0 %1720
          %1722 = vmax.xlane.f32.xlu0 %v1681
          %v1723 = vpop.xlane.xlu0 %1722
          %1724 = vmax.xlane.f32.xlu0 %v1682
          %v1725 = vpop.xlane.xlu0 %1724
          %1726 = vmax.xlane.f32.xlu0 %v1683
          %v1727 = vpop.xlane.xlu0 %1726
          %1728 = vmax.xlane.f32.xlu0 %v1684
          %v1729 = vpop.xlane.xlu0 %1728
          %1730 = vmax.xlane.f32.xlu0 %v1685
          %v1731 = vpop.xlane.xlu0 %1730
          %1732 = vmax.xlane.f32.xlu0 %v1686
          %v1733 = vpop.xlane.xlu0 %1732
          %1734 = vmax.xlane.f32.xlu0 %v1687
          %v1735 = vpop.xlane.xlu0 %1734
          %1736 = vmax.xlane.f32.xlu0 %v1688
          %v1737 = vpop.xlane.xlu0 %1736
          %1738 = vmax.xlane.f32.xlu0 %v1689
          %v1739 = vpop.xlane.xlu0 %1738
          %1740 = vmax.xlane.f32.xlu0 %v1690
          %v1741 = vpop.xlane.xlu0 %1740
          %1742 = vmax.xlane.f32.xlu0 %v1691
          %v1743 = vpop.xlane.xlu0 %1742
          %1744 = vmax.xlane.f32.xlu0 %v1692
          %v1745 = vpop.xlane.xlu0 %1744
          %1746 = vmax.xlane.f32.xlu0 %v1693
          %v1747 = vpop.xlane.xlu0 %1746
          %1748 = vmax.xlane.f32.xlu0 %v1694
          %v1749 = vpop.xlane.xlu0 %1748
          %1750 = vmax.xlane.f32.xlu0 %v1695
          %v1751 = vpop.xlane.xlu0 %1750
          %1752 = vmax.xlane.f32.xlu0 %v1696
          %v1753 = vpop.xlane.xlu0 %1752
          %1754 = vmax.xlane.f32.xlu0 %v1697
          %v1755 = vpop.xlane.xlu0 %1754
          %1756 = vmax.xlane.f32.xlu0 %v1698
          %v1757 = vpop.xlane.xlu0 %1756
          %1758 = vmax.xlane.f32.xlu0 %v1699
          %v1759 = vpop.xlane.xlu0 %1758
          %1760 = vmax.xlane.f32.xlu0 %v1700
          %v1761 = vpop.xlane.xlu0 %1760
          %1762 = vmax.xlane.f32.xlu0 %v1701
          %v1763 = vpop.xlane.xlu0 %1762
          %1764 = vmax.xlane.f32.xlu0 %v1702
          %v1765 = vpop.xlane.xlu0 %1764
          %1766 = vmax.xlane.f32.xlu0 %v1703
          %v1767 = vpop.xlane.xlu0 %1766
          %v1768 = vsub.f32 %v1672, %v1705
          %v1769 = vsub.f32 %v1673, %v1707
          %v1770 = vsub.f32 %v1674, %v1709
          %v1771 = vsub.f32 %v1675, %v1711
          %v1772 = vsub.f32 %v1676, %v1713
          %v1773 = vsub.f32 %v1677, %v1715
          %v1774 = vsub.f32 %v1678, %v1717
          %v1775 = vsub.f32 %v1679, %v1719
          %v1776 = vsub.f32 %v1680, %v1721
          %v1777 = vsub.f32 %v1681, %v1723
          %v1778 = vsub.f32 %v1682, %v1725
          %v1779 = vsub.f32 %v1683, %v1727
          %v1780 = vsub.f32 %v1684, %v1729
          %v1781 = vsub.f32 %v1685, %v1731
          %v1782 = vsub.f32 %v1686, %v1733
          %v1783 = vsub.f32 %v1687, %v1735
          %v1784 = vsub.f32 %v1688, %v1737
          %v1785 = vsub.f32 %v1689, %v1739
          %v1786 = vsub.f32 %v1690, %v1741
          %v1787 = vsub.f32 %v1691, %v1743
          %v1788 = vsub.f32 %v1692, %v1745
          %v1789 = vsub.f32 %v1693, %v1747
          %v1790 = vsub.f32 %v1694, %v1749
          %v1791 = vsub.f32 %v1695, %v1751
          %v1792 = vsub.f32 %v1696, %v1753
          %v1793 = vsub.f32 %v1697, %v1755
          %v1794 = vsub.f32 %v1698, %v1757
          %v1795 = vsub.f32 %v1699, %v1759
          %v1796 = vsub.f32 %v1700, %v1761
          %v1797 = vsub.f32 %v1701, %v1763
          %v1798 = vsub.f32 %v1702, %v1765
          %v1799 = vsub.f32 %v1703, %v1767
          %v1800 = vmul.f32 %v1768, 1.442695
          %v1801 = vpow.pop %v1800
          %v1802 = vmul.f32 %v1769, 1.442695
          %v1803 = vpow.pop %v1802
          %v1804 = vmul.f32 %v1770, 1.442695
          %v1805 = vpow.pop %v1804
          %v1806 = vmul.f32 %v1771, 1.442695
          %v1807 = vpow.pop %v1806
          %v1808 = vmul.f32 %v1772, 1.442695
          %v1809 = vpow.pop %v1808
          %v1810 = vmul.f32 %v1773, 1.442695
          %v1811 = vpow.pop %v1810
          %v1812 = vmul.f32 %v1774, 1.442695
          %v1813 = vpow.pop %v1812
          %v1814 = vmul.f32 %v1775, 1.442695
          %v1815 = vpow.pop %v1814
          %v1816 = vmul.f32 %v1776, 1.442695
          %v1817 = vpow.pop %v1816
          %v1818 = vmul.f32 %v1777, 1.442695
          %v1819 = vpow.pop %v1818
          %v1820 = vmul.f32 %v1778, 1.442695
          %v1821 = vpow.pop %v1820
          %v1822 = vmul.f32 %v1779, 1.442695
          %v1823 = vpow.pop %v1822
          %v1824 = vmul.f32 %v1780, 1.442695
          %v1825 = vpow.pop %v1824
          %v1826 = vmul.f32 %v1781, 1.442695
          %v1827 = vpow.pop %v1826
          %v1828 = vmul.f32 %v1782, 1.442695
          %v1829 = vpow.pop %v1828
          %v1830 = vmul.f32 %v1783, 1.442695
          %v1831 = vpow.pop %v1830
          %v1832 = vmul.f32 %v1784, 1.442695
          %v1833 = vpow.pop %v1832
          %v1834 = vmul.f32 %v1785, 1.442695
          %v1835 = vpow.pop %v1834
          %v1836 = vmul.f32 %v1786, 1.442695
          %v1837 = vpow.pop %v1836
          %v1838 = vmul.f32 %v1787, 1.442695
          %v1839 = vpow.pop %v1838
          %v1840 = vmul.f32 %v1788, 1.442695
          %v1841 = vpow.pop %v1840
          %v1842 = vmul.f32 %v1789, 1.442695
          %v1843 = vpow.pop %v1842
          %v1844 = vmul.f32 %v1790, 1.442695
          %v1845 = vpow.pop %v1844
          %v1846 = vmul.f32 %v1791, 1.442695
          %v1847 = vpow.pop %v1846
          %v1848 = vmul.f32 %v1792, 1.442695
          %v1849 = vpow.pop %v1848
          %v1850 = vmul.f32 %v1793, 1.442695
          %v1851 = vpow.pop %v1850
          %v1852 = vmul.f32 %v1794, 1.442695
          %v1853 = vpow.pop %v1852
          %v1854 = vmul.f32 %v1795, 1.442695
          %v1855 = vpow.pop %v1854
          %v1856 = vmul.f32 %v1796, 1.442695
          %v1857 = vpow.pop %v1856
          %v1858 = vmul.f32 %v1797, 1.442695
          %v1859 = vpow.pop %v1858
          %v1860 = vmul.f32 %v1798, 1.442695
          %v1861 = vpow.pop %v1860
          %v1862 = vmul.f32 %v1799, 1.442695
          %v1863 = vpow.pop %v1862
          %1864 = vadd.xlane.f32.xlu0 %v1801
          %v1865 = vpop.xlane.xlu0 %1864
          %1866 = vadd.xlane.f32.xlu0 %v1803
          %v1867 = vpop.xlane.xlu0 %1866
          %1868 = vadd.xlane.f32.xlu0 %v1805
          %v1869 = vpop.xlane.xlu0 %1868
          %1870 = vadd.xlane.f32.xlu0 %v1807
          %v1871 = vpop.xlane.xlu0 %1870
          %1872 = vadd.xlane.f32.xlu0 %v1809
          %v1873 = vpop.xlane.xlu0 %1872
          %1874 = vadd.xlane.f32.xlu0 %v1811
          %v1875 = vpop.xlane.xlu0 %1874
          %1876 = vadd.xlane.f32.xlu0 %v1813
          %v1877 = vpop.xlane.xlu0 %1876
          %1878 = vadd.xlane.f32.xlu0 %v1815
          %v1879 = vpop.xlane.xlu0 %1878
          %1880 = vadd.xlane.f32.xlu0 %v1817
          %v1881 = vpop.xlane.xlu0 %1880
          %1882 = vadd.xlane.f32.xlu0 %v1819
          %v1883 = vpop.xlane.xlu0 %1882
          %1884 = vadd.xlane.f32.xlu0 %v1821
          %v1885 = vpop.xlane.xlu0 %1884
          %1886 = vadd.xlane.f32.xlu0 %v1823
          %v1887 = vpop.xlane.xlu0 %1886
          %1888 = vadd.xlane.f32.xlu0 %v1825
          %v1889 = vpop.xlane.xlu0 %1888
          %1890 = vadd.xlane.f32.xlu0 %v1827
          %v1891 = vpop.xlane.xlu0 %1890
          %1892 = vadd.xlane.f32.xlu0 %v1829
          %v1893 = vpop.xlane.xlu0 %1892
          %1894 = vadd.xlane.f32.xlu0 %v1831
          %v1895 = vpop.xlane.xlu0 %1894
          %1896 = vadd.xlane.f32.xlu0 %v1833
          %v1897 = vpop.xlane.xlu0 %1896
          %1898 = vadd.xlane.f32.xlu0 %v1835
          %v1899 = vpop.xlane.xlu0 %1898
          %1900 = vadd.xlane.f32.xlu0 %v1837
          %v1901 = vpop.xlane.xlu0 %1900
          %1902 = vadd.xlane.f32.xlu0 %v1839
          %v1903 = vpop.xlane.xlu0 %1902
          %1904 = vadd.xlane.f32.xlu0 %v1841
          %v1905 = vpop.xlane.xlu0 %1904
          %1906 = vadd.xlane.f32.xlu0 %v1843
          %v1907 = vpop.xlane.xlu0 %1906
          %1908 = vadd.xlane.f32.xlu0 %v1845
          %v1909 = vpop.xlane.xlu0 %1908
          %1910 = vadd.xlane.f32.xlu0 %v1847
          %v1911 = vpop.xlane.xlu0 %1910
          %1912 = vadd.xlane.f32.xlu0 %v1849
          %v1913 = vpop.xlane.xlu0 %1912
          %1914 = vadd.xlane.f32.xlu0 %v1851
          %v1915 = vpop.xlane.xlu0 %1914
          %1916 = vadd.xlane.f32.xlu0 %v1853
          %v1917 = vpop.xlane.xlu0 %1916
          %1918 = vadd.xlane.f32.xlu0 %v1855
          %v1919 = vpop.xlane.xlu0 %1918
          %1920 = vadd.xlane.f32.xlu0 %v1857
          %v1921 = vpop.xlane.xlu0 %1920
          %1922 = vadd.xlane.f32.xlu0 %v1859
          %v1923 = vpop.xlane.xlu0 %1922
          %1924 = vadd.xlane.f32.xlu0 %v1861
          %v1925 = vpop.xlane.xlu0 %1924
          %1926 = vadd.xlane.f32.xlu0 %v1863
          %v1927 = vpop.xlane.xlu0 %1926
          %v1928 = vlog2.pop %v1865
          %v1929 = vmul.f32 %v1928, 0.6931472
          %v1930 = vlog2.pop %v1867
          %v1931 = vmul.f32 %v1930, 0.6931472
          %v1932 = vlog2.pop %v1869
          %v1933 = vmul.f32 %v1932, 0.6931472
          %v1934 = vlog2.pop %v1871
          %v1935 = vmul.f32 %v1934, 0.6931472
          %v1936 = vlog2.pop %v1873
          %v1937 = vmul.f32 %v1936, 0.6931472
          %v1938 = vlog2.pop %v1875
          %v1939 = vmul.f32 %v1938, 0.6931472
          %v1940 = vlog2.pop %v1877
          %v1941 = vmul.f32 %v1940, 0.6931472
          %v1942 = vlog2.pop %v1879
          %v1943 = vmul.f32 %v1942, 0.6931472
          %v1944 = vlog2.pop %v1881
          %v1945 = vmul.f32 %v1944, 0.6931472
          %v1946 = vlog2.pop %v1883
          %v1947 = vmul.f32 %v1946, 0.6931472
          %v1948 = vlog2.pop %v1885
          %v1949 = vmul.f32 %v1948, 0.6931472
          %v1950 = vlog2.pop %v1887
          %v1951 = vmul.f32 %v1950, 0.6931472
          %v1952 = vlog2.pop %v1889
          %v1953 = vmul.f32 %v1952, 0.6931472
          %v1954 = vlog2.pop %v1891
          %v1955 = vmul.f32 %v1954, 0.6931472
          %v1956 = vlog2.pop %v1893
          %v1957 = vmul.f32 %v1956, 0.6931472
          %v1958 = vlog2.pop %v1895
          %v1959 = vmul.f32 %v1958, 0.6931472
          %v1960 = vlog2.pop %v1897
          %v1961 = vmul.f32 %v1960, 0.6931472
          %v1962 = vlog2.pop %v1899
          %v1963 = vmul.f32 %v1962, 0.6931472
          %v1964 = vlog2.pop %v1901
          %v1965 = vmul.f32 %v1964, 0.6931472
          %v1966 = vlog2.pop %v1903
          %v1967 = vmul.f32 %v1966, 0.6931472
          %v1968 = vlog2.pop %v1905
          %v1969 = vmul.f32 %v1968, 0.6931472
          %v1970 = vlog2.pop %v1907
          %v1971 = vmul.f32 %v1970, 0.6931472
          %v1972 = vlog2.pop %v1909
          %v1973 = vmul.f32 %v1972, 0.6931472
          %v1974 = vlog2.pop %v1911
          %v1975 = vmul.f32 %v1974, 0.6931472
          %v1976 = vlog2.pop %v1913
          %v1977 = vmul.f32 %v1976, 0.6931472
          %v1978 = vlog2.pop %v1915
          %v1979 = vmul.f32 %v1978, 0.6931472
          %v1980 = vlog2.pop %v1917
          %v1981 = vmul.f32 %v1980, 0.6931472
          %v1982 = vlog2.pop %v1919
          %v1983 = vmul.f32 %v1982, 0.6931472
          %v1984 = vlog2.pop %v1921
          %v1985 = vmul.f32 %v1984, 0.6931472
          %v1986 = vlog2.pop %v1923
          %v1987 = vmul.f32 %v1986, 0.6931472
          %v1988 = vlog2.pop %v1925
          %v1989 = vmul.f32 %v1988, 0.6931472
          %v1990 = vlog2.pop %v1927
          %v1991 = vmul.f32 %v1990, 0.6931472
          %v1992 = vsub.f32 %v1768, %v1929
          %v1993 = vsub.f32 %v1769, %v1931
          %v1994 = vsub.f32 %v1770, %v1933
          %v1995 = vsub.f32 %v1771, %v1935
          %v1996 = vsub.f32 %v1772, %v1937
          %v1997 = vsub.f32 %v1773, %v1939
          %v1998 = vsub.f32 %v1774, %v1941
          %v1999 = vsub.f32 %v1775, %v1943
          %v2000 = vsub.f32 %v1776, %v1945
          %v2001 = vsub.f32 %v1777, %v1947
          %v2002 = vsub.f32 %v1778, %v1949
          %v2003 = vsub.f32 %v1779, %v1951
          %v2004 = vsub.f32 %v1780, %v1953
          %v2005 = vsub.f32 %v1781, %v1955
          %v2006 = vsub.f32 %v1782, %v1957
          %v2007 = vsub.f32 %v1783, %v1959
          %v2008 = vsub.f32 %v1784, %v1961
          %v2009 = vsub.f32 %v1785, %v1963
          %v2010 = vsub.f32 %v1786, %v1965
          %v2011 = vsub.f32 %v1787, %v1967
          %v2012 = vsub.f32 %v1788, %v1969
          %v2013 = vsub.f32 %v1789, %v1971
          %v2014 = vsub.f32 %v1790, %v1973
          %v2015 = vsub.f32 %v1791, %v1975
          %v2016 = vsub.f32 %v1792, %v1977
          %v2017 = vsub.f32 %v1793, %v1979
          %v2018 = vsub.f32 %v1794, %v1981
          %v2019 = vsub.f32 %v1795, %v1983
          %v2020 = vsub.f32 %v1796, %v1985
          %v2021 = vsub.f32 %v1797, %v1987
          %v2022 = vsub.f32 %v1798, %v1989
          %v2023 = vsub.f32 %v1799, %v1991
          %2024 = vst [vmem:[%s428] sm:$0xff] %v1992
          %2025 = vst [vmem:[%s428 + $0x8] sm:$0xff] %v1993
          %2026 = vst [vmem:[%s428 + $0x10] sm:$0xff] %v1994
          %2027 = vst [vmem:[%s428 + $0x18] sm:$0xff] %v1995
          %2028 = vst [vmem:[%s428 + $0x20] sm:$0xff] %v1996
          %2029 = vst [vmem:[%s428 + $0x28] sm:$0xff] %v1997
          %2030 = vst [vmem:[%s428 + $0x30] sm:$0xff] %v1998
          %2031 = vst [vmem:[%s428 + $0x38] sm:$0xff] %v1999
          %2032 = vst [vmem:[%s428 + $0x40] sm:$0xff] %v2000
          %2033 = vst [vmem:[%s428 + $0x48] sm:$0xff] %v2001
          %2034 = vst [vmem:[%s428 + $0x50] sm:$0xff] %v2002
          %2035 = vst [vmem:[%s428 + $0x58] sm:$0xff] %v2003
          %2036 = vst [vmem:[%s428 + $0x60] sm:$0xff] %v2004
          %2037 = vst [vmem:[%s428 + $0x68] sm:$0xff] %v2005
          %2038 = vst [vmem:[%s428 + $0x70] sm:$0xff] %v2006
          %2039 = vst [vmem:[%s428 + $0x78] sm:$0xff] %v2007
          %2040 = vst [vmem:[%s428 + $0x80] sm:$0xff] %v2008
          %2041 = vst [vmem:[%s428 + $0x88] sm:$0xff] %v2009
          %2042 = vst [vmem:[%s428 + $0x90] sm:$0xff] %v2010
          %2043 = vst [vmem:[%s428 + $0x98] sm:$0xff] %v2011
          %2044 = vst [vmem:[%s428 + $0xa0] sm:$0xff] %v2012
          %2045 = vst [vmem:[%s428 + $0xa8] sm:$0xff] %v2013
          %2046 = vst [vmem:[%s428 + $0xb0] sm:$0xff] %v2014
          %2047 = vst [vmem:[%s428 + $0xb8] sm:$0xff] %v2015
          %2048 = vst [vmem:[%s428 + $0xc0] sm:$0xff] %v2016
          %2049 = vst [vmem:[%s428 + $0xc8] sm:$0xff] %v2017
          %2050 = vst [vmem:[%s428 + $0xd0] sm:$0xff] %v2018
          %2051 = vst [vmem:[%s428 + $0xd8] sm:$0xff] %v2019
          %2052 = vst [vmem:[%s428 + $0xe0] sm:$0xff] %v2020
          %2053 = vst [vmem:[%s428 + $0xe8] sm:$0xff] %v2021
          %2054 = vst [vmem:[%s428 + $0xf0] sm:$0xff] %v2022
          %2055 = vst [vmem:[%s428 + $0xf8] sm:$0xff] %v2023
        $region86: #{graphsage_forward.3} parent=73 // pred_fallthru
          _
        %s2056 = smul.u32 32, %s20
        %p2057 = scmp.lt.s32.totalorder %s2056, 63
        %s2058 = scalar_select %p2057, %s2056, 63
        %s2059 = smul.addr %s2058, 8
        %s2060 = scalar_lea.vmem %s5, %s2059
        // Predicated region
        $region87: #{graphsage_forward.3} parent=73 // pred_check
          %p2061 = pneg %p163
        $region88: #{graphsage_forward.3} parent=73 // pred_check_branch
          %2063 = sbr.rel (%p2061) target = $region90
        $region89: #{graphsage_forward.3} parent=73 // pred_region
          %s2064 = smul.u32 32, %s20
        $region90: #{graphsage_forward.3} parent=73 // pred_fallthru
          _
      $region74: #{graphsage_forward.3} parent=5 // pred_fallthru
        _
      %p2065 = scmp.le.s32.totalorder 2, %s11
      // Predicated region
      $region91: #{graphsage_forward.3} parent=5 // pred_check
        %p2066 = pneg %p2065
      $region92: #{graphsage_forward.3} parent=5 // pred_check_branch
        %2068 = sbr.rel (%p2066) target = $region94
      $region93: #{graphsage_forward.3} parent=5 // pred_region
        %s2069 = ssub.s32 %s11, 2
        // Predicated region
        $region95: #{graphsage_forward.3} parent=93 // pred_check
          %p2070 = pneg %p169
        $region96: #{graphsage_forward.3} parent=93 // pred_check_branch
          %2072 = sbr.rel (%p2070) target = $region98
        $region97: #{graphsage_forward.3} parent=93 // pred_region
          %s2073 = smul.u32 32, %s22
          %p2074 = scmp.lt.s32.totalorder %s2073, 63
          %s2075 = scalar_select %p2074, %s2073, 63
          %s2076 = smul.addr %s2075, 8
          %s2077 = scalar_lea.vmem %s5, %s2076
        $region98: #{graphsage_forward.3} parent=93 // pred_fallthru
          _
      $region94: #{graphsage_forward.3} parent=5 // pred_fallthru
        _
    $region6: #{graphsage_forward.3} parent=1 // loop_footer
      %s15 = sadd.s32 1, %s11
    $region7: #{graphsage_forward.3} parent=1 // loop_footer_branch
      %10 = sbr.rel target = $region3
    $region8: #{graphsage_forward.3} parent=1 // loop_exit
      _

</llo_original>
